<compile_context>
chip_gen: v7x
topology: tpu7x:2x2x1
jax: 0.10.0
libtpu: 0.0.40
codegen_flags: <defaults>
</compile_context>

<pallas_src>
import functools

import jax
import jax.numpy as jnp
from jax import lax
from jax.experimental import pallas as pl
from jax.experimental.pallas import tpu as pltpu

KH1 = 9          # conv1 kernel size
PAD1 = 4         # conv1 padding
KH2 = 5          # conv2 kernel size == stride (non-overlapping)
NEG_SLOPE = 0.01
BN_EPS = 1e-5


def _slab(width):
    """Smallest lane-aligned slab (32 / 64 / 128 / k*128) holding `width` lanes."""
    for s in (32, 64, 128):
        if width <= s:
            return s
    return ((width + 127) // 128) * 128


def _round_up(x, m):
    return ((x + m - 1) // m) * m


# ------------------------------- the kernel ---------------------------------

def _encoder_kernel(
    xp_ref,     # (1, M1, K1P)   bf16  conv1 patch matrix of batch element b
    w1_ref,     # (K1P, HID)     bf16  conv1 weights, rows = (ky, kx, cin), zero-padded
    b1_ref,     # (1, HID)       f32   (kept for faithfulness; cancels under batch-norm)
    g_ref,      # (1, HID)       f32   BatchNorm gamma
    bt_ref,     # (1, HID)       f32   BatchNorm beta
    w2_ref,     # (K2P, NOP)     bf16  conv2 weights, rows = (ky, kx, cin), N padded to 128
    b2_ref,     # (1, NOP)       f32
    o_ref,      # (B*M2, NOP)    f32   full-batch, lane-dense output block (constant index)
    h1s,        # (B, M1, HID)   f32   conv1 + bias for all batch elements (VMEM resident)
    cols2,      # (B*M2, K2P)    f32   batch-fused conv2 patch matrix
    ssum,       # (1, HID)       f32   global per-channel sum
    ssq,        # (1, HID)       f32   global per-channel sum of squares
    *, B, M1, W1, H2, W2, M2, HID, CS2,
):
    b = pl.program_id(0)

    # ---- conv1 for batch element b: ONE MXU matmul, bf16 in / f32 accumulate ----
    h = jnp.dot(xp_ref[0], w1_ref[...],
                preferred_element_type=jnp.float32) + b1_ref[...]        # (M1, HID)
    h1s[b] = h

    s = jnp.sum(h, axis=0, keepdims=True)
    q = jnp.sum(h * h, axis=0, keepdims=True)

    @pl.when(b == 0)
    def _init_stats():
        ssum[...] = s
        ssq[...] = q

    @pl.when(b > 0)
    def _acc_stats():
        ssum[...] = ssum[...] + s
        ssq[...] = ssq[...] + q

    # ---- last step: fold global stats, BN + leaky_relu, conv2 + sigmoid --------
    @pl.when(b == B - 1)
    def _finalize():
        inv_n = 1.0 / float(B * M1)
        mu = ssum[...] * inv_n
        # biased variance (PyTorch training mode); clamp f32 cancellation at >= 0.
        var = jnp.maximum(ssq[...] * inv_n - mu * mu, 0.0)
        scale = g_ref[...] * lax.rsqrt(var + BN_EPS)
        shift = bt_ref[...] - mu * scale

        # zero the pad lanes once (they are never written by the gather below).
        cols2[...] = jnp.zeros_like(cols2)

        for bb in range(B):                             # static batch loop
            hb = h1s[bb]                                # (M1, HID) f32
            hn = hb * scale + shift
            act = jnp.where(hn > 0, hn, NEG_SLOPE * hn)
            # conv2 (5x5, stride 5, non-overlapping) patch gather: static copies
            # from the flat (M1, HID) activation (row = y*W1 + x).
            for oy in range(H2):
                for ox in range(W2):
                    r = bb * M2 + oy * W2 + ox
                    for ky in range(KH2):
                        src0 = (oy * KH2 + ky) * W1 + ox * KH2
                        for kx in range(KH2):
                            col = (ky * KH2 + kx) * CS2
                            cols2[r:r + 1, col:col + HID] = \
                                act[src0 + kx:src0 + kx + 1, :]

        # ONE batch-fused conv2 matmul (one weight push for the whole batch).
        logits = jnp.dot(cols2[...].astype(jnp.bfloat16), w2_ref[...],
                         preferred_element_type=jnp.float32) + b2_ref[...]
        # numerically stable sigmoid on the EUP: sigmoid(x) = 0.5*(tanh(x/2)+1)
        o_ref[...] = 0.5 * (jnp.tanh(0.5 * logits) + 1.0)


# ------------------------------ parameters ----------------------------------

def init_params(key, input_dim, hidden_dim, num_objects):
    """Raw parameters, PyTorch layout (OIHW conv weights)."""
    k1, k2, k3, k4 = jax.random.split(key, 4)
    return dict(
        w1=jax.random.normal(k1, (hidden_dim, input_dim, KH1, KH1), jnp.float32) * 0.05,
        b1=jax.random.normal(k2, (hidden_dim,), jnp.float32) * 0.05,
        w2=jax.random.normal(k3, (num_objects, hidden_dim, KH2, KH2), jnp.float32) * 0.05,
        b2=jax.random.normal(k4, (num_objects,), jnp.float32) * 0.05,
        gamma=jnp.ones((hidden_dim,), jnp.float32),
        beta=jnp.zeros((hidden_dim,), jnp.float32),
    )


def pack_params(params):
    """One-time re-layout (hoisted out of the forward): matmul-ready bf16 weights."""
    hid, cin = params["w1"].shape[0], params["w1"].shape[1]
    nobj = params["w2"].shape[0]
    k1 = KH1 * KH1 * cin
    k1p = _round_up(k1, 128)                       # conv1 K padded to lane-dense slab
    cs2 = _slab(hid)                               # per-(ky,kx) lane slab for conv2 K
    k2p = _round_up(KH2 * KH2 * cs2, 128)
    nop = _round_up(nobj, 128)                     # lane-dense output / MXU N

    # conv1: rows ordered (ky, kx, cin) to match the wrapper-side patch matrix.
    w1 = jnp.transpose(params["w1"], (2, 3, 1, 0)).reshape(k1, hid)
    w1 = jnp.pad(w1, ((0, k1p - k1), (0, 0)))

    # conv2: rows ordered (ky, kx, cin) with a cs2-wide slab per (ky, kx).
    w2 = jnp.transpose(params["w2"], (2, 3, 1, 0)).reshape(KH2 * KH2, hid, nobj)
    w2 = jnp.pad(w2, ((0, 0), (0, cs2 - hid), (0, 0))).reshape(KH2 * KH2 * cs2, nobj)
    w2 = jnp.pad(w2, ((0, k2p - KH2 * KH2 * cs2), (0, nop - nobj)))

    return dict(
        w1m=w1.astype(jnp.bfloat16),
        b1=params["b1"].reshape(1, hid).astype(jnp.float32),
        gamma=params["gamma"].reshape(1, hid).astype(jnp.float32),
        beta=params["beta"].reshape(1, hid).astype(jnp.float32),
        w2m=w2.astype(jnp.bfloat16),
        b2=jnp.pad(params["b2"], (0, nop - nobj)).reshape(1, nop).astype(jnp.float32),
    )


# -------------------------------- forward -----------------------------------

@functools.partial(jax.jit, static_argnames=("num_objects",))
def encoder_cnn_medium(obs_nchw, packed, *, num_objects):
    """Forward pass matching EncoderCNNMedium. Input/output layout: NCHW."""
    B, C, H, W = obs_nchw.shape
    K1P, HID = packed["w1m"].shape
    K2P, NOP = packed["w2m"].shape
    CS2 = _slab(HID)
    H1, W1 = H, W                                   # conv1 keeps spatial size
    H2 = (H1 - KH2) // KH2 + 1
    W2 = (W1 - KH2) // KH2 + 1
    M1, M2 = H1 * W1, H2 * W2
    K1 = KH1 * KH1 * C

    # conv1 im2col in the XLA wrapper: lane-dense, zero-padded, bf16 patch matrix.
    # (Layout plumbing only; all compute stays in the kernel.  9x read blow-up per
    #  kernel row is acceptable here; for very large images switch back to the
    #  width-only im2col variant.)
    x = jnp.transpose(obs_nchw, (0, 2, 3, 1)).astype(jnp.float32)        # NHWC
    x = jnp.pad(x, ((0, 0), (PAD1, PAD1), (PAD1, PAD1), (0, 0)))
    pieces = [x[:, ky:ky + H1, kx:kx + W1, :]
              for ky in range(KH1) for kx in range(KH1)]                 # (ky, kx, c) order
    patches = jnp.concatenate(pieces, axis=-1).reshape(B, M1, K1)
    patches = jnp.pad(patches, ((0, 0), (0, 0), (0, K1P - K1))).astype(jnp.bfloat16)

    kernel = functools.partial(
        _encoder_kernel, B=B, M1=M1, W1=W1, H2=H2, W2=W2, M2=M2, HID=HID, CS2=CS2)

    # VMEM budget from actual block / scratch sizes (2x headroom, >= 16 MiB floor).
    def _pad(n, m):
        return _round_up(max(n, 1), m)
    vmem_need = (
        2 * _pad(M1, 16) * K1P * 2                          # double-buffered bf16 patches
        + _pad(K1P, 16) * _pad(HID, 128) * 2                # w1
        + _pad(K2P, 16) * NOP * 2                           # w2
        + 5 * _pad(1, 8) * _pad(HID, 128) * 4               # b1/gamma/beta + ssum/ssq
        + _pad(1, 8) * NOP * 4                              # b2
        + 2 * _pad(B * M2, 8) * NOP * 4                     # output block
        + B * _pad(M1, 8) * _pad(HID, 128) * 4              # h1s scratch
        + _pad(B * M2, 8) * K2P * 4                         # cols2 scratch
    )
    vmem_limit = int(min(max(16 * 1024 * 1024, 2 * vmem_need), 120 * 1024 * 1024))

    out = pl.pallas_call(
        kernel,
        out_shape=jax.ShapeDtypeStruct((B * M2, NOP), jnp.float32),
        grid_spec=pltpu.PrefetchScalarGridSpec(
            num_scalar_prefetch=0,
            grid=(B,),                               # one step per batch element
            in_specs=[
                pl.BlockSpec((1, M1, K1P), lambda b: (b, 0, 0)),   # patches: fetched once
                pl.BlockSpec((K1P, HID), lambda b: (0, 0)),        # weights: resident
                pl.BlockSpec((1, HID), lambda b: (0, 0)),
                pl.BlockSpec((1, HID), lambda b: (0, 0)),
                pl.BlockSpec((1, HID), lambda b: (0, 0)),
                pl.BlockSpec((K2P, NOP), lambda b: (0, 0)),
                pl.BlockSpec((1, NOP), lambda b: (0, 0)),
            ],
            # constant index map: output block stays VMEM-resident and is written
            # back to HBM exactly once at the end of the grid.
            out_specs=pl.BlockSpec((B * M2, NOP), lambda b: (0, 0)),
            scratch_shapes=[
                pltpu.VMEM((B, M1, HID), jnp.float32),    # h1s (kept on-chip)
                pltpu.VMEM((B * M2, K2P), jnp.float32),   # cols2
                pltpu.VMEM((1, HID), jnp.float32),        # ssum
                pltpu.VMEM((1, HID), jnp.float32),        # ssq
            ],
        ),
        compiler_params=pltpu.CompilerParams(
            # Training BatchNorm couples all batch elements through the global batch
            # statistics, so the batch axis must stay sequential.  With frozen stats
            # it could be "parallel" (v7x dual-TensorCore sharding).
            dimension_semantics=("arbitrary",),
            vmem_limit_bytes=vmem_limit,
        ),
    )(patches, packed["w1m"], packed["b1"], packed["gamma"], packed["beta"],
      packed["w2m"], packed["b2"])

    out = out.reshape(B, H2, W2, NOP)[..., :num_objects]
    return jnp.transpose(out, (0, 3, 1, 2))                              # NCHW


# --------------------------- pure-JAX reference ------------------------------

def _reference(obs, p, matmul_dtype):
    """XLA reference; matmul_dtype mirrors the kernel's MXU operand precision."""
    f32 = jnp.float32
    dn1 = lax.conv_dimension_numbers(obs.shape, p["w1"].shape, ("NCHW", "OIHW", "NCHW"))
    h = lax.conv_general_dilated(
        obs.astype(matmul_dtype), p["w1"].astype(matmul_dtype),
        (1, 1), ((PAD1, PAD1), (PAD1, PAD1)),
        dimension_numbers=dn1, preferred_element_type=f32)
    h = h + p["b1"][None, :, None, None]
    mu = jnp.mean(h, axis=(0, 2, 3), keepdims=True)
    var = jnp.mean(h * h, axis=(0, 2, 3), keepdims=True) - mu * mu
    h = (h - mu) * lax.rsqrt(var + BN_EPS)
    h = p["gamma"][None, :, None, None] * h + p["beta"][None, :, None, None]
    h = jnp.where(h > 0, h, NEG_SLOPE * h)
    dn2 = lax.conv_dimension_numbers(h.shape, p["w2"].shape, ("NCHW", "OIHW", "NCHW"))
    o = lax.conv_general_dilated(
        h.astype(matmul_dtype), p["w2"].astype(matmul_dtype),
        (KH2, KH2), ((0, 0), (0, 0)),
        dimension_numbers=dn2, preferred_element_type=f32)
    o = o + p["b2"][None, :, None, None]
    return jax.nn.sigmoid(o)


if __name__ == "__main__":
    key = jax.random.PRNGKey(0)
    k_obs, k_par = jax.random.split(key)

    B, input_dim, hidden_dim, num_objects, H, W = 2, 3, 32, 5, 10, 10
    obs = jax.random.normal(k_obs, (B, input_dim, H, W), jnp.float32)
    params = init_params(k_par, input_dim, hidden_dim, num_objects)
    packed = pack_params(params)

    out = jax.block_until_ready(encoder_cnn_medium(obs, packed, num_objects=num_objects))

    # Tight check vs a reference using the same MXU operand precision (bf16 in, f32 acc).
    ref_bf16 = jax.block_until_ready(_reference(obs, params, jnp.bfloat16))
    # Loose sanity check vs the pure-f32 semantics of the PyTorch module.
    ref_f32 = jax.block_until_ready(_reference(obs, params, jnp.float32))

    assert out.shape == (B, num_objects, H // 5, W // 5), out.shape
    err_tight = float(jnp.max(jnp.abs(out - ref_bf16)))
    err_loose = float(jnp.max(jnp.abs(out - ref_f32)))
    assert jnp.allclose(out, ref_bf16, atol=2e-3, rtol=2e-3), err_tight
    assert jnp.allclose(out, ref_f32, atol=3e-2, rtol=3e-2), err_loose
    print("KERNEL_OK")
</pallas_src>

<mosaic_0001>
module attributes {stable_mosaic.version = 11 : i64} {
  func.func @_encoder_kernel(%arg0: i32, %arg1: memref<1x100x256xbf16, #tpu.memory_space<vmem>>, %arg2: memref<256x32xbf16, #tpu.memory_space<vmem>>, %arg3: memref<1x32xf32, #tpu.memory_space<vmem>>, %arg4: memref<1x32xf32, #tpu.memory_space<vmem>>, %arg5: memref<1x32xf32, #tpu.memory_space<vmem>>, %arg6: memref<896x128xbf16, #tpu.memory_space<vmem>>, %arg7: memref<1x128xf32, #tpu.memory_space<vmem>>, %arg8: memref<8x128xf32, #tpu.memory_space<vmem>>, %arg9: memref<2x100x32xf32, #tpu.memory_space<vmem>>, %arg10: memref<8x896xf32, #tpu.memory_space<vmem>>, %arg11: memref<1x32xf32, #tpu.memory_space<vmem>>, %arg12: memref<1x32xf32, #tpu.memory_space<vmem>>) attributes {dimension_semantics = [#tpu.dimension_semantics<arbitrary>], iteration_bounds = array<i64: 2>, scalar_prefetch = 0 : i64, scratch_operands = 4 : i64, tpu.core_type = #tpu.core_type<tc>, window_params = [{transform_indices = @transform_0, window_bounds = array<i64: 1, 100, 256>}, {pipeline_mode = #tpu.pipeline_mode<synchronous>, transform_indices = @transform_1, window_bounds = array<i64: 256, 32>}, {pipeline_mode = #tpu.pipeline_mode<synchronous>, transform_indices = @transform_2, window_bounds = array<i64: 1, 32>}, {pipeline_mode = #tpu.pipeline_mode<synchronous>, transform_indices = @transform_3, window_bounds = array<i64: 1, 32>}, {pipeline_mode = #tpu.pipeline_mode<synchronous>, transform_indices = @transform_4, window_bounds = array<i64: 1, 32>}, {pipeline_mode = #tpu.pipeline_mode<synchronous>, transform_indices = @transform_5, window_bounds = array<i64: 896, 128>}, {pipeline_mode = #tpu.pipeline_mode<synchronous>, transform_indices = @transform_6, window_bounds = array<i64: 1, 128>}, {pipeline_mode = #tpu.pipeline_mode<synchronous>, transform_indices = @transform_7, window_bounds = array<i64: 8, 128>}]} {
    %c0 = arith.constant 0 : index
    %c0_0 = arith.constant 0 : index
    %c0_1 = arith.constant 0 : index
    %0 = vector.load %arg1[%c0, %c0_0, %c0_1] : memref<1x100x256xbf16, #tpu.memory_space<vmem>>, vector<1x100x256xbf16>
    %1 = vector.shape_cast %0 : vector<1x100x256xbf16> to vector<100x256xbf16>
    %c0_2 = arith.constant 0 : index
    %c0_3 = arith.constant 0 : index
    %2 = vector.load %arg2[%c0_2, %c0_3] : memref<256x32xbf16, #tpu.memory_space<vmem>>, vector<256x32xbf16>
    %cst = arith.constant dense<0.000000e+00> : vector<100x32xf32>
    %3 = tpu.matmul %1, %2, %cst {dimension_numbers = #tpu.dot_dimension_numbers<[1], [0], [0], [1], [0, 0, 1, 1], [], []>} : vector<100x256xbf16>, vector<256x32xbf16>, vector<100x32xf32> -> vector<100x32xf32>
    %c0_4 = arith.constant 0 : index
    %c0_5 = arith.constant 0 : index
    %4 = vector.load %arg3[%c0_4, %c0_5] : memref<1x32xf32, #tpu.memory_space<vmem>>, vector<1x32xf32>
    %5 = vector.broadcast %4 : vector<1x32xf32> to vector<100x32xf32>
    %6 = arith.addf %3, %5 : vector<100x32xf32>
    %7 = arith.index_cast %arg0 : i32 to index
    %c0_6 = arith.constant 0 : index
    %c0_7 = arith.constant 0 : index
    %8 = vector.load %arg9[%7, %c0_6, %c0_7] : memref<2x100x32xf32, #tpu.memory_space<vmem>>, vector<1x100x32xf32>
    %9 = vector.shape_cast %8 : vector<1x100x32xf32> to vector<100x32xf32>
    %10 = vector.shape_cast %6 : vector<100x32xf32> to vector<1x100x32xf32>
    tpu.vector_store %arg9[%7, %c0_6, %c0_7], %10 {strides = array<i32>} : memref<2x100x32xf32, #tpu.memory_space<vmem>>, vector<1x100x32xf32>,
    %cst_8 = arith.constant dense<0.000000e+00> : vector<32xf32>
    %11 = vector.multi_reduction <add>, %6, %cst_8 [0] : vector<100x32xf32> to vector<32xf32>
    %12 = vector.shape_cast %11 : vector<32xf32> to vector<1x32xf32>
    %13 = arith.mulf %6, %6 : vector<100x32xf32>
    %cst_9 = arith.constant dense<0.000000e+00> : vector<32xf32>
    %14 = vector.multi_reduction <add>, %13, %cst_9 [0] : vector<100x32xf32> to vector<32xf32>
    %15 = vector.shape_cast %14 : vector<32xf32> to vector<1x32xf32>
    %c0_i32 = arith.constant 0 : i32
    %16 = arith.cmpi eq, %arg0, %c0_i32 : i32
    %17 = arith.extui %16 : i1 to i32
    %c0_i32_10 = arith.constant 0 : i32
    %18 = arith.cmpi ne, %17, %c0_i32_10 : i32
    scf.if %18 {
      %c0_14 = arith.constant 0 : index
      %c0_15 = arith.constant 0 : index
      %25 = vector.load %arg11[%c0_14, %c0_15] : memref<1x32xf32, #tpu.memory_space<vmem>>, vector<1x32xf32>
      tpu.vector_store %arg11[%c0_14, %c0_15], %12 {strides = array<i32>} : memref<1x32xf32, #tpu.memory_space<vmem>>, vector<1x32xf32>,
      %c0_16 = arith.constant 0 : index
      %c0_17 = arith.constant 0 : index
      %26 = vector.load %arg12[%c0_16, %c0_17] : memref<1x32xf32, #tpu.memory_space<vmem>>, vector<1x32xf32>
      tpu.vector_store %arg12[%c0_16, %c0_17], %15 {strides = array<i32>} : memref<1x32xf32, #tpu.memory_space<vmem>>, vector<1x32xf32>,
    } else {
    }
    %c0_i32_11 = arith.constant 0 : i32
    %19 = arith.cmpi sgt, %arg0, %c0_i32_11 : i32
    %20 = arith.extui %19 : i1 to i32
    %c0_i32_12 = arith.constant 0 : i32
    %21 = arith.cmpi ne, %20, %c0_i32_12 : i32
    scf.if %21 {
      %c0_14 = arith.constant 0 : index
      %c0_15 = arith.constant 0 : index
      %25 = vector.load %arg11[%c0_14, %c0_15] : memref<1x32xf32, #tpu.memory_space<vmem>>, vector<1x32xf32>
      %26 = arith.addf %25, %12 : vector<1x32xf32>
      %c0_16 = arith.constant 0 : index
      %c0_17 = arith.constant 0 : index
      %27 = vector.load %arg11[%c0_16, %c0_17] : memref<1x32xf32, #tpu.memory_space<vmem>>, vector<1x32xf32>
      tpu.vector_store %arg11[%c0_16, %c0_17], %26 {strides = array<i32>} : memref<1x32xf32, #tpu.memory_space<vmem>>, vector<1x32xf32>,
      %c0_18 = arith.constant 0 : index
      %c0_19 = arith.constant 0 : index
      %28 = vector.load %arg12[%c0_18, %c0_19] : memref<1x32xf32, #tpu.memory_space<vmem>>, vector<1x32xf32>
      %29 = arith.addf %28, %15 : vector<1x32xf32>
      %c0_20 = arith.constant 0 : index
      %c0_21 = arith.constant 0 : index
      %30 = vector.load %arg12[%c0_20, %c0_21] : memref<1x32xf32, #tpu.memory_space<vmem>>, vector<1x32xf32>
      tpu.vector_store %arg12[%c0_20, %c0_21], %29 {strides = array<i32>} : memref<1x32xf32, #tpu.memory_space<vmem>>, vector<1x32xf32>,
    } else {
    }
    %c1_i32 = arith.constant 1 : i32
    %22 = arith.cmpi eq, %arg0, %c1_i32 : i32
    %23 = arith.extui %22 : i1 to i32
    %c0_i32_13 = arith.constant 0 : i32
    %24 = arith.cmpi ne, %23, %c0_i32_13 : i32
    scf.if %24 {
      %c0_14 = arith.constant 0 : index
      %c0_15 = arith.constant 0 : index
      %25 = vector.load %arg11[%c0_14, %c0_15] : memref<1x32xf32, #tpu.memory_space<vmem>>, vector<1x32xf32>
      %cst_16 = arith.constant 5.000000e-03 : f32
      %26 = vector.broadcast %cst_16 : f32 to vector<1x32xf32>
      %27 = arith.mulf %25, %26 : vector<1x32xf32>
      %c0_17 = arith.constant 0 : index
      %c0_18 = arith.constant 0 : index
      %28 = vector.load %arg12[%c0_17, %c0_18] : memref<1x32xf32, #tpu.memory_space<vmem>>, vector<1x32xf32>
      %cst_19 = arith.constant 5.000000e-03 : f32
      %29 = vector.broadcast %cst_19 : f32 to vector<1x32xf32>
      %30 = arith.mulf %28, %29 : vector<1x32xf32>
      %31 = arith.mulf %27, %27 : vector<1x32xf32>
      %32 = arith.subf %30, %31 : vector<1x32xf32>
      %cst_20 = arith.constant 0.000000e+00 : f32
      %33 = vector.broadcast %cst_20 : f32 to vector<1x32xf32>
      %34 = arith.maximumf %32, %33 : vector<1x32xf32>
      %c0_21 = arith.constant 0 : index
      %c0_22 = arith.constant 0 : index
      %35 = vector.load %arg4[%c0_21, %c0_22] : memref<1x32xf32, #tpu.memory_space<vmem>>, vector<1x32xf32>
      %cst_23 = arith.constant 9.99999974E-6 : f32
      %36 = vector.broadcast %cst_23 : f32 to vector<1x32xf32>
      %37 = arith.addf %34, %36 : vector<1x32xf32>
      %38 = math.rsqrt %37 : vector<1x32xf32>
      %39 = arith.mulf %35, %38 : vector<1x32xf32>
      %c0_24 = arith.constant 0 : index
      %c0_25 = arith.constant 0 : index
      %40 = vector.load %arg5[%c0_24, %c0_25] : memref<1x32xf32, #tpu.memory_space<vmem>>, vector<1x32xf32>
      %41 = arith.mulf %27, %39 : vector<1x32xf32>
      %42 = arith.subf %40, %41 : vector<1x32xf32>
      %cst_26 = arith.constant 0.000000e+00 : f32
      %43 = vector.broadcast %cst_26 : f32 to vector<8x896xf32>
      %c0_27 = arith.constant 0 : index
      %c0_28 = arith.constant 0 : index
      %44 = vector.load %arg10[%c0_27, %c0_28] : memref<8x896xf32, #tpu.memory_space<vmem>>, vector<8x896xf32>
      tpu.vector_store %arg10[%c0_27, %c0_28], %43 {strides = array<i32>} : memref<8x896xf32, #tpu.memory_space<vmem>>, vector<8x896xf32>,
      %c0_29 = arith.constant 0 : index
      %c0_30 = arith.constant 0 : index
      %c0_31 = arith.constant 0 : index
      %45 = vector.load %arg9[%c0_29, %c0_30, %c0_31] : memref<2x100x32xf32, #tpu.memory_space<vmem>>, vector<1x100x32xf32>
      %46 = vector.shape_cast %45 : vector<1x100x32xf32> to vector<100x32xf32>
      %47 = vector.broadcast %39 : vector<1x32xf32> to vector<100x32xf32>
      %48 = arith.mulf %46, %47 : vector<100x32xf32>
      %49 = vector.broadcast %42 : vector<1x32xf32> to vector<100x32xf32>
      %50 = arith.addf %48, %49 : vector<100x32xf32>
      %cst_32 = arith.constant 0.000000e+00 : f32
      %51 = vector.broadcast %cst_32 : f32 to vector<100x32xf32>
      %52 = arith.cmpf ogt, %50, %51 : vector<100x32xf32>
      %cst_33 = arith.constant 0.00999999977 : f32
      %53 = vector.broadcast %cst_33 : f32 to vector<100x32xf32>
      %54 = arith.mulf %53, %50 : vector<100x32xf32>
      %55 = arith.select %52, %50, %54 : vector<100x32xi1>, vector<100x32xf32>
      %56 = vector.extract_strided_slice %55 {offsets = [0, 0], sizes = [1, 32], strides = [1, 1]} : vector<100x32xf32> to vector<1x32xf32>
      %c0_34 = arith.constant 0 : index
      %c0_35 = arith.constant 0 : index
      %57 = vector.load %arg10[%c0_34, %c0_35] : memref<8x896xf32, #tpu.memory_space<vmem>>, vector<1x32xf32>
      tpu.vector_store %arg10[%c0_34, %c0_35], %56 {strides = array<i32>} : memref<8x896xf32, #tpu.memory_space<vmem>>, vector<1x32xf32>,
      %58 = vector.extract_strided_slice %55 {offsets = [1, 0], sizes = [1, 32], strides = [1, 1]} : vector<100x32xf32> to vector<1x32xf32>
      %c0_36 = arith.constant 0 : index
      %c32 = arith.constant 32 : index
      %59 = vector.load %arg10[%c0_36, %c32] : memref<8x896xf32, #tpu.memory_space<vmem>>, vector<1x32xf32>
      tpu.vector_store %arg10[%c0_36, %c32], %58 {strides = array<i32>} : memref<8x896xf32, #tpu.memory_space<vmem>>, vector<1x32xf32>,
      %60 = vector.extract_strided_slice %55 {offsets = [2, 0], sizes = [1, 32], strides = [1, 1]} : vector<100x32xf32> to vector<1x32xf32>
      %c0_37 = arith.constant 0 : index
      %c64 = arith.constant 64 : index
      %61 = vector.load %arg10[%c0_37, %c64] : memref<8x896xf32, #tpu.memory_space<vmem>>, vector<1x32xf32>
      tpu.vector_store %arg10[%c0_37, %c64], %60 {strides = array<i32>} : memref<8x896xf32, #tpu.memory_space<vmem>>, vector<1x32xf32>,
      %62 = vector.extract_strided_slice %55 {offsets = [3, 0], sizes = [1, 32], strides = [1, 1]} : vector<100x32xf32> to vector<1x32xf32>
      %c0_38 = arith.constant 0 : index
      %c96 = arith.constant 96 : index
      %63 = vector.load %arg10[%c0_38, %c96] : memref<8x896xf32, #tpu.memory_space<vmem>>, vector<1x32xf32>
      tpu.vector_store %arg10[%c0_38, %c96], %62 {strides = array<i32>} : memref<8x896xf32, #tpu.memory_space<vmem>>, vector<1x32xf32>,
      %64 = vector.extract_strided_slice %55 {offsets = [4, 0], sizes = [1, 32], strides = [1, 1]} : vector<100x32xf32> to vector<1x32xf32>
      %c0_39 = arith.constant 0 : index
      %c128 = arith.constant 128 : index
      %65 = vector.load %arg10[%c0_39, %c128] : memref<8x896xf32, #tpu.memory_space<vmem>>, vector<1x32xf32>
      tpu.vector_store %arg10[%c0_39, %c128], %64 {strides = array<i32>} : memref<8x896xf32, #tpu.memory_space<vmem>>, vector<1x32xf32>,
      %66 = vector.extract_strided_slice %55 {offsets = [10, 0], sizes = [1, 32], strides = [1, 1]} : vector<100x32xf32> to vector<1x32xf32>
      %c0_40 = arith.constant 0 : index
      %c160 = arith.constant 160 : index
      %67 = vector.load %arg10[%c0_40, %c160] : memref<8x896xf32, #tpu.memory_space<vmem>>, vector<1x32xf32>
      tpu.vector_store %arg10[%c0_40, %c160], %66 {strides = array<i32>} : memref<8x896xf32, #tpu.memory_space<vmem>>, vector<1x32xf32>,
      %68 = vector.extract_strided_slice %55 {offsets = [11, 0], sizes = [1, 32], strides = [1, 1]} : vector<100x32xf32> to vector<1x32xf32>
      %c0_41 = arith.constant 0 : index
      %c192 = arith.constant 192 : index
      %69 = vector.load %arg10[%c0_41, %c192] : memref<8x896xf32, #tpu.memory_space<vmem>>, vector<1x32xf32>
      tpu.vector_store %arg10[%c0_41, %c192], %68 {strides = array<i32>} : memref<8x896xf32, #tpu.memory_space<vmem>>, vector<1x32xf32>,
      %70 = vector.extract_strided_slice %55 {offsets = [12, 0], sizes = [1, 32], strides = [1, 1]} : vector<100x32xf32> to vector<1x32xf32>
      %c0_42 = arith.constant 0 : index
      %c224 = arith.constant 224 : index
      %71 = vector.load %arg10[%c0_42, %c224] : memref<8x896xf32, #tpu.memory_space<vmem>>, vector<1x32xf32>
      tpu.vector_store %arg10[%c0_42, %c224], %70 {strides = array<i32>} : memref<8x896xf32, #tpu.memory_space<vmem>>, vector<1x32xf32>,
      %72 = vector.extract_strided_slice %55 {offsets = [13, 0], sizes = [1, 32], strides = [1, 1]} : vector<100x32xf32> to vector<1x32xf32>
      %c0_43 = arith.constant 0 : index
      %c256 = arith.constant 256 : index
      %73 = vector.load %arg10[%c0_43, %c256] : memref<8x896xf32, #tpu.memory_space<vmem>>, vector<1x32xf32>
      tpu.vector_store %arg10[%c0_43, %c256], %72 {strides = array<i32>} : memref<8x896xf32, #tpu.memory_space<vmem>>, vector<1x32xf32>,
      %74 = vector.extract_strided_slice %55 {offsets = [14, 0], sizes = [1, 32], strides = [1, 1]} : vector<100x32xf32> to vector<1x32xf32>
      %c0_44 = arith.constant 0 : index
      %c288 = arith.constant 288 : index
      %75 = vector.load %arg10[%c0_44, %c288] : memref<8x896xf32, #tpu.memory_space<vmem>>, vector<1x32xf32>
      tpu.vector_store %arg10[%c0_44, %c288], %74 {strides = array<i32>} : memref<8x896xf32, #tpu.memory_space<vmem>>, vector<1x32xf32>,
      %76 = vector.extract_strided_slice %55 {offsets = [20, 0], sizes = [1, 32], strides = [1, 1]} : vector<100x32xf32> to vector<1x32xf32>
      %c0_45 = arith.constant 0 : index
      %c320 = arith.constant 320 : index
      %77 = vector.load %arg10[%c0_45, %c320] : memref<8x896xf32, #tpu.memory_space<vmem>>, vector<1x32xf32>
      tpu.vector_store %arg10[%c0_45, %c320], %76 {strides = array<i32>} : memref<8x896xf32, #tpu.memory_space<vmem>>, vector<1x32xf32>,
      %78 = vector.extract_strided_slice %55 {offsets = [21, 0], sizes = [1, 32], strides = [1, 1]} : vector<100x32xf32> to vector<1x32xf32>
      %c0_46 = arith.constant 0 : index
      %c352 = arith.constant 352 : index
      %79 = vector.load %arg10[%c0_46, %c352] : memref<8x896xf32, #tpu.memory_space<vmem>>, vector<1x32xf32>
      tpu.vector_store %arg10[%c0_46, %c352], %78 {strides = array<i32>} : memref<8x896xf32, #tpu.memory_space<vmem>>, vector<1x32xf32>,
      %80 = vector.extract_strided_slice %55 {offsets = [22, 0], sizes = [1, 32], strides = [1, 1]} : vector<100x32xf32> to vector<1x32xf32>
      %c0_47 = arith.constant 0 : index
      %c384 = arith.constant 384 : index
      %81 = vector.load %arg10[%c0_47, %c384] : memref<8x896xf32, #tpu.memory_space<vmem>>, vector<1x32xf32>
      tpu.vector_store %arg10[%c0_47, %c384], %80 {strides = array<i32>} : memref<8x896xf32, #tpu.memory_space<vmem>>, vector<1x32xf32>,
      %82 = vector.extract_strided_slice %55 {offsets = [23, 0], sizes = [1, 32], strides = [1, 1]} : vector<100x32xf32> to vector<1x32xf32>
      %c0_48 = arith.constant 0 : index
      %c416 = arith.constant 416 : index
      %83 = vector.load %arg10[%c0_48, %c416] : memref<8x896xf32, #tpu.memory_space<vmem>>, vector<1x32xf32>
      tpu.vector_store %arg10[%c0_48, %c416], %82 {strides = array<i32>} : memref<8x896xf32, #tpu.memory_space<vmem>>, vector<1x32xf32>,
      %84 = vector.extract_strided_slice %55 {offsets = [24, 0], sizes = [1, 32], strides = [1, 1]} : vector<100x32xf32> to vector<1x32xf32>
      %c0_49 = arith.constant 0 : index
      %c448 = arith.constant 448 : index
      %85 = vector.load %arg10[%c0_49, %c448] : memref<8x896xf32, #tpu.memory_space<vmem>>, vector<1x32xf32>
      tpu.vector_store %arg10[%c0_49, %c448], %84 {strides = array<i32>} : memref<8x896xf32, #tpu.memory_space<vmem>>, vector<1x32xf32>,
      %86 = vector.extract_strided_slice %55 {offsets = [30, 0], sizes = [1, 32], strides = [1, 1]} : vector<100x32xf32> to vector<1x32xf32>
      %c0_50 = arith.constant 0 : index
      %c480 = arith.constant 480 : index
      %87 = vector.load %arg10[%c0_50, %c480] : memref<8x896xf32, #tpu.memory_space<vmem>>, vector<1x32xf32>
      tpu.vector_store %arg10[%c0_50, %c480], %86 {strides = array<i32>} : memref<8x896xf32, #tpu.memory_space<vmem>>, vector<1x32xf32>,
      %88 = vector.extract_strided_slice %55 {offsets = [31, 0], sizes = [1, 32], strides = [1, 1]} : vector<100x32xf32> to vector<1x32xf32>
      %c0_51 = arith.constant 0 : index
      %c512 = arith.constant 512 : index
      %89 = vector.load %arg10[%c0_51, %c512] : memref<8x896xf32, #tpu.memory_space<vmem>>, vector<1x32xf32>
      tpu.vector_store %arg10[%c0_51, %c512], %88 {strides = array<i32>} : memref<8x896xf32, #tpu.memory_space<vmem>>, vector<1x32xf32>,
      %90 = vector.extract_strided_slice %55 {offsets = [32, 0], sizes = [1, 32], strides = [1, 1]} : vector<100x32xf32> to vector<1x32xf32>
      %c0_52 = arith.constant 0 : index
      %c544 = arith.constant 544 : index
      %91 = vector.load %arg10[%c0_52, %c544] : memref<8x896xf32, #tpu.memory_space<vmem>>, vector<1x32xf32>
      tpu.vector_store %arg10[%c0_52, %c544], %90 {strides = array<i32>} : memref<8x896xf32, #tpu.memory_space<vmem>>, vector<1x32xf32>,
      %92 = vector.extract_strided_slice %55 {offsets = [33, 0], sizes = [1, 32], strides = [1, 1]} : vector<100x32xf32> to vector<1x32xf32>
      %c0_53 = arith.constant 0 : index
      %c576 = arith.constant 576 : index
      %93 = vector.load %arg10[%c0_53, %c576] : memref<8x896xf32, #tpu.memory_space<vmem>>, vector<1x32xf32>
      tpu.vector_store %arg10[%c0_53, %c576], %92 {strides = array<i32>} : memref<8x896xf32, #tpu.memory_space<vmem>>, vector<1x32xf32>,
      %94 = vector.extract_strided_slice %55 {offsets = [34, 0], sizes = [1, 32], strides = [1, 1]} : vector<100x32xf32> to vector<1x32xf32>
      %c0_54 = arith.constant 0 : index
      %c608 = arith.constant 608 : index
      %95 = vector.load %arg10[%c0_54, %c608] : memref<8x896xf32, #tpu.memory_space<vmem>>, vector<1x32xf32>
      tpu.vector_store %arg10[%c0_54, %c608], %94 {strides = array<i32>} : memref<8x896xf32, #tpu.memory_space<vmem>>, vector<1x32xf32>,
      %96 = vector.extract_strided_slice %55 {offsets = [40, 0], sizes = [1, 32], strides = [1, 1]} : vector<100x32xf32> to vector<1x32xf32>
      %c0_55 = arith.constant 0 : index
      %c640 = arith.constant 640 : index
      %97 = vector.load %arg10[%c0_55, %c640] : memref<8x896xf32, #tpu.memory_space<vmem>>, vector<1x32xf32>
      tpu.vector_store %arg10[%c0_55, %c640], %96 {strides = array<i32>} : memref<8x896xf32, #tpu.memory_space<vmem>>, vector<1x32xf32>,
      %98 = vector.extract_strided_slice %55 {offsets = [41, 0], sizes = [1, 32], strides = [1, 1]} : vector<100x32xf32> to vector<1x32xf32>
      %c0_56 = arith.constant 0 : index
      %c672 = arith.constant 672 : index
      %99 = vector.load %arg10[%c0_56, %c672] : memref<8x896xf32, #tpu.memory_space<vmem>>, vector<1x32xf32>
      tpu.vector_store %arg10[%c0_56, %c672], %98 {strides = array<i32>} : memref<8x896xf32, #tpu.memory_space<vmem>>, vector<1x32xf32>,
      %100 = vector.extract_strided_slice %55 {offsets = [42, 0], sizes = [1, 32], strides = [1, 1]} : vector<100x32xf32> to vector<1x32xf32>
      %c0_57 = arith.constant 0 : index
      %c704 = arith.constant 704 : index
      %101 = vector.load %arg10[%c0_57, %c704] : memref<8x896xf32, #tpu.memory_space<vmem>>, vector<1x32xf32>
      tpu.vector_store %arg10[%c0_57, %c704], %100 {strides = array<i32>} : memref<8x896xf32, #tpu.memory_space<vmem>>, vector<1x32xf32>,
      %102 = vector.extract_strided_slice %55 {offsets = [43, 0], sizes = [1, 32], strides = [1, 1]} : vector<100x32xf32> to vector<1x32xf32>
      %c0_58 = arith.constant 0 : index
      %c736 = arith.constant 736 : index
      %103 = vector.load %arg10[%c0_58, %c736] : memref<8x896xf32, #tpu.memory_space<vmem>>, vector<1x32xf32>
      tpu.vector_store %arg10[%c0_58, %c736], %102 {strides = array<i32>} : memref<8x896xf32, #tpu.memory_space<vmem>>, vector<1x32xf32>,
      %104 = vector.extract_strided_slice %55 {offsets = [44, 0], sizes = [1, 32], strides = [1, 1]} : vector<100x32xf32> to vector<1x32xf32>
      %c0_59 = arith.constant 0 : index
      %c768 = arith.constant 768 : index
      %105 = vector.load %arg10[%c0_59, %c768] : memref<8x896xf32, #tpu.memory_space<vmem>>, vector<1x32xf32>
      tpu.vector_store %arg10[%c0_59, %c768], %104 {strides = array<i32>} : memref<8x896xf32, #tpu.memory_space<vmem>>, vector<1x32xf32>,
      %106 = vector.extract_strided_slice %55 {offsets = [5, 0], sizes = [1, 32], strides = [1, 1]} : vector<100x32xf32> to vector<1x32xf32>
      %c1 = arith.constant 1 : index
      %c0_60 = arith.constant 0 : index
      %107 = vector.load %arg10[%c1, %c0_60] : memref<8x896xf32, #tpu.memory_space<vmem>>, vector<1x32xf32>
      tpu.vector_store %arg10[%c1, %c0_60], %106 {strides = array<i32>} : memref<8x896xf32, #tpu.memory_space<vmem>>, vector<1x32xf32>,
      %108 = vector.extract_strided_slice %55 {offsets = [6, 0], sizes = [1, 32], strides = [1, 1]} : vector<100x32xf32> to vector<1x32xf32>
      %c1_61 = arith.constant 1 : index
      %c32_62 = arith.constant 32 : index
      %109 = vector.load %arg10[%c1_61, %c32_62] : memref<8x896xf32, #tpu.memory_space<vmem>>, vector<1x32xf32>
      tpu.vector_store %arg10[%c1_61, %c32_62], %108 {strides = array<i32>} : memref<8x896xf32, #tpu.memory_space<vmem>>, vector<1x32xf32>,
      %110 = vector.extract_strided_slice %55 {offsets = [7, 0], sizes = [1, 32], strides = [1, 1]} : vector<100x32xf32> to vector<1x32xf32>
      %c1_63 = arith.constant 1 : index
      %c64_64 = arith.constant 64 : index
      %111 = vector.load %arg10[%c1_63, %c64_64] : memref<8x896xf32, #tpu.memory_space<vmem>>, vector<1x32xf32>
      tpu.vector_store %arg10[%c1_63, %c64_64], %110 {strides = array<i32>} : memref<8x896xf32, #tpu.memory_space<vmem>>, vector<1x32xf32>,
      %112 = vector.extract_strided_slice %55 {offsets = [8, 0], sizes = [1, 32], strides = [1, 1]} : vector<100x32xf32> to vector<1x32xf32>
      %c1_65 = arith.constant 1 : index
      %c96_66 = arith.constant 96 : index
      %113 = vector.load %arg10[%c1_65, %c96_66] : memref<8x896xf32, #tpu.memory_space<vmem>>, vector<1x32xf32>
      tpu.vector_store %arg10[%c1_65, %c96_66], %112 {strides = array<i32>} : memref<8x896xf32, #tpu.memory_space<vmem>>, vector<1x32xf32>,
      %114 = vector.extract_strided_slice %55 {offsets = [9, 0], sizes = [1, 32], strides = [1, 1]} : vector<100x32xf32> to vector<1x32xf32>
      %c1_67 = arith.constant 1 : index
      %c128_68 = arith.constant 128 : index
      %115 = vector.load %arg10[%c1_67, %c128_68] : memref<8x896xf32, #tpu.memory_space<vmem>>, vector<1x32xf32>
      tpu.vector_store %arg10[%c1_67, %c128_68], %114 {strides = array<i32>} : memref<8x896xf32, #tpu.memory_space<vmem>>, vector<1x32xf32>,
      %116 = vector.extract_strided_slice %55 {offsets = [15, 0], sizes = [1, 32], strides = [1, 1]} : vector<100x32xf32> to vector<1x32xf32>
      %c1_69 = arith.constant 1 : index
      %c160_70 = arith.constant 160 : index
      %117 = vector.load %arg10[%c1_69, %c160_70] : memref<8x896xf32, #tpu.memory_space<vmem>>, vector<1x32xf32>
      tpu.vector_store %arg10[%c1_69, %c160_70], %116 {strides = array<i32>} : memref<8x896xf32, #tpu.memory_space<vmem>>, vector<1x32xf32>,
      %118 = vector.extract_strided_slice %55 {offsets = [16, 0], sizes = [1, 32], strides = [1, 1]} : vector<100x32xf32> to vector<1x32xf32>
      %c1_71 = arith.constant 1 : index
      %c192_72 = arith.constant 192 : index
      %119 = vector.load %arg10[%c1_71, %c192_72] : memref<8x896xf32, #tpu.memory_space<vmem>>, vector<1x32xf32>
      tpu.vector_store %arg10[%c1_71, %c192_72], %118 {strides = array<i32>} : memref<8x896xf32, #tpu.memory_space<vmem>>, vector<1x32xf32>,
      %120 = vector.extract_strided_slice %55 {offsets = [17, 0], sizes = [1, 32], strides = [1, 1]} : vector<100x32xf32> to vector<1x32xf32>
      %c1_73 = arith.constant 1 : index
      %c224_74 = arith.constant 224 : index
      %121 = vector.load %arg10[%c1_73, %c224_74] : memref<8x896xf32, #tpu.memory_space<vmem>>, vector<1x32xf32>
      tpu.vector_store %arg10[%c1_73, %c224_74], %120 {strides = array<i32>} : memref<8x896xf32, #tpu.memory_space<vmem>>, vector<1x32xf32>,
      %122 = vector.extract_strided_slice %55 {offsets = [18, 0], sizes = [1, 32], strides = [1, 1]} : vector<100x32xf32> to vector<1x32xf32>
      %c1_75 = arith.constant 1 : index
      %c256_76 = arith.constant 256 : index
      %123 = vector.load %arg10[%c1_75, %c256_76] : memref<8x896xf32, #tpu.memory_space<vmem>>, vector<1x32xf32>
      tpu.vector_store %arg10[%c1_75, %c256_76], %122 {strides = array<i32>} : memref<8x896xf32, #tpu.memory_space<vmem>>, vector<1x32xf32>,
      %124 = vector.extract_strided_slice %55 {offsets = [19, 0], sizes = [1, 32], strides = [1, 1]} : vector<100x32xf32> to vector<1x32xf32>
      %c1_77 = arith.constant 1 : index
      %c288_78 = arith.constant 288 : index
      %125 = vector.load %arg10[%c1_77, %c288_78] : memref<8x896xf32, #tpu.memory_space<vmem>>, vector<1x32xf32>
      tpu.vector_store %arg10[%c1_77, %c288_78], %124 {strides = array<i32>} : memref<8x896xf32, #tpu.memory_space<vmem>>, vector<1x32xf32>,
      %126 = vector.extract_strided_slice %55 {offsets = [25, 0], sizes = [1, 32], strides = [1, 1]} : vector<100x32xf32> to vector<1x32xf32>
      %c1_79 = arith.constant 1 : index
      %c320_80 = arith.constant 320 : index
      %127 = vector.load %arg10[%c1_79, %c320_80] : memref<8x896xf32, #tpu.memory_space<vmem>>, vector<1x32xf32>
      tpu.vector_store %arg10[%c1_79, %c320_80], %126 {strides = array<i32>} : memref<8x896xf32, #tpu.memory_space<vmem>>, vector<1x32xf32>,
      %128 = vector.extract_strided_slice %55 {offsets = [26, 0], sizes = [1, 32], strides = [1, 1]} : vector<100x32xf32> to vector<1x32xf32>
      %c1_81 = arith.constant 1 : index
      %c352_82 = arith.constant 352 : index
      %129 = vector.load %arg10[%c1_81, %c352_82] : memref<8x896xf32, #tpu.memory_space<vmem>>, vector<1x32xf32>
      tpu.vector_store %arg10[%c1_81, %c352_82], %128 {strides = array<i32>} : memref<8x896xf32, #tpu.memory_space<vmem>>, vector<1x32xf32>,
      %130 = vector.extract_strided_slice %55 {offsets = [27, 0], sizes = [1, 32], strides = [1, 1]} : vector<100x32xf32> to vector<1x32xf32>
      %c1_83 = arith.constant 1 : index
      %c384_84 = arith.constant 384 : index
      %131 = vector.load %arg10[%c1_83, %c384_84] : memref<8x896xf32, #tpu.memory_space<vmem>>, vector<1x32xf32>
      tpu.vector_store %arg10[%c1_83, %c384_84], %130 {strides = array<i32>} : memref<8x896xf32, #tpu.memory_space<vmem>>, vector<1x32xf32>,
      %132 = vector.extract_strided_slice %55 {offsets = [28, 0], sizes = [1, 32], strides = [1, 1]} : vector<100x32xf32> to vector<1x32xf32>
      %c1_85 = arith.constant 1 : index
      %c416_86 = arith.constant 416 : index
      %133 = vector.load %arg10[%c1_85, %c416_86] : memref<8x896xf32, #tpu.memory_space<vmem>>, vector<1x32xf32>
      tpu.vector_store %arg10[%c1_85, %c416_86], %132 {strides = array<i32>} : memref<8x896xf32, #tpu.memory_space<vmem>>, vector<1x32xf32>,
      %134 = vector.extract_strided_slice %55 {offsets = [29, 0], sizes = [1, 32], strides = [1, 1]} : vector<100x32xf32> to vector<1x32xf32>
      %c1_87 = arith.constant 1 : index
      %c448_88 = arith.constant 448 : index
      %135 = vector.load %arg10[%c1_87, %c448_88] : memref<8x896xf32, #tpu.memory_space<vmem>>, vector<1x32xf32>
      tpu.vector_store %arg10[%c1_87, %c448_88], %134 {strides = array<i32>} : memref<8x896xf32, #tpu.memory_space<vmem>>, vector<1x32xf32>,
      %136 = vector.extract_strided_slice %55 {offsets = [35, 0], sizes = [1, 32], strides = [1, 1]} : vector<100x32xf32> to vector<1x32xf32>
      %c1_89 = arith.constant 1 : index
      %c480_90 = arith.constant 480 : index
      %137 = vector.load %arg10[%c1_89, %c480_90] : memref<8x896xf32, #tpu.memory_space<vmem>>, vector<1x32xf32>
      tpu.vector_store %arg10[%c1_89, %c480_90], %136 {strides = array<i32>} : memref<8x896xf32, #tpu.memory_space<vmem>>, vector<1x32xf32>,
      %138 = vector.extract_strided_slice %55 {offsets = [36, 0], sizes = [1, 32], strides = [1, 1]} : vector<100x32xf32> to vector<1x32xf32>
      %c1_91 = arith.constant 1 : index
      %c512_92 = arith.constant 512 : index
      %139 = vector.load %arg10[%c1_91, %c512_92] : memref<8x896xf32, #tpu.memory_space<vmem>>, vector<1x32xf32>
      tpu.vector_store %arg10[%c1_91, %c512_92], %138 {strides = array<i32>} : memref<8x896xf32, #tpu.memory_space<vmem>>, vector<1x32xf32>,
      %140 = vector.extract_strided_slice %55 {offsets = [37, 0], sizes = [1, 32], strides = [1, 1]} : vector<100x32xf32> to vector<1x32xf32>
      %c1_93 = arith.constant 1 : index
      %c544_94 = arith.constant 544 : index
      %141 = vector.load %arg10[%c1_93, %c544_94] : memref<8x896xf32, #tpu.memory_space<vmem>>, vector<1x32xf32>
      tpu.vector_store %arg10[%c1_93, %c544_94], %140 {strides = array<i32>} : memref<8x896xf32, #tpu.memory_space<vmem>>, vector<1x32xf32>,
      %142 = vector.extract_strided_slice %55 {offsets = [38, 0], sizes = [1, 32], strides = [1, 1]} : vector<100x32xf32> to vector<1x32xf32>
      %c1_95 = arith.constant 1 : index
      %c576_96 = arith.constant 576 : index
      %143 = vector.load %arg10[%c1_95, %c576_96] : memref<8x896xf32, #tpu.memory_space<vmem>>, vector<1x32xf32>
      tpu.vector_store %arg10[%c1_95, %c576_96], %142 {strides = array<i32>} : memref<8x896xf32, #tpu.memory_space<vmem>>, vector<1x32xf32>,
      %144 = vector.extract_strided_slice %55 {offsets = [39, 0], sizes = [1, 32], strides = [1, 1]} : vector<100x32xf32> to vector<1x32xf32>
      %c1_97 = arith.constant 1 : index
      %c608_98 = arith.constant 608 : index
      %145 = vector.load %arg10[%c1_97, %c608_98] : memref<8x896xf32, #tpu.memory_space<vmem>>, vector<1x32xf32>
      tpu.vector_store %arg10[%c1_97, %c608_98], %144 {strides = array<i32>} : memref<8x896xf32, #tpu.memory_space<vmem>>, vector<1x32xf32>,
      %146 = vector.extract_strided_slice %55 {offsets = [45, 0], sizes = [1, 32], strides = [1, 1]} : vector<100x32xf32> to vector<1x32xf32>
      %c1_99 = arith.constant 1 : index
      %c640_100 = arith.constant 640 : index
      %147 = vector.load %arg10[%c1_99, %c640_100] : memref<8x896xf32, #tpu.memory_space<vmem>>, vector<1x32xf32>
      tpu.vector_store %arg10[%c1_99, %c640_100], %146 {strides = array<i32>} : memref<8x896xf32, #tpu.memory_space<vmem>>, vector<1x32xf32>,
      %148 = vector.extract_strided_slice %55 {offsets = [46, 0], sizes = [1, 32], strides = [1, 1]} : vector<100x32xf32> to vector<1x32xf32>
      %c1_101 = arith.constant 1 : index
      %c672_102 = arith.constant 672 : index
      %149 = vector.load %arg10[%c1_101, %c672_102] : memref<8x896xf32, #tpu.memory_space<vmem>>, vector<1x32xf32>
      tpu.vector_store %arg10[%c1_101, %c672_102], %148 {strides = array<i32>} : memref<8x896xf32, #tpu.memory_space<vmem>>, vector<1x32xf32>,
      %150 = vector.extract_strided_slice %55 {offsets = [47, 0], sizes = [1, 32], strides = [1, 1]} : vector<100x32xf32> to vector<1x32xf32>
      %c1_103 = arith.constant 1 : index
      %c704_104 = arith.constant 704 : index
      %151 = vector.load %arg10[%c1_103, %c704_104] : memref<8x896xf32, #tpu.memory_space<vmem>>, vector<1x32xf32>
      tpu.vector_store %arg10[%c1_103, %c704_104], %150 {strides = array<i32>} : memref<8x896xf32, #tpu.memory_space<vmem>>, vector<1x32xf32>,
      %152 = vector.extract_strided_slice %55 {offsets = [48, 0], sizes = [1, 32], strides = [1, 1]} : vector<100x32xf32> to vector<1x32xf32>
      %c1_105 = arith.constant 1 : index
      %c736_106 = arith.constant 736 : index
      %153 = vector.load %arg10[%c1_105, %c736_106] : memref<8x896xf32, #tpu.memory_space<vmem>>, vector<1x32xf32>
      tpu.vector_store %arg10[%c1_105, %c736_106], %152 {strides = array<i32>} : memref<8x896xf32, #tpu.memory_space<vmem>>, vector<1x32xf32>,
      %154 = vector.extract_strided_slice %55 {offsets = [49, 0], sizes = [1, 32], strides = [1, 1]} : vector<100x32xf32> to vector<1x32xf32>
      %c1_107 = arith.constant 1 : index
      %c768_108 = arith.constant 768 : index
      %155 = vector.load %arg10[%c1_107, %c768_108] : memref<8x896xf32, #tpu.memory_space<vmem>>, vector<1x32xf32>
      tpu.vector_store %arg10[%c1_107, %c768_108], %154 {strides = array<i32>} : memref<8x896xf32, #tpu.memory_space<vmem>>, vector<1x32xf32>,
      %156 = vector.extract_strided_slice %55 {offsets = [50, 0], sizes = [1, 32], strides = [1, 1]} : vector<100x32xf32> to vector<1x32xf32>
      %c2 = arith.constant 2 : index
      %c0_109 = arith.constant 0 : index
      %157 = vector.load %arg10[%c2, %c0_109] : memref<8x896xf32, #tpu.memory_space<vmem>>, vector<1x32xf32>
      tpu.vector_store %arg10[%c2, %c0_109], %156 {strides = array<i32>} : memref<8x896xf32, #tpu.memory_space<vmem>>, vector<1x32xf32>,
      %158 = vector.extract_strided_slice %55 {offsets = [51, 0], sizes = [1, 32], strides = [1, 1]} : vector<100x32xf32> to vector<1x32xf32>
      %c2_110 = arith.constant 2 : index
      %c32_111 = arith.constant 32 : index
      %159 = vector.load %arg10[%c2_110, %c32_111] : memref<8x896xf32, #tpu.memory_space<vmem>>, vector<1x32xf32>
      tpu.vector_store %arg10[%c2_110, %c32_111], %158 {strides = array<i32>} : memref<8x896xf32, #tpu.memory_space<vmem>>, vector<1x32xf32>,
      %160 = vector.extract_strided_slice %55 {offsets = [52, 0], sizes = [1, 32], strides = [1, 1]} : vector<100x32xf32> to vector<1x32xf32>
      %c2_112 = arith.constant 2 : index
      %c64_113 = arith.constant 64 : index
      %161 = vector.load %arg10[%c2_112, %c64_113] : memref<8x896xf32, #tpu.memory_space<vmem>>, vector<1x32xf32>
      tpu.vector_store %arg10[%c2_112, %c64_113], %160 {strides = array<i32>} : memref<8x896xf32, #tpu.memory_space<vmem>>, vector<1x32xf32>,
      %162 = vector.extract_strided_slice %55 {offsets = [53, 0], sizes = [1, 32], strides = [1, 1]} : vector<100x32xf32> to vector<1x32xf32>
      %c2_114 = arith.constant 2 : index
      %c96_115 = arith.constant 96 : index
      %163 = vector.load %arg10[%c2_114, %c96_115] : memref<8x896xf32, #tpu.memory_space<vmem>>, vector<1x32xf32>
      tpu.vector_store %arg10[%c2_114, %c96_115], %162 {strides = array<i32>} : memref<8x896xf32, #tpu.memory_space<vmem>>, vector<1x32xf32>,
      %164 = vector.extract_strided_slice %55 {offsets = [54, 0], sizes = [1, 32], strides = [1, 1]} : vector<100x32xf32> to vector<1x32xf32>
      %c2_116 = arith.constant 2 : index
      %c128_117 = arith.constant 128 : index
      %165 = vector.load %arg10[%c2_116, %c128_117] : memref<8x896xf32, #tpu.memory_space<vmem>>, vector<1x32xf32>
      tpu.vector_store %arg10[%c2_116, %c128_117], %164 {strides = array<i32>} : memref<8x896xf32, #tpu.memory_space<vmem>>, vector<1x32xf32>,
      %166 = vector.extract_strided_slice %55 {offsets = [60, 0], sizes = [1, 32], strides = [1, 1]} : vector<100x32xf32> to vector<1x32xf32>
      %c2_118 = arith.constant 2 : index
      %c160_119 = arith.constant 160 : index
      %167 = vector.load %arg10[%c2_118, %c160_119] : memref<8x896xf32, #tpu.memory_space<vmem>>, vector<1x32xf32>
      tpu.vector_store %arg10[%c2_118, %c160_119], %166 {strides = array<i32>} : memref<8x896xf32, #tpu.memory_space<vmem>>, vector<1x32xf32>,
      %168 = vector.extract_strided_slice %55 {offsets = [61, 0], sizes = [1, 32], strides = [1, 1]} : vector<100x32xf32> to vector<1x32xf32>
      %c2_120 = arith.constant 2 : index
      %c192_121 = arith.constant 192 : index
      %169 = vector.load %arg10[%c2_120, %c192_121] : memref<8x896xf32, #tpu.memory_space<vmem>>, vector<1x32xf32>
      tpu.vector_store %arg10[%c2_120, %c192_121], %168 {strides = array<i32>} : memref<8x896xf32, #tpu.memory_space<vmem>>, vector<1x32xf32>,
      %170 = vector.extract_strided_slice %55 {offsets = [62, 0], sizes = [1, 32], strides = [1, 1]} : vector<100x32xf32> to vector<1x32xf32>
      %c2_122 = arith.constant 2 : index
      %c224_123 = arith.constant 224 : index
      %171 = vector.load %arg10[%c2_122, %c224_123] : memref<8x896xf32, #tpu.memory_space<vmem>>, vector<1x32xf32>
      tpu.vector_store %arg10[%c2_122, %c224_123], %170 {strides = array<i32>} : memref<8x896xf32, #tpu.memory_space<vmem>>, vector<1x32xf32>,
      %172 = vector.extract_strided_slice %55 {offsets = [63, 0], sizes = [1, 32], strides = [1, 1]} : vector<100x32xf32> to vector<1x32xf32>
      %c2_124 = arith.constant 2 : index
      %c256_125 = arith.constant 256 : index
      %173 = vector.load %arg10[%c2_124, %c256_125] : memref<8x896xf32, #tpu.memory_space<vmem>>, vector<1x32xf32>
      tpu.vector_store %arg10[%c2_124, %c256_125], %172 {strides = array<i32>} : memref<8x896xf32, #tpu.memory_space<vmem>>, vector<1x32xf32>,
      %174 = vector.extract_strided_slice %55 {offsets = [64, 0], sizes = [1, 32], strides = [1, 1]} : vector<100x32xf32> to vector<1x32xf32>
      %c2_126 = arith.constant 2 : index
      %c288_127 = arith.constant 288 : index
      %175 = vector.load %arg10[%c2_126, %c288_127] : memref<8x896xf32, #tpu.memory_space<vmem>>, vector<1x32xf32>
      tpu.vector_store %arg10[%c2_126, %c288_127], %174 {strides = array<i32>} : memref<8x896xf32, #tpu.memory_space<vmem>>, vector<1x32xf32>,
      %176 = vector.extract_strided_slice %55 {offsets = [70, 0], sizes = [1, 32], strides = [1, 1]} : vector<100x32xf32> to vector<1x32xf32>
      %c2_128 = arith.constant 2 : index
      %c320_129 = arith.constant 320 : index
      %177 = vector.load %arg10[%c2_128, %c320_129] : memref<8x896xf32, #tpu.memory_space<vmem>>, vector<1x32xf32>
      tpu.vector_store %arg10[%c2_128, %c320_129], %176 {strides = array<i32>} : memref<8x896xf32, #tpu.memory_space<vmem>>, vector<1x32xf32>,
      %178 = vector.extract_strided_slice %55 {offsets = [71, 0], sizes = [1, 32], strides = [1, 1]} : vector<100x32xf32> to vector<1x32xf32>
      %c2_130 = arith.constant 2 : index
      %c352_131 = arith.constant 352 : index
      %179 = vector.load %arg10[%c2_130, %c352_131] : memref<8x896xf32, #tpu.memory_space<vmem>>, vector<1x32xf32>
      tpu.vector_store %arg10[%c2_130, %c352_131], %178 {strides = array<i32>} : memref<8x896xf32, #tpu.memory_space<vmem>>, vector<1x32xf32>,
      %180 = vector.extract_strided_slice %55 {offsets = [72, 0], sizes = [1, 32], strides = [1, 1]} : vector<100x32xf32> to vector<1x32xf32>
      %c2_132 = arith.constant 2 : index
      %c384_133 = arith.constant 384 : index
      %181 = vector.load %arg10[%c2_132, %c384_133] : memref<8x896xf32, #tpu.memory_space<vmem>>, vector<1x32xf32>
      tpu.vector_store %arg10[%c2_132, %c384_133], %180 {strides = array<i32>} : memref<8x896xf32, #tpu.memory_space<vmem>>, vector<1x32xf32>,
      %182 = vector.extract_strided_slice %55 {offsets = [73, 0], sizes = [1, 32], strides = [1, 1]} : vector<100x32xf32> to vector<1x32xf32>
      %c2_134 = arith.constant 2 : index
      %c416_135 = arith.constant 416 : index
      %183 = vector.load %arg10[%c2_134, %c416_135] : memref<8x896xf32, #tpu.memory_space<vmem>>, vector<1x32xf32>
      tpu.vector_store %arg10[%c2_134, %c416_135], %182 {strides = array<i32>} : memref<8x896xf32, #tpu.memory_space<vmem>>, vector<1x32xf32>,
      %184 = vector.extract_strided_slice %55 {offsets = [74, 0], sizes = [1, 32], strides = [1, 1]} : vector<100x32xf32> to vector<1x32xf32>
      %c2_136 = arith.constant 2 : index
      %c448_137 = arith.constant 448 : index
      %185 = vector.load %arg10[%c2_136, %c448_137] : memref<8x896xf32, #tpu.memory_space<vmem>>, vector<1x32xf32>
      tpu.vector_store %arg10[%c2_136, %c448_137], %184 {strides = array<i32>} : memref<8x896xf32, #tpu.memory_space<vmem>>, vector<1x32xf32>,
      %186 = vector.extract_strided_slice %55 {offsets = [80, 0], sizes = [1, 32], strides = [1, 1]} : vector<100x32xf32> to vector<1x32xf32>
      %c2_138 = arith.constant 2 : index
      %c480_139 = arith.constant 480 : index
      %187 = vector.load %arg10[%c2_138, %c480_139] : memref<8x896xf32, #tpu.memory_space<vmem>>, vector<1x32xf32>
      tpu.vector_store %arg10[%c2_138, %c480_139], %186 {strides = array<i32>} : memref<8x896xf32, #tpu.memory_space<vmem>>, vector<1x32xf32>,
      %188 = vector.extract_strided_slice %55 {offsets = [81, 0], sizes = [1, 32], strides = [1, 1]} : vector<100x32xf32> to vector<1x32xf32>
      %c2_140 = arith.constant 2 : index
      %c512_141 = arith.constant 512 : index
      %189 = vector.load %arg10[%c2_140, %c512_141] : memref<8x896xf32, #tpu.memory_space<vmem>>, vector<1x32xf32>
      tpu.vector_store %arg10[%c2_140, %c512_141], %188 {strides = array<i32>} : memref<8x896xf32, #tpu.memory_space<vmem>>, vector<1x32xf32>,
      %190 = vector.extract_strided_slice %55 {offsets = [82, 0], sizes = [1, 32], strides = [1, 1]} : vector<100x32xf32> to vector<1x32xf32>
      %c2_142 = arith.constant 2 : index
      %c544_143 = arith.constant 544 : index
      %191 = vector.load %arg10[%c2_142, %c544_143] : memref<8x896xf32, #tpu.memory_space<vmem>>, vector<1x32xf32>
      tpu.vector_store %arg10[%c2_142, %c544_143], %190 {strides = array<i32>} : memref<8x896xf32, #tpu.memory_space<vmem>>, vector<1x32xf32>,
      %192 = vector.extract_strided_slice %55 {offsets = [83, 0], sizes = [1, 32], strides = [1, 1]} : vector<100x32xf32> to vector<1x32xf32>
      %c2_144 = arith.constant 2 : index
      %c576_145 = arith.constant 576 : index
      %193 = vector.load %arg10[%c2_144, %c576_145] : memref<8x896xf32, #tpu.memory_space<vmem>>, vector<1x32xf32>
      tpu.vector_store %arg10[%c2_144, %c576_145], %192 {strides = array<i32>} : memref<8x896xf32, #tpu.memory_space<vmem>>, vector<1x32xf32>,
      %194 = vector.extract_strided_slice %55 {offsets = [84, 0], sizes = [1, 32], strides = [1, 1]} : vector<100x32xf32> to vector<1x32xf32>
      %c2_146 = arith.constant 2 : index
      %c608_147 = arith.constant 608 : index
      %195 = vector.load %arg10[%c2_146, %c608_147] : memref<8x896xf32, #tpu.memory_space<vmem>>, vector<1x32xf32>
      tpu.vector_store %arg10[%c2_146, %c608_147], %194 {strides = array<i32>} : memref<8x896xf32, #tpu.memory_space<vmem>>, vector<1x32xf32>,
      %196 = vector.extract_strided_slice %55 {offsets = [90, 0], sizes = [1, 32], strides = [1, 1]} : vector<100x32xf32> to vector<1x32xf32>
      %c2_148 = arith.constant 2 : index
      %c640_149 = arith.constant 640 : index
      %197 = vector.load %arg10[%c2_148, %c640_149] : memref<8x896xf32, #tpu.memory_space<vmem>>, vector<1x32xf32>
      tpu.vector_store %arg10[%c2_148, %c640_149], %196 {strides = array<i32>} : memref<8x896xf32, #tpu.memory_space<vmem>>, vector<1x32xf32>,
      %198 = vector.extract_strided_slice %55 {offsets = [91, 0], sizes = [1, 32], strides = [1, 1]} : vector<100x32xf32> to vector<1x32xf32>
      %c2_150 = arith.constant 2 : index
      %c672_151 = arith.constant 672 : index
      %199 = vector.load %arg10[%c2_150, %c672_151] : memref<8x896xf32, #tpu.memory_space<vmem>>, vector<1x32xf32>
      tpu.vector_store %arg10[%c2_150, %c672_151], %198 {strides = array<i32>} : memref<8x896xf32, #tpu.memory_space<vmem>>, vector<1x32xf32>,
      %200 = vector.extract_strided_slice %55 {offsets = [92, 0], sizes = [1, 32], strides = [1, 1]} : vector<100x32xf32> to vector<1x32xf32>
      %c2_152 = arith.constant 2 : index
      %c704_153 = arith.constant 704 : index
      %201 = vector.load %arg10[%c2_152, %c704_153] : memref<8x896xf32, #tpu.memory_space<vmem>>, vector<1x32xf32>
      tpu.vector_store %arg10[%c2_152, %c704_153], %200 {strides = array<i32>} : memref<8x896xf32, #tpu.memory_space<vmem>>, vector<1x32xf32>,
      %202 = vector.extract_strided_slice %55 {offsets = [93, 0], sizes = [1, 32], strides = [1, 1]} : vector<100x32xf32> to vector<1x32xf32>
      %c2_154 = arith.constant 2 : index
      %c736_155 = arith.constant 736 : index
      %203 = vector.load %arg10[%c2_154, %c736_155] : memref<8x896xf32, #tpu.memory_space<vmem>>, vector<1x32xf32>
      tpu.vector_store %arg10[%c2_154, %c736_155], %202 {strides = array<i32>} : memref<8x896xf32, #tpu.memory_space<vmem>>, vector<1x32xf32>,
      %204 = vector.extract_strided_slice %55 {offsets = [94, 0], sizes = [1, 32], strides = [1, 1]} : vector<100x32xf32> to vector<1x32xf32>
      %c2_156 = arith.constant 2 : index
      %c768_157 = arith.constant 768 : index
      %205 = vector.load %arg10[%c2_156, %c768_157] : memref<8x896xf32, #tpu.memory_space<vmem>>, vector<1x32xf32>
      tpu.vector_store %arg10[%c2_156, %c768_157], %204 {strides = array<i32>} : memref<8x896xf32, #tpu.memory_space<vmem>>, vector<1x32xf32>,
      %206 = vector.extract_strided_slice %55 {offsets = [55, 0], sizes = [1, 32], strides = [1, 1]} : vector<100x32xf32> to vector<1x32xf32>
      %c3 = arith.constant 3 : index
      %c0_158 = arith.constant 0 : index
      %207 = vector.load %arg10[%c3, %c0_158] : memref<8x896xf32, #tpu.memory_space<vmem>>, vector<1x32xf32>
      tpu.vector_store %arg10[%c3, %c0_158], %206 {strides = array<i32>} : memref<8x896xf32, #tpu.memory_space<vmem>>, vector<1x32xf32>,
      %208 = vector.extract_strided_slice %55 {offsets = [56, 0], sizes = [1, 32], strides = [1, 1]} : vector<100x32xf32> to vector<1x32xf32>
      %c3_159 = arith.constant 3 : index
      %c32_160 = arith.constant 32 : index
      %209 = vector.load %arg10[%c3_159, %c32_160] : memref<8x896xf32, #tpu.memory_space<vmem>>, vector<1x32xf32>
      tpu.vector_store %arg10[%c3_159, %c32_160], %208 {strides = array<i32>} : memref<8x896xf32, #tpu.memory_space<vmem>>, vector<1x32xf32>,
      %210 = vector.extract_strided_slice %55 {offsets = [57, 0], sizes = [1, 32], strides = [1, 1]} : vector<100x32xf32> to vector<1x32xf32>
      %c3_161 = arith.constant 3 : index
      %c64_162 = arith.constant 64 : index
      %211 = vector.load %arg10[%c3_161, %c64_162] : memref<8x896xf32, #tpu.memory_space<vmem>>, vector<1x32xf32>
      tpu.vector_store %arg10[%c3_161, %c64_162], %210 {strides = array<i32>} : memref<8x896xf32, #tpu.memory_space<vmem>>, vector<1x32xf32>,
      %212 = vector.extract_strided_slice %55 {offsets = [58, 0], sizes = [1, 32], strides = [1, 1]} : vector<100x32xf32> to vector<1x32xf32>
      %c3_163 = arith.constant 3 : index
      %c96_164 = arith.constant 96 : index
      %213 = vector.load %arg10[%c3_163, %c96_164] : memref<8x896xf32, #tpu.memory_space<vmem>>, vector<1x32xf32>
      tpu.vector_store %arg10[%c3_163, %c96_164], %212 {strides = array<i32>} : memref<8x896xf32, #tpu.memory_space<vmem>>, vector<1x32xf32>,
      %214 = vector.extract_strided_slice %55 {offsets = [59, 0], sizes = [1, 32], strides = [1, 1]} : vector<100x32xf32> to vector<1x32xf32>
      %c3_165 = arith.constant 3 : index
      %c128_166 = arith.constant 128 : index
      %215 = vector.load %arg10[%c3_165, %c128_166] : memref<8x896xf32, #tpu.memory_space<vmem>>, vector<1x32xf32>
      tpu.vector_store %arg10[%c3_165, %c128_166], %214 {strides = array<i32>} : memref<8x896xf32, #tpu.memory_space<vmem>>, vector<1x32xf32>,
      %216 = vector.extract_strided_slice %55 {offsets = [65, 0], sizes = [1, 32], strides = [1, 1]} : vector<100x32xf32> to vector<1x32xf32>
      %c3_167 = arith.constant 3 : index
      %c160_168 = arith.constant 160 : index
      %217 = vector.load %arg10[%c3_167, %c160_168] : memref<8x896xf32, #tpu.memory_space<vmem>>, vector<1x32xf32>
      tpu.vector_store %arg10[%c3_167, %c160_168], %216 {strides = array<i32>} : memref<8x896xf32, #tpu.memory_space<vmem>>, vector<1x32xf32>,
      %218 = vector.extract_strided_slice %55 {offsets = [66, 0], sizes = [1, 32], strides = [1, 1]} : vector<100x32xf32> to vector<1x32xf32>
      %c3_169 = arith.constant 3 : index
      %c192_170 = arith.constant 192 : index
      %219 = vector.load %arg10[%c3_169, %c192_170] : memref<8x896xf32, #tpu.memory_space<vmem>>, vector<1x32xf32>
      tpu.vector_store %arg10[%c3_169, %c192_170], %218 {strides = array<i32>} : memref<8x896xf32, #tpu.memory_space<vmem>>, vector<1x32xf32>,
      %220 = vector.extract_strided_slice %55 {offsets = [67, 0], sizes = [1, 32], strides = [1, 1]} : vector<100x32xf32> to vector<1x32xf32>
      %c3_171 = arith.constant 3 : index
      %c224_172 = arith.constant 224 : index
      %221 = vector.load %arg10[%c3_171, %c224_172] : memref<8x896xf32, #tpu.memory_space<vmem>>, vector<1x32xf32>
      tpu.vector_store %arg10[%c3_171, %c224_172], %220 {strides = array<i32>} : memref<8x896xf32, #tpu.memory_space<vmem>>, vector<1x32xf32>,
      %222 = vector.extract_strided_slice %55 {offsets = [68, 0], sizes = [1, 32], strides = [1, 1]} : vector<100x32xf32> to vector<1x32xf32>
      %c3_173 = arith.constant 3 : index
      %c256_174 = arith.constant 256 : index
      %223 = vector.load %arg10[%c3_173, %c256_174] : memref<8x896xf32, #tpu.memory_space<vmem>>, vector<1x32xf32>
      tpu.vector_store %arg10[%c3_173, %c256_174], %222 {strides = array<i32>} : memref<8x896xf32, #tpu.memory_space<vmem>>, vector<1x32xf32>,
      %224 = vector.extract_strided_slice %55 {offsets = [69, 0], sizes = [1, 32], strides = [1, 1]} : vector<100x32xf32> to vector<1x32xf32>
      %c3_175 = arith.constant 3 : index
      %c288_176 = arith.constant 288 : index
      %225 = vector.load %arg10[%c3_175, %c288_176] : memref<8x896xf32, #tpu.memory_space<vmem>>, vector<1x32xf32>
      tpu.vector_store %arg10[%c3_175, %c288_176], %224 {strides = array<i32>} : memref<8x896xf32, #tpu.memory_space<vmem>>, vector<1x32xf32>,
      %226 = vector.extract_strided_slice %55 {offsets = [75, 0], sizes = [1, 32], strides = [1, 1]} : vector<100x32xf32> to vector<1x32xf32>
      %c3_177 = arith.constant 3 : index
      %c320_178 = arith.constant 320 : index
      %227 = vector.load %arg10[%c3_177, %c320_178] : memref<8x896xf32, #tpu.memory_space<vmem>>, vector<1x32xf32>
      tpu.vector_store %arg10[%c3_177, %c320_178], %226 {strides = array<i32>} : memref<8x896xf32, #tpu.memory_space<vmem>>, vector<1x32xf32>,
      %228 = vector.extract_strided_slice %55 {offsets = [76, 0], sizes = [1, 32], strides = [1, 1]} : vector<100x32xf32> to vector<1x32xf32>
      %c3_179 = arith.constant 3 : index
      %c352_180 = arith.constant 352 : index
      %229 = vector.load %arg10[%c3_179, %c352_180] : memref<8x896xf32, #tpu.memory_space<vmem>>, vector<1x32xf32>
      tpu.vector_store %arg10[%c3_179, %c352_180], %228 {strides = array<i32>} : memref<8x896xf32, #tpu.memory_space<vmem>>, vector<1x32xf32>,
      %230 = vector.extract_strided_slice %55 {offsets = [77, 0], sizes = [1, 32], strides = [1, 1]} : vector<100x32xf32> to vector<1x32xf32>
      %c3_181 = arith.constant 3 : index
      %c384_182 = arith.constant 384 : index
      %231 = vector.load %arg10[%c3_181, %c384_182] : memref<8x896xf32, #tpu.memory_space<vmem>>, vector<1x32xf32>
      tpu.vector_store %arg10[%c3_181, %c384_182], %230 {strides = array<i32>} : memref<8x896xf32, #tpu.memory_space<vmem>>, vector<1x32xf32>,
      %232 = vector.extract_strided_slice %55 {offsets = [78, 0], sizes = [1, 32], strides = [1, 1]} : vector<100x32xf32> to vector<1x32xf32>
      %c3_183 = arith.constant 3 : index
      %c416_184 = arith.constant 416 : index
      %233 = vector.load %arg10[%c3_183, %c416_184] : memref<8x896xf32, #tpu.memory_space<vmem>>, vector<1x32xf32>
      tpu.vector_store %arg10[%c3_183, %c416_184], %232 {strides = array<i32>} : memref<8x896xf32, #tpu.memory_space<vmem>>, vector<1x32xf32>,
      %234 = vector.extract_strided_slice %55 {offsets = [79, 0], sizes = [1, 32], strides = [1, 1]} : vector<100x32xf32> to vector<1x32xf32>
      %c3_185 = arith.constant 3 : index
      %c448_186 = arith.constant 448 : index
      %235 = vector.load %arg10[%c3_185, %c448_186] : memref<8x896xf32, #tpu.memory_space<vmem>>, vector<1x32xf32>
      tpu.vector_store %arg10[%c3_185, %c448_186], %234 {strides = array<i32>} : memref<8x896xf32, #tpu.memory_space<vmem>>, vector<1x32xf32>,
      %236 = vector.extract_strided_slice %55 {offsets = [85, 0], sizes = [1, 32], strides = [1, 1]} : vector<100x32xf32> to vector<1x32xf32>
      %c3_187 = arith.constant 3 : index
      %c480_188 = arith.constant 480 : index
      %237 = vector.load %arg10[%c3_187, %c480_188] : memref<8x896xf32, #tpu.memory_space<vmem>>, vector<1x32xf32>
      tpu.vector_store %arg10[%c3_187, %c480_188], %236 {strides = array<i32>} : memref<8x896xf32, #tpu.memory_space<vmem>>, vector<1x32xf32>,
      %238 = vector.extract_strided_slice %55 {offsets = [86, 0], sizes = [1, 32], strides = [1, 1]} : vector<100x32xf32> to vector<1x32xf32>
      %c3_189 = arith.constant 3 : index
      %c512_190 = arith.constant 512 : index
      %239 = vector.load %arg10[%c3_189, %c512_190] : memref<8x896xf32, #tpu.memory_space<vmem>>, vector<1x32xf32>
      tpu.vector_store %arg10[%c3_189, %c512_190], %238 {strides = array<i32>} : memref<8x896xf32, #tpu.memory_space<vmem>>, vector<1x32xf32>,
      %240 = vector.extract_strided_slice %55 {offsets = [87, 0], sizes = [1, 32], strides = [1, 1]} : vector<100x32xf32> to vector<1x32xf32>
      %c3_191 = arith.constant 3 : index
      %c544_192 = arith.constant 544 : index
      %241 = vector.load %arg10[%c3_191, %c544_192] : memref<8x896xf32, #tpu.memory_space<vmem>>, vector<1x32xf32>
      tpu.vector_store %arg10[%c3_191, %c544_192], %240 {strides = array<i32>} : memref<8x896xf32, #tpu.memory_space<vmem>>, vector<1x32xf32>,
      %242 = vector.extract_strided_slice %55 {offsets = [88, 0], sizes = [1, 32], strides = [1, 1]} : vector<100x32xf32> to vector<1x32xf32>
      %c3_193 = arith.constant 3 : index
      %c576_194 = arith.constant 576 : index
      %243 = vector.load %arg10[%c3_193, %c576_194] : memref<8x896xf32, #tpu.memory_space<vmem>>, vector<1x32xf32>
      tpu.vector_store %arg10[%c3_193, %c576_194], %242 {strides = array<i32>} : memref<8x896xf32, #tpu.memory_space<vmem>>, vector<1x32xf32>,
      %244 = vector.extract_strided_slice %55 {offsets = [89, 0], sizes = [1, 32], strides = [1, 1]} : vector<100x32xf32> to vector<1x32xf32>
      %c3_195 = arith.constant 3 : index
      %c608_196 = arith.constant 608 : index
      %245 = vector.load %arg10[%c3_195, %c608_196] : memref<8x896xf32, #tpu.memory_space<vmem>>, vector<1x32xf32>
      tpu.vector_store %arg10[%c3_195, %c608_196], %244 {strides = array<i32>} : memref<8x896xf32, #tpu.memory_space<vmem>>, vector<1x32xf32>,
      %246 = vector.extract_strided_slice %55 {offsets = [95, 0], sizes = [1, 32], strides = [1, 1]} : vector<100x32xf32> to vector<1x32xf32>
      %c3_197 = arith.constant 3 : index
      %c640_198 = arith.constant 640 : index
      %247 = vector.load %arg10[%c3_197, %c640_198] : memref<8x896xf32, #tpu.memory_space<vmem>>, vector<1x32xf32>
      tpu.vector_store %arg10[%c3_197, %c640_198], %246 {strides = array<i32>} : memref<8x896xf32, #tpu.memory_space<vmem>>, vector<1x32xf32>,
      %248 = vector.extract_strided_slice %55 {offsets = [96, 0], sizes = [1, 32], strides = [1, 1]} : vector<100x32xf32> to vector<1x32xf32>
      %c3_199 = arith.constant 3 : index
      %c672_200 = arith.constant 672 : index
      %249 = vector.load %arg10[%c3_199, %c672_200] : memref<8x896xf32, #tpu.memory_space<vmem>>, vector<1x32xf32>
      tpu.vector_store %arg10[%c3_199, %c672_200], %248 {strides = array<i32>} : memref<8x896xf32, #tpu.memory_space<vmem>>, vector<1x32xf32>,
      %250 = vector.extract_strided_slice %55 {offsets = [97, 0], sizes = [1, 32], strides = [1, 1]} : vector<100x32xf32> to vector<1x32xf32>
      %c3_201 = arith.constant 3 : index
      %c704_202 = arith.constant 704 : index
      %251 = vector.load %arg10[%c3_201, %c704_202] : memref<8x896xf32, #tpu.memory_space<vmem>>, vector<1x32xf32>
      tpu.vector_store %arg10[%c3_201, %c704_202], %250 {strides = array<i32>} : memref<8x896xf32, #tpu.memory_space<vmem>>, vector<1x32xf32>,
      %252 = vector.extract_strided_slice %55 {offsets = [98, 0], sizes = [1, 32], strides = [1, 1]} : vector<100x32xf32> to vector<1x32xf32>
      %c3_203 = arith.constant 3 : index
      %c736_204 = arith.constant 736 : index
      %253 = vector.load %arg10[%c3_203, %c736_204] : memref<8x896xf32, #tpu.memory_space<vmem>>, vector<1x32xf32>
      tpu.vector_store %arg10[%c3_203, %c736_204], %252 {strides = array<i32>} : memref<8x896xf32, #tpu.memory_space<vmem>>, vector<1x32xf32>,
      %254 = vector.extract_strided_slice %55 {offsets = [99, 0], sizes = [1, 32], strides = [1, 1]} : vector<100x32xf32> to vector<1x32xf32>
      %c3_205 = arith.constant 3 : index
      %c768_206 = arith.constant 768 : index
      %255 = vector.load %arg10[%c3_205, %c768_206] : memref<8x896xf32, #tpu.memory_space<vmem>>, vector<1x32xf32>
      tpu.vector_store %arg10[%c3_205, %c768_206], %254 {strides = array<i32>} : memref<8x896xf32, #tpu.memory_space<vmem>>, vector<1x32xf32>,
      %c1_207 = arith.constant 1 : index
      %c0_208 = arith.constant 0 : index
      %c0_209 = arith.constant 0 : index
      %256 = vector.load %arg9[%c1_207, %c0_208, %c0_209] : memref<2x100x32xf32, #tpu.memory_space<vmem>>, vector<1x100x32xf32>
      %257 = vector.shape_cast %256 : vector<1x100x32xf32> to vector<100x32xf32>
      %258 = vector.broadcast %39 : vector<1x32xf32> to vector<100x32xf32>
      %259 = arith.mulf %257, %258 : vector<100x32xf32>
      %260 = vector.broadcast %42 : vector<1x32xf32> to vector<100x32xf32>
      %261 = arith.addf %259, %260 : vector<100x32xf32>
      %cst_210 = arith.constant 0.000000e+00 : f32
      %262 = vector.broadcast %cst_210 : f32 to vector<100x32xf32>
      %263 = arith.cmpf ogt, %261, %262 : vector<100x32xf32>
      %cst_211 = arith.constant 0.00999999977 : f32
      %264 = vector.broadcast %cst_211 : f32 to vector<100x32xf32>
      %265 = arith.mulf %264, %261 : vector<100x32xf32>
      %266 = arith.select %263, %261, %265 : vector<100x32xi1>, vector<100x32xf32>
      %267 = vector.extract_strided_slice %266 {offsets = [0, 0], sizes = [1, 32], strides = [1, 1]} : vector<100x32xf32> to vector<1x32xf32>
      %c4 = arith.constant 4 : index
      %c0_212 = arith.constant 0 : index
      %268 = vector.load %arg10[%c4, %c0_212] : memref<8x896xf32, #tpu.memory_space<vmem>>, vector<1x32xf32>
      tpu.vector_store %arg10[%c4, %c0_212], %267 {strides = array<i32>} : memref<8x896xf32, #tpu.memory_space<vmem>>, vector<1x32xf32>,
      %269 = vector.extract_strided_slice %266 {offsets = [1, 0], sizes = [1, 32], strides = [1, 1]} : vector<100x32xf32> to vector<1x32xf32>
      %c4_213 = arith.constant 4 : index
      %c32_214 = arith.constant 32 : index
      %270 = vector.load %arg10[%c4_213, %c32_214] : memref<8x896xf32, #tpu.memory_space<vmem>>, vector<1x32xf32>
      tpu.vector_store %arg10[%c4_213, %c32_214], %269 {strides = array<i32>} : memref<8x896xf32, #tpu.memory_space<vmem>>, vector<1x32xf32>,
      %271 = vector.extract_strided_slice %266 {offsets = [2, 0], sizes = [1, 32], strides = [1, 1]} : vector<100x32xf32> to vector<1x32xf32>
      %c4_215 = arith.constant 4 : index
      %c64_216 = arith.constant 64 : index
      %272 = vector.load %arg10[%c4_215, %c64_216] : memref<8x896xf32, #tpu.memory_space<vmem>>, vector<1x32xf32>
      tpu.vector_store %arg10[%c4_215, %c64_216], %271 {strides = array<i32>} : memref<8x896xf32, #tpu.memory_space<vmem>>, vector<1x32xf32>,
      %273 = vector.extract_strided_slice %266 {offsets = [3, 0], sizes = [1, 32], strides = [1, 1]} : vector<100x32xf32> to vector<1x32xf32>
      %c4_217 = arith.constant 4 : index
      %c96_218 = arith.constant 96 : index
      %274 = vector.load %arg10[%c4_217, %c96_218] : memref<8x896xf32, #tpu.memory_space<vmem>>, vector<1x32xf32>
      tpu.vector_store %arg10[%c4_217, %c96_218], %273 {strides = array<i32>} : memref<8x896xf32, #tpu.memory_space<vmem>>, vector<1x32xf32>,
      %275 = vector.extract_strided_slice %266 {offsets = [4, 0], sizes = [1, 32], strides = [1, 1]} : vector<100x32xf32> to vector<1x32xf32>
      %c4_219 = arith.constant 4 : index
      %c128_220 = arith.constant 128 : index
      %276 = vector.load %arg10[%c4_219, %c128_220] : memref<8x896xf32, #tpu.memory_space<vmem>>, vector<1x32xf32>
      tpu.vector_store %arg10[%c4_219, %c128_220], %275 {strides = array<i32>} : memref<8x896xf32, #tpu.memory_space<vmem>>, vector<1x32xf32>,
      %277 = vector.extract_strided_slice %266 {offsets = [10, 0], sizes = [1, 32], strides = [1, 1]} : vector<100x32xf32> to vector<1x32xf32>
      %c4_221 = arith.constant 4 : index
      %c160_222 = arith.constant 160 : index
      %278 = vector.load %arg10[%c4_221, %c160_222] : memref<8x896xf32, #tpu.memory_space<vmem>>, vector<1x32xf32>
      tpu.vector_store %arg10[%c4_221, %c160_222], %277 {strides = array<i32>} : memref<8x896xf32, #tpu.memory_space<vmem>>, vector<1x32xf32>,
      %279 = vector.extract_strided_slice %266 {offsets = [11, 0], sizes = [1, 32], strides = [1, 1]} : vector<100x32xf32> to vector<1x32xf32>
      %c4_223 = arith.constant 4 : index
      %c192_224 = arith.constant 192 : index
      %280 = vector.load %arg10[%c4_223, %c192_224] : memref<8x896xf32, #tpu.memory_space<vmem>>, vector<1x32xf32>
      tpu.vector_store %arg10[%c4_223, %c192_224], %279 {strides = array<i32>} : memref<8x896xf32, #tpu.memory_space<vmem>>, vector<1x32xf32>,
      %281 = vector.extract_strided_slice %266 {offsets = [12, 0], sizes = [1, 32], strides = [1, 1]} : vector<100x32xf32> to vector<1x32xf32>
      %c4_225 = arith.constant 4 : index
      %c224_226 = arith.constant 224 : index
      %282 = vector.load %arg10[%c4_225, %c224_226] : memref<8x896xf32, #tpu.memory_space<vmem>>, vector<1x32xf32>
      tpu.vector_store %arg10[%c4_225, %c224_226], %281 {strides = array<i32>} : memref<8x896xf32, #tpu.memory_space<vmem>>, vector<1x32xf32>,
      %283 = vector.extract_strided_slice %266 {offsets = [13, 0], sizes = [1, 32], strides = [1, 1]} : vector<100x32xf32> to vector<1x32xf32>
      %c4_227 = arith.constant 4 : index
      %c256_228 = arith.constant 256 : index
      %284 = vector.load %arg10[%c4_227, %c256_228] : memref<8x896xf32, #tpu.memory_space<vmem>>, vector<1x32xf32>
      tpu.vector_store %arg10[%c4_227, %c256_228], %283 {strides = array<i32>} : memref<8x896xf32, #tpu.memory_space<vmem>>, vector<1x32xf32>,
      %285 = vector.extract_strided_slice %266 {offsets = [14, 0], sizes = [1, 32], strides = [1, 1]} : vector<100x32xf32> to vector<1x32xf32>
      %c4_229 = arith.constant 4 : index
      %c288_230 = arith.constant 288 : index
      %286 = vector.load %arg10[%c4_229, %c288_230] : memref<8x896xf32, #tpu.memory_space<vmem>>, vector<1x32xf32>
      tpu.vector_store %arg10[%c4_229, %c288_230], %285 {strides = array<i32>} : memref<8x896xf32, #tpu.memory_space<vmem>>, vector<1x32xf32>,
      %287 = vector.extract_strided_slice %266 {offsets = [20, 0], sizes = [1, 32], strides = [1, 1]} : vector<100x32xf32> to vector<1x32xf32>
      %c4_231 = arith.constant 4 : index
      %c320_232 = arith.constant 320 : index
      %288 = vector.load %arg10[%c4_231, %c320_232] : memref<8x896xf32, #tpu.memory_space<vmem>>, vector<1x32xf32>
      tpu.vector_store %arg10[%c4_231, %c320_232], %287 {strides = array<i32>} : memref<8x896xf32, #tpu.memory_space<vmem>>, vector<1x32xf32>,
      %289 = vector.extract_strided_slice %266 {offsets = [21, 0], sizes = [1, 32], strides = [1, 1]} : vector<100x32xf32> to vector<1x32xf32>
      %c4_233 = arith.constant 4 : index
      %c352_234 = arith.constant 352 : index
      %290 = vector.load %arg10[%c4_233, %c352_234] : memref<8x896xf32, #tpu.memory_space<vmem>>, vector<1x32xf32>
      tpu.vector_store %arg10[%c4_233, %c352_234], %289 {strides = array<i32>} : memref<8x896xf32, #tpu.memory_space<vmem>>, vector<1x32xf32>,
      %291 = vector.extract_strided_slice %266 {offsets = [22, 0], sizes = [1, 32], strides = [1, 1]} : vector<100x32xf32> to vector<1x32xf32>
      %c4_235 = arith.constant 4 : index
      %c384_236 = arith.constant 384 : index
      %292 = vector.load %arg10[%c4_235, %c384_236] : memref<8x896xf32, #tpu.memory_space<vmem>>, vector<1x32xf32>
      tpu.vector_store %arg10[%c4_235, %c384_236], %291 {strides = array<i32>} : memref<8x896xf32, #tpu.memory_space<vmem>>, vector<1x32xf32>,
      %293 = vector.extract_strided_slice %266 {offsets = [23, 0], sizes = [1, 32], strides = [1, 1]} : vector<100x32xf32> to vector<1x32xf32>
      %c4_237 = arith.constant 4 : index
      %c416_238 = arith.constant 416 : index
      %294 = vector.load %arg10[%c4_237, %c416_238] : memref<8x896xf32, #tpu.memory_space<vmem>>, vector<1x32xf32>
      tpu.vector_store %arg10[%c4_237, %c416_238], %293 {strides = array<i32>} : memref<8x896xf32, #tpu.memory_space<vmem>>, vector<1x32xf32>,
      %295 = vector.extract_strided_slice %266 {offsets = [24, 0], sizes = [1, 32], strides = [1, 1]} : vector<100x32xf32> to vector<1x32xf32>
      %c4_239 = arith.constant 4 : index
      %c448_240 = arith.constant 448 : index
      %296 = vector.load %arg10[%c4_239, %c448_240] : memref<8x896xf32, #tpu.memory_space<vmem>>, vector<1x32xf32>
      tpu.vector_store %arg10[%c4_239, %c448_240], %295 {strides = array<i32>} : memref<8x896xf32, #tpu.memory_space<vmem>>, vector<1x32xf32>,
      %297 = vector.extract_strided_slice %266 {offsets = [30, 0], sizes = [1, 32], strides = [1, 1]} : vector<100x32xf32> to vector<1x32xf32>
      %c4_241 = arith.constant 4 : index
      %c480_242 = arith.constant 480 : index
      %298 = vector.load %arg10[%c4_241, %c480_242] : memref<8x896xf32, #tpu.memory_space<vmem>>, vector<1x32xf32>
      tpu.vector_store %arg10[%c4_241, %c480_242], %297 {strides = array<i32>} : memref<8x896xf32, #tpu.memory_space<vmem>>, vector<1x32xf32>,
      %299 = vector.extract_strided_slice %266 {offsets = [31, 0], sizes = [1, 32], strides = [1, 1]} : vector<100x32xf32> to vector<1x32xf32>
      %c4_243 = arith.constant 4 : index
      %c512_244 = arith.constant 512 : index
      %300 = vector.load %arg10[%c4_243, %c512_244] : memref<8x896xf32, #tpu.memory_space<vmem>>, vector<1x32xf32>
      tpu.vector_store %arg10[%c4_243, %c512_244], %299 {strides = array<i32>} : memref<8x896xf32, #tpu.memory_space<vmem>>, vector<1x32xf32>,
      %301 = vector.extract_strided_slice %266 {offsets = [32, 0], sizes = [1, 32], strides = [1, 1]} : vector<100x32xf32> to vector<1x32xf32>
      %c4_245 = arith.constant 4 : index
      %c544_246 = arith.constant 544 : index
      %302 = vector.load %arg10[%c4_245, %c544_246] : memref<8x896xf32, #tpu.memory_space<vmem>>, vector<1x32xf32>
      tpu.vector_store %arg10[%c4_245, %c544_246], %301 {strides = array<i32>} : memref<8x896xf32, #tpu.memory_space<vmem>>, vector<1x32xf32>,
      %303 = vector.extract_strided_slice %266 {offsets = [33, 0], sizes = [1, 32], strides = [1, 1]} : vector<100x32xf32> to vector<1x32xf32>
      %c4_247 = arith.constant 4 : index
      %c576_248 = arith.constant 576 : index
      %304 = vector.load %arg10[%c4_247, %c576_248] : memref<8x896xf32, #tpu.memory_space<vmem>>, vector<1x32xf32>
      tpu.vector_store %arg10[%c4_247, %c576_248], %303 {strides = array<i32>} : memref<8x896xf32, #tpu.memory_space<vmem>>, vector<1x32xf32>,
      %305 = vector.extract_strided_slice %266 {offsets = [34, 0], sizes = [1, 32], strides = [1, 1]} : vector<100x32xf32> to vector<1x32xf32>
      %c4_249 = arith.constant 4 : index
      %c608_250 = arith.constant 608 : index
      %306 = vector.load %arg10[%c4_249, %c608_250] : memref<8x896xf32, #tpu.memory_space<vmem>>, vector<1x32xf32>
      tpu.vector_store %arg10[%c4_249, %c608_250], %305 {strides = array<i32>} : memref<8x896xf32, #tpu.memory_space<vmem>>, vector<1x32xf32>,
      %307 = vector.extract_strided_slice %266 {offsets = [40, 0], sizes = [1, 32], strides = [1, 1]} : vector<100x32xf32> to vector<1x32xf32>
      %c4_251 = arith.constant 4 : index
      %c640_252 = arith.constant 640 : index
      %308 = vector.load %arg10[%c4_251, %c640_252] : memref<8x896xf32, #tpu.memory_space<vmem>>, vector<1x32xf32>
      tpu.vector_store %arg10[%c4_251, %c640_252], %307 {strides = array<i32>} : memref<8x896xf32, #tpu.memory_space<vmem>>, vector<1x32xf32>,
      %309 = vector.extract_strided_slice %266 {offsets = [41, 0], sizes = [1, 32], strides = [1, 1]} : vector<100x32xf32> to vector<1x32xf32>
      %c4_253 = arith.constant 4 : index
      %c672_254 = arith.constant 672 : index
      %310 = vector.load %arg10[%c4_253, %c672_254] : memref<8x896xf32, #tpu.memory_space<vmem>>, vector<1x32xf32>
      tpu.vector_store %arg10[%c4_253, %c672_254], %309 {strides = array<i32>} : memref<8x896xf32, #tpu.memory_space<vmem>>, vector<1x32xf32>,
      %311 = vector.extract_strided_slice %266 {offsets = [42, 0], sizes = [1, 32], strides = [1, 1]} : vector<100x32xf32> to vector<1x32xf32>
      %c4_255 = arith.constant 4 : index
      %c704_256 = arith.constant 704 : index
      %312 = vector.load %arg10[%c4_255, %c704_256] : memref<8x896xf32, #tpu.memory_space<vmem>>, vector<1x32xf32>
      tpu.vector_store %arg10[%c4_255, %c704_256], %311 {strides = array<i32>} : memref<8x896xf32, #tpu.memory_space<vmem>>, vector<1x32xf32>,
      %313 = vector.extract_strided_slice %266 {offsets = [43, 0], sizes = [1, 32], strides = [1, 1]} : vector<100x32xf32> to vector<1x32xf32>
      %c4_257 = arith.constant 4 : index
      %c736_258 = arith.constant 736 : index
      %314 = vector.load %arg10[%c4_257, %c736_258] : memref<8x896xf32, #tpu.memory_space<vmem>>, vector<1x32xf32>
      tpu.vector_store %arg10[%c4_257, %c736_258], %313 {strides = array<i32>} : memref<8x896xf32, #tpu.memory_space<vmem>>, vector<1x32xf32>,
      %315 = vector.extract_strided_slice %266 {offsets = [44, 0], sizes = [1, 32], strides = [1, 1]} : vector<100x32xf32> to vector<1x32xf32>
      %c4_259 = arith.constant 4 : index
      %c768_260 = arith.constant 768 : index
      %316 = vector.load %arg10[%c4_259, %c768_260] : memref<8x896xf32, #tpu.memory_space<vmem>>, vector<1x32xf32>
      tpu.vector_store %arg10[%c4_259, %c768_260], %315 {strides = array<i32>} : memref<8x896xf32, #tpu.memory_space<vmem>>, vector<1x32xf32>,
      %317 = vector.extract_strided_slice %266 {offsets = [5, 0], sizes = [1, 32], strides = [1, 1]} : vector<100x32xf32> to vector<1x32xf32>
      %c5 = arith.constant 5 : index
      %c0_261 = arith.constant 0 : index
      %318 = vector.load %arg10[%c5, %c0_261] : memref<8x896xf32, #tpu.memory_space<vmem>>, vector<1x32xf32>
      tpu.vector_store %arg10[%c5, %c0_261], %317 {strides = array<i32>} : memref<8x896xf32, #tpu.memory_space<vmem>>, vector<1x32xf32>,
      %319 = vector.extract_strided_slice %266 {offsets = [6, 0], sizes = [1, 32], strides = [1, 1]} : vector<100x32xf32> to vector<1x32xf32>
      %c5_262 = arith.constant 5 : index
      %c32_263 = arith.constant 32 : index
      %320 = vector.load %arg10[%c5_262, %c32_263] : memref<8x896xf32, #tpu.memory_space<vmem>>, vector<1x32xf32>
      tpu.vector_store %arg10[%c5_262, %c32_263], %319 {strides = array<i32>} : memref<8x896xf32, #tpu.memory_space<vmem>>, vector<1x32xf32>,
      %321 = vector.extract_strided_slice %266 {offsets = [7, 0], sizes = [1, 32], strides = [1, 1]} : vector<100x32xf32> to vector<1x32xf32>
      %c5_264 = arith.constant 5 : index
      %c64_265 = arith.constant 64 : index
      %322 = vector.load %arg10[%c5_264, %c64_265] : memref<8x896xf32, #tpu.memory_space<vmem>>, vector<1x32xf32>
      tpu.vector_store %arg10[%c5_264, %c64_265], %321 {strides = array<i32>} : memref<8x896xf32, #tpu.memory_space<vmem>>, vector<1x32xf32>,
      %323 = vector.extract_strided_slice %266 {offsets = [8, 0], sizes = [1, 32], strides = [1, 1]} : vector<100x32xf32> to vector<1x32xf32>
      %c5_266 = arith.constant 5 : index
      %c96_267 = arith.constant 96 : index
      %324 = vector.load %arg10[%c5_266, %c96_267] : memref<8x896xf32, #tpu.memory_space<vmem>>, vector<1x32xf32>
      tpu.vector_store %arg10[%c5_266, %c96_267], %323 {strides = array<i32>} : memref<8x896xf32, #tpu.memory_space<vmem>>, vector<1x32xf32>,
      %325 = vector.extract_strided_slice %266 {offsets = [9, 0], sizes = [1, 32], strides = [1, 1]} : vector<100x32xf32> to vector<1x32xf32>
      %c5_268 = arith.constant 5 : index
      %c128_269 = arith.constant 128 : index
      %326 = vector.load %arg10[%c5_268, %c128_269] : memref<8x896xf32, #tpu.memory_space<vmem>>, vector<1x32xf32>
      tpu.vector_store %arg10[%c5_268, %c128_269], %325 {strides = array<i32>} : memref<8x896xf32, #tpu.memory_space<vmem>>, vector<1x32xf32>,
      %327 = vector.extract_strided_slice %266 {offsets = [15, 0], sizes = [1, 32], strides = [1, 1]} : vector<100x32xf32> to vector<1x32xf32>
      %c5_270 = arith.constant 5 : index
      %c160_271 = arith.constant 160 : index
      %328 = vector.load %arg10[%c5_270, %c160_271] : memref<8x896xf32, #tpu.memory_space<vmem>>, vector<1x32xf32>
      tpu.vector_store %arg10[%c5_270, %c160_271], %327 {strides = array<i32>} : memref<8x896xf32, #tpu.memory_space<vmem>>, vector<1x32xf32>,
      %329 = vector.extract_strided_slice %266 {offsets = [16, 0], sizes = [1, 32], strides = [1, 1]} : vector<100x32xf32> to vector<1x32xf32>
      %c5_272 = arith.constant 5 : index
      %c192_273 = arith.constant 192 : index
      %330 = vector.load %arg10[%c5_272, %c192_273] : memref<8x896xf32, #tpu.memory_space<vmem>>, vector<1x32xf32>
      tpu.vector_store %arg10[%c5_272, %c192_273], %329 {strides = array<i32>} : memref<8x896xf32, #tpu.memory_space<vmem>>, vector<1x32xf32>,
      %331 = vector.extract_strided_slice %266 {offsets = [17, 0], sizes = [1, 32], strides = [1, 1]} : vector<100x32xf32> to vector<1x32xf32>
      %c5_274 = arith.constant 5 : index
      %c224_275 = arith.constant 224 : index
      %332 = vector.load %arg10[%c5_274, %c224_275] : memref<8x896xf32, #tpu.memory_space<vmem>>, vector<1x32xf32>
      tpu.vector_store %arg10[%c5_274, %c224_275], %331 {strides = array<i32>} : memref<8x896xf32, #tpu.memory_space<vmem>>, vector<1x32xf32>,
      %333 = vector.extract_strided_slice %266 {offsets = [18, 0], sizes = [1, 32], strides = [1, 1]} : vector<100x32xf32> to vector<1x32xf32>
      %c5_276 = arith.constant 5 : index
      %c256_277 = arith.constant 256 : index
      %334 = vector.load %arg10[%c5_276, %c256_277] : memref<8x896xf32, #tpu.memory_space<vmem>>, vector<1x32xf32>
      tpu.vector_store %arg10[%c5_276, %c256_277], %333 {strides = array<i32>} : memref<8x896xf32, #tpu.memory_space<vmem>>, vector<1x32xf32>,
      %335 = vector.extract_strided_slice %266 {offsets = [19, 0], sizes = [1, 32], strides = [1, 1]} : vector<100x32xf32> to vector<1x32xf32>
      %c5_278 = arith.constant 5 : index
      %c288_279 = arith.constant 288 : index
      %336 = vector.load %arg10[%c5_278, %c288_279] : memref<8x896xf32, #tpu.memory_space<vmem>>, vector<1x32xf32>
      tpu.vector_store %arg10[%c5_278, %c288_279], %335 {strides = array<i32>} : memref<8x896xf32, #tpu.memory_space<vmem>>, vector<1x32xf32>,
      %337 = vector.extract_strided_slice %266 {offsets = [25, 0], sizes = [1, 32], strides = [1, 1]} : vector<100x32xf32> to vector<1x32xf32>
      %c5_280 = arith.constant 5 : index
      %c320_281 = arith.constant 320 : index
      %338 = vector.load %arg10[%c5_280, %c320_281] : memref<8x896xf32, #tpu.memory_space<vmem>>, vector<1x32xf32>
      tpu.vector_store %arg10[%c5_280, %c320_281], %337 {strides = array<i32>} : memref<8x896xf32, #tpu.memory_space<vmem>>, vector<1x32xf32>,
      %339 = vector.extract_strided_slice %266 {offsets = [26, 0], sizes = [1, 32], strides = [1, 1]} : vector<100x32xf32> to vector<1x32xf32>
      %c5_282 = arith.constant 5 : index
      %c352_283 = arith.constant 352 : index
      %340 = vector.load %arg10[%c5_282, %c352_283] : memref<8x896xf32, #tpu.memory_space<vmem>>, vector<1x32xf32>
      tpu.vector_store %arg10[%c5_282, %c352_283], %339 {strides = array<i32>} : memref<8x896xf32, #tpu.memory_space<vmem>>, vector<1x32xf32>,
      %341 = vector.extract_strided_slice %266 {offsets = [27, 0], sizes = [1, 32], strides = [1, 1]} : vector<100x32xf32> to vector<1x32xf32>
      %c5_284 = arith.constant 5 : index
      %c384_285 = arith.constant 384 : index
      %342 = vector.load %arg10[%c5_284, %c384_285] : memref<8x896xf32, #tpu.memory_space<vmem>>, vector<1x32xf32>
      tpu.vector_store %arg10[%c5_284, %c384_285], %341 {strides = array<i32>} : memref<8x896xf32, #tpu.memory_space<vmem>>, vector<1x32xf32>,
      %343 = vector.extract_strided_slice %266 {offsets = [28, 0], sizes = [1, 32], strides = [1, 1]} : vector<100x32xf32> to vector<1x32xf32>
      %c5_286 = arith.constant 5 : index
      %c416_287 = arith.constant 416 : index
      %344 = vector.load %arg10[%c5_286, %c416_287] : memref<8x896xf32, #tpu.memory_space<vmem>>, vector<1x32xf32>
      tpu.vector_store %arg10[%c5_286, %c416_287], %343 {strides = array<i32>} : memref<8x896xf32, #tpu.memory_space<vmem>>, vector<1x32xf32>,
      %345 = vector.extract_strided_slice %266 {offsets = [29, 0], sizes = [1, 32], strides = [1, 1]} : vector<100x32xf32> to vector<1x32xf32>
      %c5_288 = arith.constant 5 : index
      %c448_289 = arith.constant 448 : index
      %346 = vector.load %arg10[%c5_288, %c448_289] : memref<8x896xf32, #tpu.memory_space<vmem>>, vector<1x32xf32>
      tpu.vector_store %arg10[%c5_288, %c448_289], %345 {strides = array<i32>} : memref<8x896xf32, #tpu.memory_space<vmem>>, vector<1x32xf32>,
      %347 = vector.extract_strided_slice %266 {offsets = [35, 0], sizes = [1, 32], strides = [1, 1]} : vector<100x32xf32> to vector<1x32xf32>
      %c5_290 = arith.constant 5 : index
      %c480_291 = arith.constant 480 : index
      %348 = vector.load %arg10[%c5_290, %c480_291] : memref<8x896xf32, #tpu.memory_space<vmem>>, vector<1x32xf32>
      tpu.vector_store %arg10[%c5_290, %c480_291], %347 {strides = array<i32>} : memref<8x896xf32, #tpu.memory_space<vmem>>, vector<1x32xf32>,
      %349 = vector.extract_strided_slice %266 {offsets = [36, 0], sizes = [1, 32], strides = [1, 1]} : vector<100x32xf32> to vector<1x32xf32>
      %c5_292 = arith.constant 5 : index
      %c512_293 = arith.constant 512 : index
      %350 = vector.load %arg10[%c5_292, %c512_293] : memref<8x896xf32, #tpu.memory_space<vmem>>, vector<1x32xf32>
      tpu.vector_store %arg10[%c5_292, %c512_293], %349 {strides = array<i32>} : memref<8x896xf32, #tpu.memory_space<vmem>>, vector<1x32xf32>,
      %351 = vector.extract_strided_slice %266 {offsets = [37, 0], sizes = [1, 32], strides = [1, 1]} : vector<100x32xf32> to vector<1x32xf32>
      %c5_294 = arith.constant 5 : index
      %c544_295 = arith.constant 544 : index
      %352 = vector.load %arg10[%c5_294, %c544_295] : memref<8x896xf32, #tpu.memory_space<vmem>>, vector<1x32xf32>
      tpu.vector_store %arg10[%c5_294, %c544_295], %351 {strides = array<i32>} : memref<8x896xf32, #tpu.memory_space<vmem>>, vector<1x32xf32>,
      %353 = vector.extract_strided_slice %266 {offsets = [38, 0], sizes = [1, 32], strides = [1, 1]} : vector<100x32xf32> to vector<1x32xf32>
      %c5_296 = arith.constant 5 : index
      %c576_297 = arith.constant 576 : index
      %354 = vector.load %arg10[%c5_296, %c576_297] : memref<8x896xf32, #tpu.memory_space<vmem>>, vector<1x32xf32>
      tpu.vector_store %arg10[%c5_296, %c576_297], %353 {strides = array<i32>} : memref<8x896xf32, #tpu.memory_space<vmem>>, vector<1x32xf32>,
      %355 = vector.extract_strided_slice %266 {offsets = [39, 0], sizes = [1, 32], strides = [1, 1]} : vector<100x32xf32> to vector<1x32xf32>
      %c5_298 = arith.constant 5 : index
      %c608_299 = arith.constant 608 : index
      %356 = vector.load %arg10[%c5_298, %c608_299] : memref<8x896xf32, #tpu.memory_space<vmem>>, vector<1x32xf32>
      tpu.vector_store %arg10[%c5_298, %c608_299], %355 {strides = array<i32>} : memref<8x896xf32, #tpu.memory_space<vmem>>, vector<1x32xf32>,
      %357 = vector.extract_strided_slice %266 {offsets = [45, 0], sizes = [1, 32], strides = [1, 1]} : vector<100x32xf32> to vector<1x32xf32>
      %c5_300 = arith.constant 5 : index
      %c640_301 = arith.constant 640 : index
      %358 = vector.load %arg10[%c5_300, %c640_301] : memref<8x896xf32, #tpu.memory_space<vmem>>, vector<1x32xf32>
      tpu.vector_store %arg10[%c5_300, %c640_301], %357 {strides = array<i32>} : memref<8x896xf32, #tpu.memory_space<vmem>>, vector<1x32xf32>,
      %359 = vector.extract_strided_slice %266 {offsets = [46, 0], sizes = [1, 32], strides = [1, 1]} : vector<100x32xf32> to vector<1x32xf32>
      %c5_302 = arith.constant 5 : index
      %c672_303 = arith.constant 672 : index
      %360 = vector.load %arg10[%c5_302, %c672_303] : memref<8x896xf32, #tpu.memory_space<vmem>>, vector<1x32xf32>
      tpu.vector_store %arg10[%c5_302, %c672_303], %359 {strides = array<i32>} : memref<8x896xf32, #tpu.memory_space<vmem>>, vector<1x32xf32>,
      %361 = vector.extract_strided_slice %266 {offsets = [47, 0], sizes = [1, 32], strides = [1, 1]} : vector<100x32xf32> to vector<1x32xf32>
      %c5_304 = arith.constant 5 : index
      %c704_305 = arith.constant 704 : index
      %362 = vector.load %arg10[%c5_304, %c704_305] : memref<8x896xf32, #tpu.memory_space<vmem>>, vector<1x32xf32>
      tpu.vector_store %arg10[%c5_304, %c704_305], %361 {strides = array<i32>} : memref<8x896xf32, #tpu.memory_space<vmem>>, vector<1x32xf32>,
      %363 = vector.extract_strided_slice %266 {offsets = [48, 0], sizes = [1, 32], strides = [1, 1]} : vector<100x32xf32> to vector<1x32xf32>
      %c5_306 = arith.constant 5 : index
      %c736_307 = arith.constant 736 : index
      %364 = vector.load %arg10[%c5_306, %c736_307] : memref<8x896xf32, #tpu.memory_space<vmem>>, vector<1x32xf32>
      tpu.vector_store %arg10[%c5_306, %c736_307], %363 {strides = array<i32>} : memref<8x896xf32, #tpu.memory_space<vmem>>, vector<1x32xf32>,
      %365 = vector.extract_strided_slice %266 {offsets = [49, 0], sizes = [1, 32], strides = [1, 1]} : vector<100x32xf32> to vector<1x32xf32>
      %c5_308 = arith.constant 5 : index
      %c768_309 = arith.constant 768 : index
      %366 = vector.load %arg10[%c5_308, %c768_309] : memref<8x896xf32, #tpu.memory_space<vmem>>, vector<1x32xf32>
      tpu.vector_store %arg10[%c5_308, %c768_309], %365 {strides = array<i32>} : memref<8x896xf32, #tpu.memory_space<vmem>>, vector<1x32xf32>,
      %367 = vector.extract_strided_slice %266 {offsets = [50, 0], sizes = [1, 32], strides = [1, 1]} : vector<100x32xf32> to vector<1x32xf32>
      %c6 = arith.constant 6 : index
      %c0_310 = arith.constant 0 : index
      %368 = vector.load %arg10[%c6, %c0_310] : memref<8x896xf32, #tpu.memory_space<vmem>>, vector<1x32xf32>
      tpu.vector_store %arg10[%c6, %c0_310], %367 {strides = array<i32>} : memref<8x896xf32, #tpu.memory_space<vmem>>, vector<1x32xf32>,
      %369 = vector.extract_strided_slice %266 {offsets = [51, 0], sizes = [1, 32], strides = [1, 1]} : vector<100x32xf32> to vector<1x32xf32>
      %c6_311 = arith.constant 6 : index
      %c32_312 = arith.constant 32 : index
      %370 = vector.load %arg10[%c6_311, %c32_312] : memref<8x896xf32, #tpu.memory_space<vmem>>, vector<1x32xf32>
      tpu.vector_store %arg10[%c6_311, %c32_312], %369 {strides = array<i32>} : memref<8x896xf32, #tpu.memory_space<vmem>>, vector<1x32xf32>,
      %371 = vector.extract_strided_slice %266 {offsets = [52, 0], sizes = [1, 32], strides = [1, 1]} : vector<100x32xf32> to vector<1x32xf32>
      %c6_313 = arith.constant 6 : index
      %c64_314 = arith.constant 64 : index
      %372 = vector.load %arg10[%c6_313, %c64_314] : memref<8x896xf32, #tpu.memory_space<vmem>>, vector<1x32xf32>
      tpu.vector_store %arg10[%c6_313, %c64_314], %371 {strides = array<i32>} : memref<8x896xf32, #tpu.memory_space<vmem>>, vector<1x32xf32>,
      %373 = vector.extract_strided_slice %266 {offsets = [53, 0], sizes = [1, 32], strides = [1, 1]} : vector<100x32xf32> to vector<1x32xf32>
      %c6_315 = arith.constant 6 : index
      %c96_316 = arith.constant 96 : index
      %374 = vector.load %arg10[%c6_315, %c96_316] : memref<8x896xf32, #tpu.memory_space<vmem>>, vector<1x32xf32>
      tpu.vector_store %arg10[%c6_315, %c96_316], %373 {strides = array<i32>} : memref<8x896xf32, #tpu.memory_space<vmem>>, vector<1x32xf32>,
      %375 = vector.extract_strided_slice %266 {offsets = [54, 0], sizes = [1, 32], strides = [1, 1]} : vector<100x32xf32> to vector<1x32xf32>
      %c6_317 = arith.constant 6 : index
      %c128_318 = arith.constant 128 : index
      %376 = vector.load %arg10[%c6_317, %c128_318] : memref<8x896xf32, #tpu.memory_space<vmem>>, vector<1x32xf32>
      tpu.vector_store %arg10[%c6_317, %c128_318], %375 {strides = array<i32>} : memref<8x896xf32, #tpu.memory_space<vmem>>, vector<1x32xf32>,
      %377 = vector.extract_strided_slice %266 {offsets = [60, 0], sizes = [1, 32], strides = [1, 1]} : vector<100x32xf32> to vector<1x32xf32>
      %c6_319 = arith.constant 6 : index
      %c160_320 = arith.constant 160 : index
      %378 = vector.load %arg10[%c6_319, %c160_320] : memref<8x896xf32, #tpu.memory_space<vmem>>, vector<1x32xf32>
      tpu.vector_store %arg10[%c6_319, %c160_320], %377 {strides = array<i32>} : memref<8x896xf32, #tpu.memory_space<vmem>>, vector<1x32xf32>,
      %379 = vector.extract_strided_slice %266 {offsets = [61, 0], sizes = [1, 32], strides = [1, 1]} : vector<100x32xf32> to vector<1x32xf32>
      %c6_321 = arith.constant 6 : index
      %c192_322 = arith.constant 192 : index
      %380 = vector.load %arg10[%c6_321, %c192_322] : memref<8x896xf32, #tpu.memory_space<vmem>>, vector<1x32xf32>
      tpu.vector_store %arg10[%c6_321, %c192_322], %379 {strides = array<i32>} : memref<8x896xf32, #tpu.memory_space<vmem>>, vector<1x32xf32>,
      %381 = vector.extract_strided_slice %266 {offsets = [62, 0], sizes = [1, 32], strides = [1, 1]} : vector<100x32xf32> to vector<1x32xf32>
      %c6_323 = arith.constant 6 : index
      %c224_324 = arith.constant 224 : index
      %382 = vector.load %arg10[%c6_323, %c224_324] : memref<8x896xf32, #tpu.memory_space<vmem>>, vector<1x32xf32>
      tpu.vector_store %arg10[%c6_323, %c224_324], %381 {strides = array<i32>} : memref<8x896xf32, #tpu.memory_space<vmem>>, vector<1x32xf32>,
      %383 = vector.extract_strided_slice %266 {offsets = [63, 0], sizes = [1, 32], strides = [1, 1]} : vector<100x32xf32> to vector<1x32xf32>
      %c6_325 = arith.constant 6 : index
      %c256_326 = arith.constant 256 : index
      %384 = vector.load %arg10[%c6_325, %c256_326] : memref<8x896xf32, #tpu.memory_space<vmem>>, vector<1x32xf32>
      tpu.vector_store %arg10[%c6_325, %c256_326], %383 {strides = array<i32>} : memref<8x896xf32, #tpu.memory_space<vmem>>, vector<1x32xf32>,
      %385 = vector.extract_strided_slice %266 {offsets = [64, 0], sizes = [1, 32], strides = [1, 1]} : vector<100x32xf32> to vector<1x32xf32>
      %c6_327 = arith.constant 6 : index
      %c288_328 = arith.constant 288 : index
      %386 = vector.load %arg10[%c6_327, %c288_328] : memref<8x896xf32, #tpu.memory_space<vmem>>, vector<1x32xf32>
      tpu.vector_store %arg10[%c6_327, %c288_328], %385 {strides = array<i32>} : memref<8x896xf32, #tpu.memory_space<vmem>>, vector<1x32xf32>,
      %387 = vector.extract_strided_slice %266 {offsets = [70, 0], sizes = [1, 32], strides = [1, 1]} : vector<100x32xf32> to vector<1x32xf32>
      %c6_329 = arith.constant 6 : index
      %c320_330 = arith.constant 320 : index
      %388 = vector.load %arg10[%c6_329, %c320_330] : memref<8x896xf32, #tpu.memory_space<vmem>>, vector<1x32xf32>
      tpu.vector_store %arg10[%c6_329, %c320_330], %387 {strides = array<i32>} : memref<8x896xf32, #tpu.memory_space<vmem>>, vector<1x32xf32>,
      %389 = vector.extract_strided_slice %266 {offsets = [71, 0], sizes = [1, 32], strides = [1, 1]} : vector<100x32xf32> to vector<1x32xf32>
      %c6_331 = arith.constant 6 : index
      %c352_332 = arith.constant 352 : index
      %390 = vector.load %arg10[%c6_331, %c352_332] : memref<8x896xf32, #tpu.memory_space<vmem>>, vector<1x32xf32>
      tpu.vector_store %arg10[%c6_331, %c352_332], %389 {strides = array<i32>} : memref<8x896xf32, #tpu.memory_space<vmem>>, vector<1x32xf32>,
      %391 = vector.extract_strided_slice %266 {offsets = [72, 0], sizes = [1, 32], strides = [1, 1]} : vector<100x32xf32> to vector<1x32xf32>
      %c6_333 = arith.constant 6 : index
      %c384_334 = arith.constant 384 : index
      %392 = vector.load %arg10[%c6_333, %c384_334] : memref<8x896xf32, #tpu.memory_space<vmem>>, vector<1x32xf32>
      tpu.vector_store %arg10[%c6_333, %c384_334], %391 {strides = array<i32>} : memref<8x896xf32, #tpu.memory_space<vmem>>, vector<1x32xf32>,
      %393 = vector.extract_strided_slice %266 {offsets = [73, 0], sizes = [1, 32], strides = [1, 1]} : vector<100x32xf32> to vector<1x32xf32>
      %c6_335 = arith.constant 6 : index
      %c416_336 = arith.constant 416 : index
      %394 = vector.load %arg10[%c6_335, %c416_336] : memref<8x896xf32, #tpu.memory_space<vmem>>, vector<1x32xf32>
      tpu.vector_store %arg10[%c6_335, %c416_336], %393 {strides = array<i32>} : memref<8x896xf32, #tpu.memory_space<vmem>>, vector<1x32xf32>,
      %395 = vector.extract_strided_slice %266 {offsets = [74, 0], sizes = [1, 32], strides = [1, 1]} : vector<100x32xf32> to vector<1x32xf32>
      %c6_337 = arith.constant 6 : index
      %c448_338 = arith.constant 448 : index
      %396 = vector.load %arg10[%c6_337, %c448_338] : memref<8x896xf32, #tpu.memory_space<vmem>>, vector<1x32xf32>
      tpu.vector_store %arg10[%c6_337, %c448_338], %395 {strides = array<i32>} : memref<8x896xf32, #tpu.memory_space<vmem>>, vector<1x32xf32>,
      %397 = vector.extract_strided_slice %266 {offsets = [80, 0], sizes = [1, 32], strides = [1, 1]} : vector<100x32xf32> to vector<1x32xf32>
      %c6_339 = arith.constant 6 : index
      %c480_340 = arith.constant 480 : index
      %398 = vector.load %arg10[%c6_339, %c480_340] : memref<8x896xf32, #tpu.memory_space<vmem>>, vector<1x32xf32>
      tpu.vector_store %arg10[%c6_339, %c480_340], %397 {strides = array<i32>} : memref<8x896xf32, #tpu.memory_space<vmem>>, vector<1x32xf32>,
      %399 = vector.extract_strided_slice %266 {offsets = [81, 0], sizes = [1, 32], strides = [1, 1]} : vector<100x32xf32> to vector<1x32xf32>
      %c6_341 = arith.constant 6 : index
      %c512_342 = arith.constant 512 : index
      %400 = vector.load %arg10[%c6_341, %c512_342] : memref<8x896xf32, #tpu.memory_space<vmem>>, vector<1x32xf32>
      tpu.vector_store %arg10[%c6_341, %c512_342], %399 {strides = array<i32>} : memref<8x896xf32, #tpu.memory_space<vmem>>, vector<1x32xf32>,
      %401 = vector.extract_strided_slice %266 {offsets = [82, 0], sizes = [1, 32], strides = [1, 1]} : vector<100x32xf32> to vector<1x32xf32>
      %c6_343 = arith.constant 6 : index
      %c544_344 = arith.constant 544 : index
      %402 = vector.load %arg10[%c6_343, %c544_344] : memref<8x896xf32, #tpu.memory_space<vmem>>, vector<1x32xf32>
      tpu.vector_store %arg10[%c6_343, %c544_344], %401 {strides = array<i32>} : memref<8x896xf32, #tpu.memory_space<vmem>>, vector<1x32xf32>,
      %403 = vector.extract_strided_slice %266 {offsets = [83, 0], sizes = [1, 32], strides = [1, 1]} : vector<100x32xf32> to vector<1x32xf32>
      %c6_345 = arith.constant 6 : index
      %c576_346 = arith.constant 576 : index
      %404 = vector.load %arg10[%c6_345, %c576_346] : memref<8x896xf32, #tpu.memory_space<vmem>>, vector<1x32xf32>
      tpu.vector_store %arg10[%c6_345, %c576_346], %403 {strides = array<i32>} : memref<8x896xf32, #tpu.memory_space<vmem>>, vector<1x32xf32>,
      %405 = vector.extract_strided_slice %266 {offsets = [84, 0], sizes = [1, 32], strides = [1, 1]} : vector<100x32xf32> to vector<1x32xf32>
      %c6_347 = arith.constant 6 : index
      %c608_348 = arith.constant 608 : index
      %406 = vector.load %arg10[%c6_347, %c608_348] : memref<8x896xf32, #tpu.memory_space<vmem>>, vector<1x32xf32>
      tpu.vector_store %arg10[%c6_347, %c608_348], %405 {strides = array<i32>} : memref<8x896xf32, #tpu.memory_space<vmem>>, vector<1x32xf32>,
      %407 = vector.extract_strided_slice %266 {offsets = [90, 0], sizes = [1, 32], strides = [1, 1]} : vector<100x32xf32> to vector<1x32xf32>
      %c6_349 = arith.constant 6 : index
      %c640_350 = arith.constant 640 : index
      %408 = vector.load %arg10[%c6_349, %c640_350] : memref<8x896xf32, #tpu.memory_space<vmem>>, vector<1x32xf32>
      tpu.vector_store %arg10[%c6_349, %c640_350], %407 {strides = array<i32>} : memref<8x896xf32, #tpu.memory_space<vmem>>, vector<1x32xf32>,
      %409 = vector.extract_strided_slice %266 {offsets = [91, 0], sizes = [1, 32], strides = [1, 1]} : vector<100x32xf32> to vector<1x32xf32>
      %c6_351 = arith.constant 6 : index
      %c672_352 = arith.constant 672 : index
      %410 = vector.load %arg10[%c6_351, %c672_352] : memref<8x896xf32, #tpu.memory_space<vmem>>, vector<1x32xf32>
      tpu.vector_store %arg10[%c6_351, %c672_352], %409 {strides = array<i32>} : memref<8x896xf32, #tpu.memory_space<vmem>>, vector<1x32xf32>,
      %411 = vector.extract_strided_slice %266 {offsets = [92, 0], sizes = [1, 32], strides = [1, 1]} : vector<100x32xf32> to vector<1x32xf32>
      %c6_353 = arith.constant 6 : index
      %c704_354 = arith.constant 704 : index
      %412 = vector.load %arg10[%c6_353, %c704_354] : memref<8x896xf32, #tpu.memory_space<vmem>>, vector<1x32xf32>
      tpu.vector_store %arg10[%c6_353, %c704_354], %411 {strides = array<i32>} : memref<8x896xf32, #tpu.memory_space<vmem>>, vector<1x32xf32>,
      %413 = vector.extract_strided_slice %266 {offsets = [93, 0], sizes = [1, 32], strides = [1, 1]} : vector<100x32xf32> to vector<1x32xf32>
      %c6_355 = arith.constant 6 : index
      %c736_356 = arith.constant 736 : index
      %414 = vector.load %arg10[%c6_355, %c736_356] : memref<8x896xf32, #tpu.memory_space<vmem>>, vector<1x32xf32>
      tpu.vector_store %arg10[%c6_355, %c736_356], %413 {strides = array<i32>} : memref<8x896xf32, #tpu.memory_space<vmem>>, vector<1x32xf32>,
      %415 = vector.extract_strided_slice %266 {offsets = [94, 0], sizes = [1, 32], strides = [1, 1]} : vector<100x32xf32> to vector<1x32xf32>
      %c6_357 = arith.constant 6 : index
      %c768_358 = arith.constant 768 : index
      %416 = vector.load %arg10[%c6_357, %c768_358] : memref<8x896xf32, #tpu.memory_space<vmem>>, vector<1x32xf32>
      tpu.vector_store %arg10[%c6_357, %c768_358], %415 {strides = array<i32>} : memref<8x896xf32, #tpu.memory_space<vmem>>, vector<1x32xf32>,
      %417 = vector.extract_strided_slice %266 {offsets = [55, 0], sizes = [1, 32], strides = [1, 1]} : vector<100x32xf32> to vector<1x32xf32>
      %c7 = arith.constant 7 : index
      %c0_359 = arith.constant 0 : index
      %418 = vector.load %arg10[%c7, %c0_359] : memref<8x896xf32, #tpu.memory_space<vmem>>, vector<1x32xf32>
      tpu.vector_store %arg10[%c7, %c0_359], %417 {strides = array<i32>} : memref<8x896xf32, #tpu.memory_space<vmem>>, vector<1x32xf32>,
      %419 = vector.extract_strided_slice %266 {offsets = [56, 0], sizes = [1, 32], strides = [1, 1]} : vector<100x32xf32> to vector<1x32xf32>
      %c7_360 = arith.constant 7 : index
      %c32_361 = arith.constant 32 : index
      %420 = vector.load %arg10[%c7_360, %c32_361] : memref<8x896xf32, #tpu.memory_space<vmem>>, vector<1x32xf32>
      tpu.vector_store %arg10[%c7_360, %c32_361], %419 {strides = array<i32>} : memref<8x896xf32, #tpu.memory_space<vmem>>, vector<1x32xf32>,
      %421 = vector.extract_strided_slice %266 {offsets = [57, 0], sizes = [1, 32], strides = [1, 1]} : vector<100x32xf32> to vector<1x32xf32>
      %c7_362 = arith.constant 7 : index
      %c64_363 = arith.constant 64 : index
      %422 = vector.load %arg10[%c7_362, %c64_363] : memref<8x896xf32, #tpu.memory_space<vmem>>, vector<1x32xf32>
      tpu.vector_store %arg10[%c7_362, %c64_363], %421 {strides = array<i32>} : memref<8x896xf32, #tpu.memory_space<vmem>>, vector<1x32xf32>,
      %423 = vector.extract_strided_slice %266 {offsets = [58, 0], sizes = [1, 32], strides = [1, 1]} : vector<100x32xf32> to vector<1x32xf32>
      %c7_364 = arith.constant 7 : index
      %c96_365 = arith.constant 96 : index
      %424 = vector.load %arg10[%c7_364, %c96_365] : memref<8x896xf32, #tpu.memory_space<vmem>>, vector<1x32xf32>
      tpu.vector_store %arg10[%c7_364, %c96_365], %423 {strides = array<i32>} : memref<8x896xf32, #tpu.memory_space<vmem>>, vector<1x32xf32>,
      %425 = vector.extract_strided_slice %266 {offsets = [59, 0], sizes = [1, 32], strides = [1, 1]} : vector<100x32xf32> to vector<1x32xf32>
      %c7_366 = arith.constant 7 : index
      %c128_367 = arith.constant 128 : index
      %426 = vector.load %arg10[%c7_366, %c128_367] : memref<8x896xf32, #tpu.memory_space<vmem>>, vector<1x32xf32>
      tpu.vector_store %arg10[%c7_366, %c128_367], %425 {strides = array<i32>} : memref<8x896xf32, #tpu.memory_space<vmem>>, vector<1x32xf32>,
      %427 = vector.extract_strided_slice %266 {offsets = [65, 0], sizes = [1, 32], strides = [1, 1]} : vector<100x32xf32> to vector<1x32xf32>
      %c7_368 = arith.constant 7 : index
      %c160_369 = arith.constant 160 : index
      %428 = vector.load %arg10[%c7_368, %c160_369] : memref<8x896xf32, #tpu.memory_space<vmem>>, vector<1x32xf32>
      tpu.vector_store %arg10[%c7_368, %c160_369], %427 {strides = array<i32>} : memref<8x896xf32, #tpu.memory_space<vmem>>, vector<1x32xf32>,
      %429 = vector.extract_strided_slice %266 {offsets = [66, 0], sizes = [1, 32], strides = [1, 1]} : vector<100x32xf32> to vector<1x32xf32>
      %c7_370 = arith.constant 7 : index
      %c192_371 = arith.constant 192 : index
      %430 = vector.load %arg10[%c7_370, %c192_371] : memref<8x896xf32, #tpu.memory_space<vmem>>, vector<1x32xf32>
      tpu.vector_store %arg10[%c7_370, %c192_371], %429 {strides = array<i32>} : memref<8x896xf32, #tpu.memory_space<vmem>>, vector<1x32xf32>,
      %431 = vector.extract_strided_slice %266 {offsets = [67, 0], sizes = [1, 32], strides = [1, 1]} : vector<100x32xf32> to vector<1x32xf32>
      %c7_372 = arith.constant 7 : index
      %c224_373 = arith.constant 224 : index
      %432 = vector.load %arg10[%c7_372, %c224_373] : memref<8x896xf32, #tpu.memory_space<vmem>>, vector<1x32xf32>
      tpu.vector_store %arg10[%c7_372, %c224_373], %431 {strides = array<i32>} : memref<8x896xf32, #tpu.memory_space<vmem>>, vector<1x32xf32>,
      %433 = vector.extract_strided_slice %266 {offsets = [68, 0], sizes = [1, 32], strides = [1, 1]} : vector<100x32xf32> to vector<1x32xf32>
      %c7_374 = arith.constant 7 : index
      %c256_375 = arith.constant 256 : index
      %434 = vector.load %arg10[%c7_374, %c256_375] : memref<8x896xf32, #tpu.memory_space<vmem>>, vector<1x32xf32>
      tpu.vector_store %arg10[%c7_374, %c256_375], %433 {strides = array<i32>} : memref<8x896xf32, #tpu.memory_space<vmem>>, vector<1x32xf32>,
      %435 = vector.extract_strided_slice %266 {offsets = [69, 0], sizes = [1, 32], strides = [1, 1]} : vector<100x32xf32> to vector<1x32xf32>
      %c7_376 = arith.constant 7 : index
      %c288_377 = arith.constant 288 : index
      %436 = vector.load %arg10[%c7_376, %c288_377] : memref<8x896xf32, #tpu.memory_space<vmem>>, vector<1x32xf32>
      tpu.vector_store %arg10[%c7_376, %c288_377], %435 {strides = array<i32>} : memref<8x896xf32, #tpu.memory_space<vmem>>, vector<1x32xf32>,
      %437 = vector.extract_strided_slice %266 {offsets = [75, 0], sizes = [1, 32], strides = [1, 1]} : vector<100x32xf32> to vector<1x32xf32>
      %c7_378 = arith.constant 7 : index
      %c320_379 = arith.constant 320 : index
      %438 = vector.load %arg10[%c7_378, %c320_379] : memref<8x896xf32, #tpu.memory_space<vmem>>, vector<1x32xf32>
      tpu.vector_store %arg10[%c7_378, %c320_379], %437 {strides = array<i32>} : memref<8x896xf32, #tpu.memory_space<vmem>>, vector<1x32xf32>,
      %439 = vector.extract_strided_slice %266 {offsets = [76, 0], sizes = [1, 32], strides = [1, 1]} : vector<100x32xf32> to vector<1x32xf32>
      %c7_380 = arith.constant 7 : index
      %c352_381 = arith.constant 352 : index
      %440 = vector.load %arg10[%c7_380, %c352_381] : memref<8x896xf32, #tpu.memory_space<vmem>>, vector<1x32xf32>
      tpu.vector_store %arg10[%c7_380, %c352_381], %439 {strides = array<i32>} : memref<8x896xf32, #tpu.memory_space<vmem>>, vector<1x32xf32>,
      %441 = vector.extract_strided_slice %266 {offsets = [77, 0], sizes = [1, 32], strides = [1, 1]} : vector<100x32xf32> to vector<1x32xf32>
      %c7_382 = arith.constant 7 : index
      %c384_383 = arith.constant 384 : index
      %442 = vector.load %arg10[%c7_382, %c384_383] : memref<8x896xf32, #tpu.memory_space<vmem>>, vector<1x32xf32>
      tpu.vector_store %arg10[%c7_382, %c384_383], %441 {strides = array<i32>} : memref<8x896xf32, #tpu.memory_space<vmem>>, vector<1x32xf32>,
      %443 = vector.extract_strided_slice %266 {offsets = [78, 0], sizes = [1, 32], strides = [1, 1]} : vector<100x32xf32> to vector<1x32xf32>
      %c7_384 = arith.constant 7 : index
      %c416_385 = arith.constant 416 : index
      %444 = vector.load %arg10[%c7_384, %c416_385] : memref<8x896xf32, #tpu.memory_space<vmem>>, vector<1x32xf32>
      tpu.vector_store %arg10[%c7_384, %c416_385], %443 {strides = array<i32>} : memref<8x896xf32, #tpu.memory_space<vmem>>, vector<1x32xf32>,
      %445 = vector.extract_strided_slice %266 {offsets = [79, 0], sizes = [1, 32], strides = [1, 1]} : vector<100x32xf32> to vector<1x32xf32>
      %c7_386 = arith.constant 7 : index
      %c448_387 = arith.constant 448 : index
      %446 = vector.load %arg10[%c7_386, %c448_387] : memref<8x896xf32, #tpu.memory_space<vmem>>, vector<1x32xf32>
      tpu.vector_store %arg10[%c7_386, %c448_387], %445 {strides = array<i32>} : memref<8x896xf32, #tpu.memory_space<vmem>>, vector<1x32xf32>,
      %447 = vector.extract_strided_slice %266 {offsets = [85, 0], sizes = [1, 32], strides = [1, 1]} : vector<100x32xf32> to vector<1x32xf32>
      %c7_388 = arith.constant 7 : index
      %c480_389 = arith.constant 480 : index
      %448 = vector.load %arg10[%c7_388, %c480_389] : memref<8x896xf32, #tpu.memory_space<vmem>>, vector<1x32xf32>
      tpu.vector_store %arg10[%c7_388, %c480_389], %447 {strides = array<i32>} : memref<8x896xf32, #tpu.memory_space<vmem>>, vector<1x32xf32>,
      %449 = vector.extract_strided_slice %266 {offsets = [86, 0], sizes = [1, 32], strides = [1, 1]} : vector<100x32xf32> to vector<1x32xf32>
      %c7_390 = arith.constant 7 : index
      %c512_391 = arith.constant 512 : index
      %450 = vector.load %arg10[%c7_390, %c512_391] : memref<8x896xf32, #tpu.memory_space<vmem>>, vector<1x32xf32>
      tpu.vector_store %arg10[%c7_390, %c512_391], %449 {strides = array<i32>} : memref<8x896xf32, #tpu.memory_space<vmem>>, vector<1x32xf32>,
      %451 = vector.extract_strided_slice %266 {offsets = [87, 0], sizes = [1, 32], strides = [1, 1]} : vector<100x32xf32> to vector<1x32xf32>
      %c7_392 = arith.constant 7 : index
      %c544_393 = arith.constant 544 : index
      %452 = vector.load %arg10[%c7_392, %c544_393] : memref<8x896xf32, #tpu.memory_space<vmem>>, vector<1x32xf32>
      tpu.vector_store %arg10[%c7_392, %c544_393], %451 {strides = array<i32>} : memref<8x896xf32, #tpu.memory_space<vmem>>, vector<1x32xf32>,
      %453 = vector.extract_strided_slice %266 {offsets = [88, 0], sizes = [1, 32], strides = [1, 1]} : vector<100x32xf32> to vector<1x32xf32>
      %c7_394 = arith.constant 7 : index
      %c576_395 = arith.constant 576 : index
      %454 = vector.load %arg10[%c7_394, %c576_395] : memref<8x896xf32, #tpu.memory_space<vmem>>, vector<1x32xf32>
      tpu.vector_store %arg10[%c7_394, %c576_395], %453 {strides = array<i32>} : memref<8x896xf32, #tpu.memory_space<vmem>>, vector<1x32xf32>,
      %455 = vector.extract_strided_slice %266 {offsets = [89, 0], sizes = [1, 32], strides = [1, 1]} : vector<100x32xf32> to vector<1x32xf32>
      %c7_396 = arith.constant 7 : index
      %c608_397 = arith.constant 608 : index
      %456 = vector.load %arg10[%c7_396, %c608_397] : memref<8x896xf32, #tpu.memory_space<vmem>>, vector<1x32xf32>
      tpu.vector_store %arg10[%c7_396, %c608_397], %455 {strides = array<i32>} : memref<8x896xf32, #tpu.memory_space<vmem>>, vector<1x32xf32>,
      %457 = vector.extract_strided_slice %266 {offsets = [95, 0], sizes = [1, 32], strides = [1, 1]} : vector<100x32xf32> to vector<1x32xf32>
      %c7_398 = arith.constant 7 : index
      %c640_399 = arith.constant 640 : index
      %458 = vector.load %arg10[%c7_398, %c640_399] : memref<8x896xf32, #tpu.memory_space<vmem>>, vector<1x32xf32>
      tpu.vector_store %arg10[%c7_398, %c640_399], %457 {strides = array<i32>} : memref<8x896xf32, #tpu.memory_space<vmem>>, vector<1x32xf32>,
      %459 = vector.extract_strided_slice %266 {offsets = [96, 0], sizes = [1, 32], strides = [1, 1]} : vector<100x32xf32> to vector<1x32xf32>
      %c7_400 = arith.constant 7 : index
      %c672_401 = arith.constant 672 : index
      %460 = vector.load %arg10[%c7_400, %c672_401] : memref<8x896xf32, #tpu.memory_space<vmem>>, vector<1x32xf32>
      tpu.vector_store %arg10[%c7_400, %c672_401], %459 {strides = array<i32>} : memref<8x896xf32, #tpu.memory_space<vmem>>, vector<1x32xf32>,
      %461 = vector.extract_strided_slice %266 {offsets = [97, 0], sizes = [1, 32], strides = [1, 1]} : vector<100x32xf32> to vector<1x32xf32>
      %c7_402 = arith.constant 7 : index
      %c704_403 = arith.constant 704 : index
      %462 = vector.load %arg10[%c7_402, %c704_403] : memref<8x896xf32, #tpu.memory_space<vmem>>, vector<1x32xf32>
      tpu.vector_store %arg10[%c7_402, %c704_403], %461 {strides = array<i32>} : memref<8x896xf32, #tpu.memory_space<vmem>>, vector<1x32xf32>,
      %463 = vector.extract_strided_slice %266 {offsets = [98, 0], sizes = [1, 32], strides = [1, 1]} : vector<100x32xf32> to vector<1x32xf32>
      %c7_404 = arith.constant 7 : index
      %c736_405 = arith.constant 736 : index
      %464 = vector.load %arg10[%c7_404, %c736_405] : memref<8x896xf32, #tpu.memory_space<vmem>>, vector<1x32xf32>
      tpu.vector_store %arg10[%c7_404, %c736_405], %463 {strides = array<i32>} : memref<8x896xf32, #tpu.memory_space<vmem>>, vector<1x32xf32>,
      %465 = vector.extract_strided_slice %266 {offsets = [99, 0], sizes = [1, 32], strides = [1, 1]} : vector<100x32xf32> to vector<1x32xf32>
      %c7_406 = arith.constant 7 : index
      %c768_407 = arith.constant 768 : index
      %466 = vector.load %arg10[%c7_406, %c768_407] : memref<8x896xf32, #tpu.memory_space<vmem>>, vector<1x32xf32>
      tpu.vector_store %arg10[%c7_406, %c768_407], %465 {strides = array<i32>} : memref<8x896xf32, #tpu.memory_space<vmem>>, vector<1x32xf32>,
      %c0_408 = arith.constant 0 : index
      %c0_409 = arith.constant 0 : index
      %467 = vector.load %arg10[%c0_408, %c0_409] : memref<8x896xf32, #tpu.memory_space<vmem>>, vector<8x896xf32>
      %468 = arith.truncf %467 : vector<8x896xf32> to vector<8x896xbf16>
      %c0_410 = arith.constant 0 : index
      %c0_411 = arith.constant 0 : index
      %469 = vector.load %arg6[%c0_410, %c0_411] : memref<896x128xbf16, #tpu.memory_space<vmem>>, vector<896x128xbf16>
      %cst_412 = arith.constant dense<0.000000e+00> : vector<8x128xf32>
      %470 = tpu.matmul %468, %469, %cst_412 {dimension_numbers = #tpu.dot_dimension_numbers<[1], [0], [0], [1], [0, 0, 1, 1], [], []>} : vector<8x896xbf16>, vector<896x128xbf16>, vector<8x128xf32> -> vector<8x128xf32>
      %c0_413 = arith.constant 0 : index
      %c0_414 = arith.constant 0 : index
      %471 = vector.load %arg7[%c0_413, %c0_414] : memref<1x128xf32, #tpu.memory_space<vmem>>, vector<1x128xf32>
      %472 = vector.broadcast %471 : vector<1x128xf32> to vector<8x128xf32>
      %473 = arith.addf %470, %472 : vector<8x128xf32>
      %cst_415 = arith.constant 5.000000e-01 : f32
      %474 = vector.broadcast %cst_415 : f32 to vector<8x128xf32>
      %475 = arith.mulf %474, %473 : vector<8x128xf32>
      %476 = math.tanh %475 : vector<8x128xf32>
      %cst_416 = arith.constant 1.000000e+00 : f32
      %477 = vector.broadcast %cst_416 : f32 to vector<8x128xf32>
      %478 = arith.addf %476, %477 : vector<8x128xf32>
      %cst_417 = arith.constant 5.000000e-01 : f32
      %479 = vector.broadcast %cst_417 : f32 to vector<8x128xf32>
      %480 = arith.mulf %479, %478 : vector<8x128xf32>
      %c0_418 = arith.constant 0 : index
      %c0_419 = arith.constant 0 : index
      %481 = vector.load %arg8[%c0_418, %c0_419] : memref<8x128xf32, #tpu.memory_space<vmem>>, vector<8x128xf32>
      tpu.vector_store %arg8[%c0_418, %c0_419], %480 {strides = array<i32>} : memref<8x128xf32, #tpu.memory_space<vmem>>, vector<8x128xf32>,
    } else {
    }
    return
  }
  func.func @transform_0(%arg0: i32) -> (i32, i32, i32) {
    %c0_i32 = arith.constant 0 : i32
    %c0_i32_0 = arith.constant 0 : i32
    %c0_i32_1 = arith.constant 0 : i32
    return %arg0, %c0_i32, %c0_i32_0 : i32, i32, i32
  }
  func.func @transform_1(%arg0: i32) -> (i32, i32) {
    %c0_i32 = arith.constant 0 : i32
    %c0_i32_0 = arith.constant 0 : i32
    %c0_i32_1 = arith.constant 0 : i32
    return %c0_i32, %c0_i32_0 : i32, i32
  }
  func.func @transform_2(%arg0: i32) -> (i32, i32) {
    %c0_i32 = arith.constant 0 : i32
    %c0_i32_0 = arith.constant 0 : i32
    %c0_i32_1 = arith.constant 0 : i32
    return %c0_i32, %c0_i32_0 : i32, i32
  }
  func.func @transform_3(%arg0: i32) -> (i32, i32) {
    %c0_i32 = arith.constant 0 : i32
    %c0_i32_0 = arith.constant 0 : i32
    %c0_i32_1 = arith.constant 0 : i32
    return %c0_i32, %c0_i32_0 : i32, i32
  }
  func.func @transform_4(%arg0: i32) -> (i32, i32) {
    %c0_i32 = arith.constant 0 : i32
    %c0_i32_0 = arith.constant 0 : i32
    %c0_i32_1 = arith.constant 0 : i32
    return %c0_i32, %c0_i32_0 : i32, i32
  }
  func.func @transform_5(%arg0: i32) -> (i32, i32) {
    %c0_i32 = arith.constant 0 : i32
    %c0_i32_0 = arith.constant 0 : i32
    %c0_i32_1 = arith.constant 0 : i32
    return %c0_i32, %c0_i32_0 : i32, i32
  }
  func.func @transform_6(%arg0: i32) -> (i32, i32) {
    %c0_i32 = arith.constant 0 : i32
    %c0_i32_0 = arith.constant 0 : i32
    %c0_i32_1 = arith.constant 0 : i32
    return %c0_i32, %c0_i32_0 : i32, i32
  }
  func.func @transform_7(%arg0: i32) -> (i32, i32) {
    %c0_i32 = arith.constant 0 : i32
    %c0_i32_0 = arith.constant 0 : i32
    %c0_i32_1 = arith.constant 0 : i32
    return %c0_i32, %c0_i32_0 : i32, i32
  }
}

</mosaic_0001>

<llo_original>
// kernel: encoder_cnn_medium.1
$region0: #{encoder_cnn_medium.1}
  #allocation0 [shape = 'u32[]', space=smem, size = 0x4, offset = 0x4, fixed_abs, tag = 'smem constant byte address 0x4 - core index']
  #allocation1 [shape = 'u32[144,128]{1,0:T(1,128)}', space=vmem, size = 0x12000, scoped, tag = 'internal scratch']
  #allocation2 [shape = 'f32[2,100,32]{2,1,0:T(8,128)}', space=vmem, size = 0x1a000, scoped, tag = 'scratch operand']
  #allocation3 [shape = 'f32[8,896]{1,0:T(8,128)}', space=vmem, size = 0x7000, scoped, tag = 'scratch operand']
  #allocation4 [shape = 'f32[1,32]{1,0:T(1,128)}', space=vmem, size = 0x200, scoped, tag = 'scratch operand']
  #allocation5 [shape = 'f32[1,32]{1,0:T(1,128)}', space=vmem, size = 0x200, scoped, tag = 'scratch operand']
  %s0 = inlined_call_operand.vmem [shape: bf16[2,100,256], index: 0, kind: input, shape index: {}]
  %s1 = inlined_call_operand.vmem [shape: bf16[256,32], index: 1, kind: input, shape index: {}]
  %s2 = inlined_call_operand.vmem [shape: f32[1,32], index: 2, kind: input, shape index: {}]
  %s3 = inlined_call_operand.vmem [shape: f32[1,32], index: 3, kind: input, shape index: {}]
  %s4 = inlined_call_operand.vmem [shape: f32[1,32], index: 4, kind: input, shape index: {}]
  %s5 = inlined_call_operand.vmem [shape: bf16[896,128], index: 5, kind: input, shape index: {}]
  %s6 = inlined_call_operand.vmem [shape: f32[1,128], index: 6, kind: input, shape index: {}]
  %s7 = inlined_call_operand.vmem [shape: f32[8,128], index: 7, kind: output, shape index: {}]
  %s8 = sld [smem:[#allocation0]]
  $region73: #{encoder_cnn_medium.1} parent=0
    _
  %s10 = ssub.s32 1, %s8
  %s11 = scalar_select 0, %s10, %s8
  loop: start=0, step=1, limit=4
  $region2: #{encoder_cnn_medium.1} parent=0 // loop_pre_header
    _
  $region3: #{encoder_cnn_medium.1} parent=0 // loop_header
    %s13 = sphi 0, %s17
    %p14 = scmp.ge.s32.totalorder %s13, 4
    %s23 = sphi 0, %s25
    %s26 = sphi 0, %s23
    %s27 = sphi 0, %s26
    %s43 = sphi 0, %s27
    %s47 = sphi 0, %s47
    %s49 = sphi 0, %s47
    %s50 = sphi 0, %s49
    %s64 = sphi 0, %s50
    %s68 = sphi 0, %s68
    %s70 = sphi 0, %s68
    %s71 = sphi 0, %s70
    %s85 = sphi 0, %s71
    %s89 = sphi 0, %s89
    %s91 = sphi 0, %s89
    %s92 = sphi 0, %s91
    %s106 = sphi 0, %s92
    %s110 = sphi 0, %s110
    %s112 = sphi 0, %s110
    %s113 = sphi 0, %s112
    %s127 = sphi 0, %s113
    %s131 = sphi 0, %s131
    %s133 = sphi 0, %s131
    %s134 = sphi 0, %s133
    %s148 = sphi 0, %s134
    %s152 = sphi 0, %s152
    %s154 = sphi 0, %s152
    %s155 = sphi 0, %s154
    %s169 = sphi 0, %s155
    %s173 = sphi 0, %s173
    %s175 = sphi 0, %s173
    %s176 = sphi 0, %s175
    %s190 = sphi 0, %s176
  $region4: #{encoder_cnn_medium.1} parent=0 // loop_header_branch
    %16 = sbr.rel (%p14) target = $region8
  $region5: #{encoder_cnn_medium.1} parent=0 // loop_body
    %s18 = ssub.s32 %s13, 1
    %s19 = ssub.s32 %s13, 2
    %s20 = sadd.s32 %s13, 1
    %s21 = ssub.s32 %s13, %s20
    %p22 = scmp.eq.s32.totalorder %s21, 0
    %s24 = sadd.s32 %s23, 1
    %s25 = scalar_select %p22, %s23, %s24
    %p28 = pneg %p22
    %p29 = scmp.eq.s32.totalorder %s13, 1
    %p30 = por %p28, %p29
    %p31 = scmp.ne.s32.totalorder %s23, %s26
    %p32 = scmp.eq.s32.totalorder %s13, 0
    %p33 = por %p31, %p32
    %p34 = scmp.ne.s32.totalorder %s23, %s26
    %p35 = scmp.eq.s32.totalorder %s18, 1
    %p36 = por %p34, %p35
    %p37 = scmp.ne.s32.totalorder %s26, %s27
    %p38 = scmp.eq.s32.totalorder %s18, 0
    %p39 = por %p37, %p38
    %p40 = scmp.ne.s32.totalorder %s26, %s27
    %p41 = scmp.eq.s32.totalorder %s19, 1
    %p42 = por %p40, %p41
    %p44 = scmp.ne.s32.totalorder %s27, %s43
    %p45 = scmp.eq.s32.totalorder %s19, 0
    %p46 = por %p44, %p45
    %s48 = sadd.s32 %s47, 1
    %p51 = scmp.eq.s32.totalorder %s13, 1
    %p52 = scmp.ne.s32.totalorder %s47, %s49
    %p53 = scmp.eq.s32.totalorder %s13, 0
    %p54 = por %p52, %p53
    %p55 = scmp.ne.s32.totalorder %s47, %s49
    %p56 = scmp.eq.s32.totalorder %s18, 1
    %p57 = por %p55, %p56
    %p58 = scmp.ne.s32.totalorder %s49, %s50
    %p59 = scmp.eq.s32.totalorder %s18, 0
    %p60 = por %p58, %p59
    %p61 = scmp.ne.s32.totalorder %s49, %s50
    %p62 = scmp.eq.s32.totalorder %s19, 1
    %p63 = por %p61, %p62
    %p65 = scmp.ne.s32.totalorder %s50, %s64
    %p66 = scmp.eq.s32.totalorder %s19, 0
    %p67 = por %p65, %p66
    %s69 = sadd.s32 %s68, 1
    %p72 = scmp.eq.s32.totalorder %s13, 1
    %p73 = scmp.ne.s32.totalorder %s68, %s70
    %p74 = scmp.eq.s32.totalorder %s13, 0
    %p75 = por %p73, %p74
    %p76 = scmp.ne.s32.totalorder %s68, %s70
    %p77 = scmp.eq.s32.totalorder %s18, 1
    %p78 = por %p76, %p77
    %p79 = scmp.ne.s32.totalorder %s70, %s71
    %p80 = scmp.eq.s32.totalorder %s18, 0
    %p81 = por %p79, %p80
    %p82 = scmp.ne.s32.totalorder %s70, %s71
    %p83 = scmp.eq.s32.totalorder %s19, 1
    %p84 = por %p82, %p83
    %p86 = scmp.ne.s32.totalorder %s71, %s85
    %p87 = scmp.eq.s32.totalorder %s19, 0
    %p88 = por %p86, %p87
    %s90 = sadd.s32 %s89, 1
    %p93 = scmp.eq.s32.totalorder %s13, 1
    %p94 = scmp.ne.s32.totalorder %s89, %s91
    %p95 = scmp.eq.s32.totalorder %s13, 0
    %p96 = por %p94, %p95
    %p97 = scmp.ne.s32.totalorder %s89, %s91
    %p98 = scmp.eq.s32.totalorder %s18, 1
    %p99 = por %p97, %p98
    %p100 = scmp.ne.s32.totalorder %s91, %s92
    %p101 = scmp.eq.s32.totalorder %s18, 0
    %p102 = por %p100, %p101
    %p103 = scmp.ne.s32.totalorder %s91, %s92
    %p104 = scmp.eq.s32.totalorder %s19, 1
    %p105 = por %p103, %p104
    %p107 = scmp.ne.s32.totalorder %s92, %s106
    %p108 = scmp.eq.s32.totalorder %s19, 0
    %p109 = por %p107, %p108
    %s111 = sadd.s32 %s110, 1
    %p114 = scmp.eq.s32.totalorder %s13, 1
    %p115 = scmp.ne.s32.totalorder %s110, %s112
    %p116 = scmp.eq.s32.totalorder %s13, 0
    %p117 = por %p115, %p116
    %p118 = scmp.ne.s32.totalorder %s110, %s112
    %p119 = scmp.eq.s32.totalorder %s18, 1
    %p120 = por %p118, %p119
    %p121 = scmp.ne.s32.totalorder %s112, %s113
    %p122 = scmp.eq.s32.totalorder %s18, 0
    %p123 = por %p121, %p122
    %p124 = scmp.ne.s32.totalorder %s112, %s113
    %p125 = scmp.eq.s32.totalorder %s19, 1
    %p126 = por %p124, %p125
    %p128 = scmp.ne.s32.totalorder %s113, %s127
    %p129 = scmp.eq.s32.totalorder %s19, 0
    %p130 = por %p128, %p129
    %s132 = sadd.s32 %s131, 1
    %p135 = scmp.eq.s32.totalorder %s13, 1
    %p136 = scmp.ne.s32.totalorder %s131, %s133
    %p137 = scmp.eq.s32.totalorder %s13, 0
    %p138 = por %p136, %p137
    %p139 = scmp.ne.s32.totalorder %s131, %s133
    %p140 = scmp.eq.s32.totalorder %s18, 1
    %p141 = por %p139, %p140
    %p142 = scmp.ne.s32.totalorder %s133, %s134
    %p143 = scmp.eq.s32.totalorder %s18, 0
    %p144 = por %p142, %p143
    %p145 = scmp.ne.s32.totalorder %s133, %s134
    %p146 = scmp.eq.s32.totalorder %s19, 1
    %p147 = por %p145, %p146
    %p149 = scmp.ne.s32.totalorder %s134, %s148
    %p150 = scmp.eq.s32.totalorder %s19, 0
    %p151 = por %p149, %p150
    %s153 = sadd.s32 %s152, 1
    %p156 = scmp.eq.s32.totalorder %s13, 1
    %p157 = scmp.ne.s32.totalorder %s152, %s154
    %p158 = scmp.eq.s32.totalorder %s13, 0
    %p159 = por %p157, %p158
    %p160 = scmp.ne.s32.totalorder %s152, %s154
    %p161 = scmp.eq.s32.totalorder %s18, 1
    %p162 = por %p160, %p161
    %p163 = scmp.ne.s32.totalorder %s154, %s155
    %p164 = scmp.eq.s32.totalorder %s18, 0
    %p165 = por %p163, %p164
    %p166 = scmp.ne.s32.totalorder %s154, %s155
    %p167 = scmp.eq.s32.totalorder %s19, 1
    %p168 = por %p166, %p167
    %p170 = scmp.ne.s32.totalorder %s155, %s169
    %p171 = scmp.eq.s32.totalorder %s19, 0
    %p172 = por %p170, %p171
    %s174 = sadd.s32 %s173, 1
    %p177 = scmp.eq.s32.totalorder %s13, 1
    %p178 = scmp.ne.s32.totalorder %s173, %s175
    %p179 = scmp.eq.s32.totalorder %s13, 0
    %p180 = por %p178, %p179
    %p181 = scmp.ne.s32.totalorder %s173, %s175
    %p182 = scmp.eq.s32.totalorder %s18, 1
    %p183 = por %p181, %p182
    %p184 = scmp.ne.s32.totalorder %s175, %s176
    %p185 = scmp.eq.s32.totalorder %s18, 0
    %p186 = por %p184, %p185
    %p187 = scmp.ne.s32.totalorder %s175, %s176
    %p188 = scmp.eq.s32.totalorder %s19, 1
    %p189 = por %p187, %p188
    %p191 = scmp.ne.s32.totalorder %s176, %s190
    %p192 = scmp.eq.s32.totalorder %s19, 0
    %p193 = por %p191, %p192
    %p194 = scmp.le.s32.totalorder 1, %s13
    %p195 = scmp.lt.s32.totalorder %s13, 3
    %p196 = pnand %p194, %p195
    %p197 = pneg %p196
    // Predicated region
    $region9: #{encoder_cnn_medium.1} parent=5 // pred_check
      _
    $region10: #{encoder_cnn_medium.1} parent=5 // pred_check_branch
      %199 = sbr.rel (%p196) target = $region12
    $region11: #{encoder_cnn_medium.1} parent=5 // pred_region
      %s200 = ssub.s32 %s13, 1
      // Predicated region
      $region13: #{encoder_cnn_medium.1} parent=11 // pred_check
        %p201 = pneg %p60
      $region14: #{encoder_cnn_medium.1} parent=11 // pred_check_branch
        %203 = sbr.rel (%p201) target = $region16
      $region15: #{encoder_cnn_medium.1} parent=11 // pred_region
        _
      $region16: #{encoder_cnn_medium.1} parent=11 // pred_fallthru
        _
      // Predicated region
      $region17: #{encoder_cnn_medium.1} parent=11 // pred_check
        %p204 = pneg %p81
      $region18: #{encoder_cnn_medium.1} parent=11 // pred_check_branch
        %206 = sbr.rel (%p204) target = $region20
      $region19: #{encoder_cnn_medium.1} parent=11 // pred_region
        _
      $region20: #{encoder_cnn_medium.1} parent=11 // pred_fallthru
        _
      // Predicated region
      $region21: #{encoder_cnn_medium.1} parent=11 // pred_check
        %p207 = pneg %p102
      $region22: #{encoder_cnn_medium.1} parent=11 // pred_check_branch
        %209 = sbr.rel (%p207) target = $region24
      $region23: #{encoder_cnn_medium.1} parent=11 // pred_region
        _
      $region24: #{encoder_cnn_medium.1} parent=11 // pred_fallthru
        _
      // Predicated region
      $region25: #{encoder_cnn_medium.1} parent=11 // pred_check
        %p210 = pneg %p123
      $region26: #{encoder_cnn_medium.1} parent=11 // pred_check_branch
        %212 = sbr.rel (%p210) target = $region28
      $region27: #{encoder_cnn_medium.1} parent=11 // pred_region
        _
      $region28: #{encoder_cnn_medium.1} parent=11 // pred_fallthru
        _
      // Predicated region
      $region29: #{encoder_cnn_medium.1} parent=11 // pred_check
        %p213 = pneg %p144
      $region30: #{encoder_cnn_medium.1} parent=11 // pred_check_branch
        %215 = sbr.rel (%p213) target = $region32
      $region31: #{encoder_cnn_medium.1} parent=11 // pred_region
        _
      $region32: #{encoder_cnn_medium.1} parent=11 // pred_fallthru
        _
      // Predicated region
      $region33: #{encoder_cnn_medium.1} parent=11 // pred_check
        %p216 = pneg %p165
      $region34: #{encoder_cnn_medium.1} parent=11 // pred_check_branch
        %218 = sbr.rel (%p216) target = $region36
      $region35: #{encoder_cnn_medium.1} parent=11 // pred_region
        _
      $region36: #{encoder_cnn_medium.1} parent=11 // pred_fallthru
        _
    $region12: #{encoder_cnn_medium.1} parent=5 // pred_fallthru
      _
    %p219 = scmp.lt.s32.totalorder %s13, 2
    // Predicated region
    $region37: #{encoder_cnn_medium.1} parent=5 // pred_check
      %p220 = pneg %p219
    $region38: #{encoder_cnn_medium.1} parent=5 // pred_check_branch
      %222 = sbr.rel (%p220) target = $region40
    $region39: #{encoder_cnn_medium.1} parent=5 // pred_region
      // Predicated region
      $region41: #{encoder_cnn_medium.1} parent=39 // pred_check
        %p223 = pneg %p33
      $region42: #{encoder_cnn_medium.1} parent=39 // pred_check_branch
        %225 = sbr.rel (%p223) target = $region44
      $region43: #{encoder_cnn_medium.1} parent=39 // pred_region
        %p226 = scmp.lt.s32.totalorder %s13, 1
        %s227 = scalar_select %p226, %s13, 1
        %s228 = smul.addr %s227, 26
        %s229 = smul.addr %s228, 4
        %s230 = scalar_lea.vmem %s0, %s229
      $region44: #{encoder_cnn_medium.1} parent=39 // pred_fallthru
        _
    $region40: #{encoder_cnn_medium.1} parent=5 // pred_fallthru
      _
    %p231 = scmp.le.s32.totalorder 1, %s13
    %p232 = scmp.lt.s32.totalorder %s13, 3
    %p233 = pnand %p231, %p232
    %p234 = pneg %p233
    // Predicated region
    $region45: #{encoder_cnn_medium.1} parent=5 // pred_check
      _
    $region46: #{encoder_cnn_medium.1} parent=5 // pred_check_branch
      %236 = sbr.rel (%p233) target = $region48
    $region47: #{encoder_cnn_medium.1} parent=5 // pred_region
      %s237 = ssub.s32 %s13, 1
      %p238 = scmp.lt.s32.totalorder %s18, 1
      %s239 = scalar_select %p238, %s18, 1
      %s240 = smul.addr %s239, 26
      %s241 = smul.addr %s240, 4
      %s242 = scalar_lea.vmem %s0, %s241
      %p243 = pneg %p39
      %p244 = pneg %p36
      %p245 = pneg %p60
      %p246 = pneg %p57
      %p247 = pneg %p81
      %p248 = pneg %p78
      %p249 = pneg %p102
      %p250 = pneg %p99
      %p251 = pneg %p123
      %p252 = pneg %p120
      %p253 = pneg %p144
      %p254 = pneg %p141
      %p255 = pneg %p165
      %p256 = pneg %p162
      %p257 = pneg %p186
      %p258 = pneg %p183
      %p259 = scmp.lt.s32.totalorder %s18, 1
      %s260 = scalar_select %p259, %s18, 1
      %s261 = smul.addr %s260, 26
      %s262 = smul.addr %s261, 4
      %s263 = scalar_lea.vmem %s0, %s262
      %v265 = vld [vmem:[%s263] sm:$0xff]
      %v266 = vld [vmem:[%s263 + $0x8] sm:$0xff]
      %v267 = vld [vmem:[%s263 + $0x10] sm:$0xff]
      %v268 = vld [vmem:[%s263 + $0x18] sm:$0xff]
      %v269 = vld [vmem:[%s263 + $0x20] sm:$0xff]
      %v270 = vld [vmem:[%s263 + $0x28] sm:$0xff]
      %v271 = vld [vmem:[%s263 + $0x30] sm:$0xff]
      %v272 = vld [vmem:[%s263 + $0x38] sm:$0xff]
      %v273 = vld [vmem:[%s263 + $0x40] sm:$0xff]
      %v274 = vld [vmem:[%s263 + $0x48] sm:$0xff]
      %v275 = vld [vmem:[%s263 + $0x50] sm:$0xff]
      %v276 = vld [vmem:[%s263 + $0x58] sm:$0xff]
      %v277 = vld [vmem:[%s263 + $0x60] sm:$0x33]
      %v278 = vld [vmem:[%s1] sm:$0xf]
      %v279 = vld [vmem:[%s1 + $0x4] sm:$0xf]
      %v280 = vld [vmem:[%s1 + $0x8] sm:$0xf]
      %v281 = vld [vmem:[%s1 + $0xc] sm:$0xf]
      %v282 = vld [vmem:[%s1 + $0x10] sm:$0xf]
      %v283 = vld [vmem:[%s1 + $0x14] sm:$0xf]
      %v284 = vld [vmem:[%s1 + $0x18] sm:$0xf]
      %v285 = vld [vmem:[%s1 + $0x1c] sm:$0xf]
      %v286 = vld [vmem:[%s1 + $0x20] sm:$0xf]
      %v287 = vld [vmem:[%s1 + $0x24] sm:$0xf]
      %v288 = vld [vmem:[%s1 + $0x28] sm:$0xf]
      %v289 = vld [vmem:[%s1 + $0x2c] sm:$0xf]
      %v290 = vld [vmem:[%s1 + $0x30] sm:$0xf]
      %v291 = vld [vmem:[%s1 + $0x34] sm:$0xf]
      %v292 = vld [vmem:[%s1 + $0x38] sm:$0xf]
      %v293 = vld [vmem:[%s1 + $0x3c] sm:$0xf]
      %v294 = vld [vmem:[%s1 + $0x40] sm:$0xf]
      %v295 = vld [vmem:[%s1 + $0x44] sm:$0xf]
      %v296 = vld [vmem:[%s1 + $0x48] sm:$0xf]
      %v297 = vld [vmem:[%s1 + $0x4c] sm:$0xf]
      %v298 = vld [vmem:[%s1 + $0x50] sm:$0xf]
      %v299 = vld [vmem:[%s1 + $0x54] sm:$0xf]
      %v300 = vld [vmem:[%s1 + $0x58] sm:$0xf]
      %v301 = vld [vmem:[%s1 + $0x5c] sm:$0xf]
      %v302 = vld [vmem:[%s1 + $0x60] sm:$0xf]
      %v303 = vld [vmem:[%s1 + $0x64] sm:$0xf]
      %v304 = vld [vmem:[%s1 + $0x68] sm:$0xf]
      %v305 = vld [vmem:[%s1 + $0x6c] sm:$0xf]
      %v306 = vld [vmem:[%s1 + $0x70] sm:$0xf]
      %v307 = vld [vmem:[%s1 + $0x74] sm:$0xf]
      %v308 = vld [vmem:[%s1 + $0x78] sm:$0xf]
      %v309 = vld [vmem:[%s1 + $0x7c] sm:$0xf]
      %v310 = vld [vmem:[%s2] sm:$0x1]
      %v312 = vlaneseq
      %v313 = vshrl.u32 %v312, 7
      %v314 = vsub.s32 0, %v313
      %v315 = vrot.slane %v310, %v314
      %v330 = vunpack.c.l.b16 %v265
      %v331 = vunpack.c.h.b16 %v265
      %v332 = vunpack.c.l.b16 %v266
      %v333 = vunpack.c.h.b16 %v266
      %v334 = vunpack.c.l.b16 %v267
      %v335 = vunpack.c.h.b16 %v267
      %v336 = vunpack.c.l.b16 %v268
      %v337 = vunpack.c.h.b16 %v268
      %v338 = vunpack.c.l.b16 %v269
      %v339 = vunpack.c.h.b16 %v269
      %v340 = vunpack.c.l.b16 %v270
      %v341 = vunpack.c.h.b16 %v270
      %v342 = vunpack.c.l.b16 %v271
      %v343 = vunpack.c.h.b16 %v271
      %v344 = vunpack.c.l.b16 %v272
      %v345 = vunpack.c.h.b16 %v272
      %v346 = vunpack.c.l.b16 %v273
      %v347 = vunpack.c.h.b16 %v273
      %v348 = vunpack.c.l.b16 %v274
      %v349 = vunpack.c.h.b16 %v274
      %v350 = vunpack.c.l.b16 %v275
      %v351 = vunpack.c.h.b16 %v275
      %v352 = vunpack.c.l.b16 %v276
      %v353 = vunpack.c.h.b16 %v276
      %v354 = vunpack.c.l.b16 %v277
      %v355 = vunpack.c.h.b16 %v277
      %v356 = vpack.c.b16 %v332, %v330
      %v357 = vpack.c.b16 %v333, %v331
      %v358 = vpack.c.b16 %v336, %v334
      %v359 = vpack.c.b16 %v337, %v335
      %v360 = vpack.c.b16 %v340, %v338
      %v361 = vpack.c.b16 %v341, %v339
      %v362 = vpack.c.b16 %v344, %v342
      %v363 = vpack.c.b16 %v345, %v343
      %v364 = vpack.c.b16 %v348, %v346
      %v365 = vpack.c.b16 %v349, %v347
      %v366 = vpack.c.b16 %v352, %v350
      %v367 = vpack.c.b16 %v353, %v351
      %v368 = vpack.c.b16 %v354, %v354
      %v369 = vpack.c.b16 %v355, %v355
      %v416 = vunpack.c.l.b16 %v278
      %v417 = vunpack.c.l.b16 %v279
      %v418 = vunpack.c.l.b16 %v280
      %v419 = vunpack.c.l.b16 %v281
      %v420 = vunpack.c.l.b16 %v282
      %v421 = vunpack.c.l.b16 %v283
      %v422 = vunpack.c.l.b16 %v284
      %v423 = vunpack.c.l.b16 %v285
      %v424 = vunpack.c.l.b16 %v286
      %v425 = vunpack.c.l.b16 %v287
      %v426 = vunpack.c.l.b16 %v288
      %v427 = vunpack.c.l.b16 %v289
      %v428 = vunpack.c.l.b16 %v290
      %v429 = vunpack.c.l.b16 %v291
      %v430 = vunpack.c.l.b16 %v292
      %v431 = vunpack.c.l.b16 %v293
      %v432 = vunpack.c.l.b16 %v294
      %v433 = vunpack.c.l.b16 %v295
      %v434 = vunpack.c.l.b16 %v296
      %v435 = vunpack.c.l.b16 %v297
      %v436 = vunpack.c.l.b16 %v298
      %v437 = vunpack.c.l.b16 %v299
      %v438 = vunpack.c.l.b16 %v300
      %v439 = vunpack.c.l.b16 %v301
      %v440 = vunpack.c.l.b16 %v302
      %v441 = vunpack.c.l.b16 %v303
      %v442 = vunpack.c.l.b16 %v304
      %v443 = vunpack.c.l.b16 %v305
      %v444 = vunpack.c.l.b16 %v306
      %v445 = vunpack.c.l.b16 %v307
      %v446 = vunpack.c.l.b16 %v308
      %v447 = vunpack.c.l.b16 %v309
      %v448 = vpack.c.b16 %v417, %v416
      %v449 = vpack.c.b16 %v419, %v418
      %v450 = vpack.c.b16 %v421, %v420
      %v451 = vpack.c.b16 %v423, %v422
      %v452 = vpack.c.b16 %v425, %v424
      %v453 = vpack.c.b16 %v427, %v426
      %v454 = vpack.c.b16 %v429, %v428
      %v455 = vpack.c.b16 %v431, %v430
      %v456 = vpack.c.b16 %v433, %v432
      %v457 = vpack.c.b16 %v435, %v434
      %v458 = vpack.c.b16 %v437, %v436
      %v459 = vpack.c.b16 %v439, %v438
      %v460 = vpack.c.b16 %v441, %v440
      %v461 = vpack.c.b16 %v443, %v442
      %v462 = vpack.c.b16 %v445, %v444
      %v463 = vpack.c.b16 %v447, %v446
      %480 = vmatprep.subr.bf16.mxu0 0
      %481 = vmatpush1.bf16.msra.mxu0 %v448
      %482 = vmatprep.subr.bf16.mxu0 0
      %483 = vmatpush1.bf16.msra.mxu0 %v449
      %484 = vmatprep.subr.bf16.mxu0 0
      %485 = vmatpush1.bf16.msra.mxu0 %v450
      %486 = vmatprep.subr.bf16.mxu0 0
      %487 = vmatpush1.bf16.msra.mxu0 %v451
      %488 = vmatprep.subr.bf16.mxu0 0
      %489 = vmatpush1.bf16.msra.mxu0 %v452
      %490 = vmatprep.subr.bf16.mxu0 0
      %491 = vmatpush1.bf16.msra.mxu0 %v453
      %492 = vmatprep.subr.bf16.mxu0 0
      %493 = vmatpush1.bf16.msra.mxu0 %v454
      %494 = vmatprep.subr.bf16.mxu0 0
      %495 = vmatpush1.bf16.msra.mxu0 %v455
      %496 = vmatprep.subr.bf16.mxu0 0
      %497 = vmatpush1.bf16.msra.mxu0 %v456
      %498 = vmatprep.subr.bf16.mxu0 0
      %499 = vmatpush1.bf16.msra.mxu0 %v457
      %500 = vmatprep.subr.bf16.mxu0 0
      %501 = vmatpush1.bf16.msra.mxu0 %v458
      %502 = vmatprep.subr.bf16.mxu0 0
      %503 = vmatpush1.bf16.msra.mxu0 %v459
      %504 = vmatprep.subr.bf16.mxu0 0
      %505 = vmatpush1.bf16.msra.mxu0 %v460
      %506 = vmatprep.subr.bf16.mxu0 0
      %507 = vmatpush1.bf16.msra.mxu0 %v461
      %508 = vmatprep.subr.bf16.mxu0 0
      %509 = vmatpush1.bf16.msra.mxu0 %v462
      %510 = vmatprep.subr.bf16.mxu0 0
      %511 = vmatpush1.bf16.msra.mxu0 %v463
      %512 = vmatprep.mubr.bf16.mxu0 %v357
      %513 = vmatmul.mubr.bf16.gmra.mrb[0].mxu0 %v356
      %v514 = vpop.f32.mrb[0].mxu0
      %v515 = vadd.f32 %v315, %v514
      %v516 = vpop.f32.mrb[0].mxu0
      %v517 = vpop.f32.mrb[0].mxu0
      %v518 = vadd.f32 %v315, %v517
      %v519 = vpop.f32.mrb[0].mxu0
      %520 = vmatprep.mubr.bf16.mxu0 %v359
      %521 = vmatmul.mubr.bf16.gmra.mrb[0].mxu0 %v358
      %v522 = vpop.f32.mrb[0].mxu0
      %v523 = vadd.f32 %v315, %v522
      %v524 = vpop.f32.mrb[0].mxu0
      %v525 = vpop.f32.mrb[0].mxu0
      %v526 = vadd.f32 %v315, %v525
      %v527 = vpop.f32.mrb[0].mxu0
      %528 = vmatprep.mubr.bf16.mxu0 %v361
      %529 = vmatmul.mubr.bf16.gmra.mrb[0].mxu0 %v360
      %v530 = vpop.f32.mrb[0].mxu0
      %v531 = vadd.f32 %v315, %v530
      %v532 = vpop.f32.mrb[0].mxu0
      %v533 = vpop.f32.mrb[0].mxu0
      %v534 = vadd.f32 %v315, %v533
      %v535 = vpop.f32.mrb[0].mxu0
      %536 = vmatprep.mubr.bf16.mxu0 %v363
      %537 = vmatmul.mubr.bf16.gmra.mrb[0].mxu0 %v362
      %v538 = vpop.f32.mrb[0].mxu0
      %v539 = vadd.f32 %v315, %v538
      %v540 = vpop.f32.mrb[0].mxu0
      %v541 = vpop.f32.mrb[0].mxu0
      %v542 = vadd.f32 %v315, %v541
      %v543 = vpop.f32.mrb[0].mxu0
      %544 = vmatprep.mubr.bf16.mxu0 %v365
      %545 = vmatmul.mubr.bf16.gmra.mrb[0].mxu0 %v364
      %v546 = vpop.f32.mrb[0].mxu0
      %v547 = vadd.f32 %v315, %v546
      %v548 = vpop.f32.mrb[0].mxu0
      %v549 = vpop.f32.mrb[0].mxu0
      %v550 = vadd.f32 %v315, %v549
      %v551 = vpop.f32.mrb[0].mxu0
      %552 = vmatprep.mubr.bf16.mxu0 %v367
      %553 = vmatmul.mubr.bf16.gmra.mrb[0].mxu0 %v366
      %v554 = vpop.f32.mrb[0].mxu0
      %v555 = vadd.f32 %v315, %v554
      %v556 = vpop.f32.mrb[0].mxu0
      %v557 = vpop.f32.mrb[0].mxu0
      %v558 = vadd.f32 %v315, %v557
      %v559 = vpop.f32.mrb[0].mxu0
      %560 = vmatprep.mubr.bf16.mxu0 %v369
      %561 = vmatmul.mubr.bf16.gmra.mrb[0].mxu0 %v368
      %v562 = vpop.f32.mrb[0].mxu0
      %v563 = vadd.f32 %v315, %v562
      %v564 = vpop.f32.mrb[0].mxu0
      %v565 = vpop.f32.mrb[0].mxu0
      %v566 = vpop.f32.mrb[0].mxu0
      %567 = vdwg.mxu0
      %s568 = smul.u32 %s18, 104
      %s569 = scalar_lea.vmem [#allocation2], %s568
      %vm570 = vcmask 261120
      %571 = vst.msk [vmem:[%s569] sm:$0xff] %vm570, %v515
      %572 = vst.msk [vmem:[%s569 + $0x8] sm:$0xff] %vm570, %v518
      %573 = vst.msk [vmem:[%s569 + $0x10] sm:$0xff] %vm570, %v523
      %574 = vst.msk [vmem:[%s569 + $0x18] sm:$0xff] %vm570, %v526
      %575 = vst.msk [vmem:[%s569 + $0x20] sm:$0xff] %vm570, %v531
      %576 = vst.msk [vmem:[%s569 + $0x28] sm:$0xff] %vm570, %v534
      %577 = vst.msk [vmem:[%s569 + $0x30] sm:$0xff] %vm570, %v539
      %578 = vst.msk [vmem:[%s569 + $0x38] sm:$0xff] %vm570, %v542
      %579 = vst.msk [vmem:[%s569 + $0x40] sm:$0xff] %vm570, %v547
      %580 = vst.msk [vmem:[%s569 + $0x48] sm:$0xff] %vm570, %v550
      %581 = vst.msk [vmem:[%s569 + $0x50] sm:$0xff] %vm570, %v555
      %582 = vst.msk [vmem:[%s569 + $0x58] sm:$0xff] %vm570, %v558
      %vm583 = vcmask 257024
      %584 = vst.msk [vmem:[%s569 + $0x60] sm:$0xf] %vm583, %v563
      %v585 = vsel %vm570, %v515, 0.0
      %v586 = vsel %vm570, %v518, 0.0
      %v587 = vadd.f32 %v585, %v586
      %v588 = vsel %vm570, %v523, 0.0
      %v589 = vadd.f32 %v587, %v588
      %v590 = vsel %vm570, %v526, 0.0
      %v591 = vadd.f32 %v589, %v590
      %v592 = vsel %vm570, %v531, 0.0
      %v593 = vadd.f32 %v591, %v592
      %v594 = vsel %vm570, %v534, 0.0
      %v595 = vadd.f32 %v593, %v594
      %v596 = vsel %vm570, %v539, 0.0
      %v597 = vadd.f32 %v595, %v596
      %v598 = vsel %vm570, %v542, 0.0
      %v599 = vadd.f32 %v597, %v598
      %v600 = vsel %vm570, %v547, 0.0
      %v601 = vadd.f32 %v599, %v600
      %v602 = vsel %vm570, %v550, 0.0
      %v603 = vadd.f32 %v601, %v602
      %v604 = vsel %vm570, %v555, 0.0
      %v605 = vadd.f32 %v603, %v604
      %v606 = vsel %vm570, %v558, 0.0
      %v607 = vadd.f32 %v605, %v606
      %v608 = vsel %vm583, %v563, 0.0
      %v609 = vadd.f32 %v607, %v608
      %v610 = vrot.slane %v609, 4
      %v611 = vadd.f32 %v609, %v610
      %v612 = vrot.slane %v611, 2
      %v613 = vadd.f32 %v611, %v612
      %v614 = vrot.slane %v613, 1
      %v615 = vadd.f32 %v613, %v614
      %v616 = vmul.f32 %v515, %v515
      %v617 = vmul.f32 %v518, %v518
      %v618 = vmul.f32 %v523, %v523
      %v619 = vmul.f32 %v526, %v526
      %v620 = vmul.f32 %v531, %v531
      %v621 = vmul.f32 %v534, %v534
      %v622 = vmul.f32 %v539, %v539
      %v623 = vmul.f32 %v542, %v542
      %v624 = vmul.f32 %v547, %v547
      %v625 = vmul.f32 %v550, %v550
      %v626 = vmul.f32 %v555, %v555
      %v627 = vmul.f32 %v558, %v558
      %v628 = vmul.f32 %v563, %v563
      %v629 = vsel %vm570, %v616, 0.0
      %v630 = vsel %vm570, %v617, 0.0
      %v631 = vadd.f32 %v629, %v630
      %v632 = vsel %vm570, %v618, 0.0
      %v633 = vadd.f32 %v631, %v632
      %v634 = vsel %vm570, %v619, 0.0
      %v635 = vadd.f32 %v633, %v634
      %v636 = vsel %vm570, %v620, 0.0
      %v637 = vadd.f32 %v635, %v636
      %v638 = vsel %vm570, %v621, 0.0
      %v639 = vadd.f32 %v637, %v638
      %v640 = vsel %vm570, %v622, 0.0
      %v641 = vadd.f32 %v639, %v640
      %v642 = vsel %vm570, %v623, 0.0
      %v643 = vadd.f32 %v641, %v642
      %v644 = vsel %vm570, %v624, 0.0
      %v645 = vadd.f32 %v643, %v644
      %v646 = vsel %vm570, %v625, 0.0
      %v647 = vadd.f32 %v645, %v646
      %v648 = vsel %vm570, %v626, 0.0
      %v649 = vadd.f32 %v647, %v648
      %v650 = vsel %vm570, %v627, 0.0
      %v651 = vadd.f32 %v649, %v650
      %v652 = vsel %vm583, %v628, 0.0
      %v653 = vadd.f32 %v651, %v652
      %v654 = vrot.slane %v653, 4
      %v655 = vadd.f32 %v653, %v654
      %v656 = vrot.slane %v655, 2
      %v657 = vadd.f32 %v655, %v656
      %v658 = vrot.slane %v657, 1
      %v659 = vadd.f32 %v657, %v658
      %p660 = scmp.eq.s32.totalorder %s18, 0
      // Predicated region
      $region49: #{encoder_cnn_medium.1} parent=47 // pred_check
        %p661 = pneg %p660
      $region50: #{encoder_cnn_medium.1} parent=47 // pred_check_branch
        %663 = sbr.rel (%p661) target = $region52
      $region51: #{encoder_cnn_medium.1} parent=47 // pred_region
        %vm664 = vcmask 253952
        %665 = vst.msk [vmem:[#allocation4] sm:$0x1] %vm664, %v615
        %666 = vst.msk [vmem:[#allocation5] sm:$0x1] %vm664, %v659
      $region52: #{encoder_cnn_medium.1} parent=47 // pred_fallthru
        _
      %p667 = scmp.gt.s32.totalorder %s18, 0
      // Predicated region
      $region53: #{encoder_cnn_medium.1} parent=47 // pred_check
        %p668 = pneg %p667
      $region54: #{encoder_cnn_medium.1} parent=47 // pred_check_branch
        %670 = sbr.rel (%p668) target = $region56
      $region55: #{encoder_cnn_medium.1} parent=47 // pred_region
        %v671 = vld [vmem:[#allocation4] sm:$0x1]
        %v672 = vadd.f32 %v671, %v615
        %vm673 = vcmask 253952
        %674 = vst.msk [vmem:[#allocation4] sm:$0x1] %vm673, %v672
        %v675 = vld [vmem:[#allocation5] sm:$0x1]
        %v676 = vadd.f32 %v675, %v659
        %677 = vst.msk [vmem:[#allocation5] sm:$0x1] %vm673, %v676
      $region56: #{encoder_cnn_medium.1} parent=47 // pred_fallthru
        _
      %p678 = scmp.eq.s32.totalorder %s18, 1
      // Predicated region
      $region57: #{encoder_cnn_medium.1} parent=47 // pred_check
        %p679 = pneg %p678
      $region58: #{encoder_cnn_medium.1} parent=47 // pred_check_branch
        %681 = sbr.rel (%p679) target = $region60
      $region59: #{encoder_cnn_medium.1} parent=47 // pred_region
        %v682 = vld [vmem:[#allocation4] sm:$0x1]
        %v683 = vmul.f32 %v682, 0.005
        %v684 = vld [vmem:[#allocation5] sm:$0x1]
        %v685 = vmul.f32 %v684, 0.005
        %v686 = vmul.f32 %v683, %v683
        %v687 = vsub.f32 %v685, %v686
        %v688 = vmax.f32 %v687, 0.0
        %v689 = vld [vmem:[%s3] sm:$0x1]
        %v690 = vadd.f32 %v688, 1e-05
        %v691 = vrsqrt.pop %v690
        %v692 = vmul.f32 %v689, %v691
        %v693 = vld [vmem:[%s4] sm:$0x1]
        %v694 = vmul.f32 %v683, %v692
        %v695 = vsub.f32 %v693, %v694
        %696 = vst [vmem:[#allocation3] sm:$0xff] 0.0
        %697 = vst [vmem:[#allocation3 + $0x8] sm:$0xff] 0.0
        %698 = vst [vmem:[#allocation3 + $0x10] sm:$0xff] 0.0
        %699 = vst [vmem:[#allocation3 + $0x18] sm:$0xff] 0.0
        %700 = vst [vmem:[#allocation3 + $0x20] sm:$0xff] 0.0
        %701 = vst [vmem:[#allocation3 + $0x28] sm:$0xff] 0.0
        %702 = vst [vmem:[#allocation3 + $0x30] sm:$0xff] 0.0
        %v703 = vld [vmem:[#allocation2] sm:$0xff]
        %v704 = vld [vmem:[#allocation2 + $0x8] sm:$0xff]
        %v705 = vld [vmem:[#allocation2 + $0x10] sm:$0xff]
        %v706 = vld [vmem:[#allocation2 + $0x18] sm:$0xff]
        %v707 = vld [vmem:[#allocation2 + $0x20] sm:$0xff]
        %v708 = vld [vmem:[#allocation2 + $0x28] sm:$0xff]
        %v709 = vld [vmem:[#allocation2 + $0x30] sm:$0xff]
        %v710 = vld [vmem:[#allocation2 + $0x38] sm:$0xff]
        %v711 = vld [vmem:[#allocation2 + $0x40] sm:$0xff]
        %v712 = vld [vmem:[#allocation2 + $0x48] sm:$0xff]
        %v713 = vld [vmem:[#allocation2 + $0x50] sm:$0xff]
        %v714 = vld [vmem:[#allocation2 + $0x58] sm:$0xff]
        %v715 = vld [vmem:[#allocation2 + $0x60] sm:$0xf]
        %v717 = vlaneseq
        %v718 = vshrl.u32 %v717, 7
        %v719 = vsub.s32 0, %v718
        %v720 = vrot.slane %v692, %v719
        %v722 = vmul.f32 %v703, %v720
        %v723 = vmul.f32 %v704, %v720
        %v724 = vmul.f32 %v705, %v720
        %v725 = vmul.f32 %v706, %v720
        %v726 = vmul.f32 %v707, %v720
        %v727 = vmul.f32 %v708, %v720
        %v728 = vmul.f32 %v709, %v720
        %v729 = vmul.f32 %v710, %v720
        %v730 = vmul.f32 %v711, %v720
        %v731 = vmul.f32 %v712, %v720
        %v732 = vmul.f32 %v713, %v720
        %v733 = vmul.f32 %v714, %v720
        %v734 = vmul.f32 %v715, %v720
        %v736 = vlaneseq
        %v737 = vshrl.u32 %v736, 7
        %v738 = vsub.s32 0, %v737
        %v739 = vrot.slane %v695, %v738
        %v741 = vadd.f32 %v722, %v739
        %v742 = vadd.f32 %v723, %v739
        %v743 = vadd.f32 %v724, %v739
        %v744 = vadd.f32 %v725, %v739
        %v745 = vadd.f32 %v726, %v739
        %v746 = vadd.f32 %v727, %v739
        %v747 = vadd.f32 %v728, %v739
        %v748 = vadd.f32 %v729, %v739
        %v749 = vadd.f32 %v730, %v739
        %v750 = vadd.f32 %v731, %v739
        %v751 = vadd.f32 %v732, %v739
        %v752 = vadd.f32 %v733, %v739
        %v753 = vadd.f32 %v734, %v739
        %vm754 = vcmp.gt.f32.partialorder %v741, 0.0
        %vm755 = vcmp.gt.f32.partialorder %v742, 0.0
        %vm756 = vcmp.gt.f32.partialorder %v743, 0.0
        %vm757 = vcmp.gt.f32.partialorder %v744, 0.0
        %vm758 = vcmp.gt.f32.partialorder %v745, 0.0
        %vm759 = vcmp.gt.f32.partialorder %v746, 0.0
        %vm760 = vcmp.gt.f32.partialorder %v747, 0.0
        %vm761 = vcmp.gt.f32.partialorder %v748, 0.0
        %vm762 = vcmp.gt.f32.partialorder %v749, 0.0
        %vm763 = vcmp.gt.f32.partialorder %v750, 0.0
        %vm764 = vcmp.gt.f32.partialorder %v751, 0.0
        %vm765 = vcmp.gt.f32.partialorder %v752, 0.0
        %vm766 = vcmp.gt.f32.partialorder %v753, 0.0
        %v767 = vmul.f32 %v741, 0.01
        %v768 = vmul.f32 %v742, 0.01
        %v769 = vmul.f32 %v743, 0.01
        %v770 = vmul.f32 %v744, 0.01
        %v771 = vmul.f32 %v745, 0.01
        %v772 = vmul.f32 %v746, 0.01
        %v773 = vmul.f32 %v747, 0.01
        %v774 = vmul.f32 %v748, 0.01
        %v775 = vmul.f32 %v749, 0.01
        %v776 = vmul.f32 %v750, 0.01
        %v777 = vmul.f32 %v751, 0.01
        %v778 = vmul.f32 %v752, 0.01
        %v779 = vmul.f32 %v753, 0.01
        %v780 = vsel %vm754, %v741, %v767
        %v781 = vsel %vm755, %v742, %v768
        %v782 = vsel %vm756, %v743, %v769
        %v783 = vsel %vm757, %v744, %v770
        %v784 = vsel %vm758, %v745, %v771
        %v785 = vsel %vm759, %v746, %v772
        %v786 = vsel %vm760, %v747, %v773
        %v787 = vsel %vm761, %v748, %v774
        %v788 = vsel %vm762, %v749, %v775
        %v789 = vsel %vm763, %v750, %v776
        %v790 = vsel %vm764, %v751, %v777
        %v791 = vsel %vm765, %v752, %v778
        %v792 = vsel %vm766, %v753, %v779
        %vm793 = vcmask 253952
        %794 = vst.msk [vmem:[#allocation3] sm:$0x1] %vm793, %v780
        %v796 = vrot.slane %v780, 1
        %797 = vrot.lane.b32.xlu0 %v796, 32
        %v798 = vpop.permute.xlu0 %797
        %vm800 = vcmask 516352
        %801 = vst.msk [vmem:[#allocation3] sm:$0x1] %vm800, %v798
        %v802 = vrot.slane %v780, 2
        %803 = vrot.lane.b32.xlu0 %v802, 64
        %v804 = vpop.permute.xlu0 %803
        %vm806 = vcmask 778752
        %807 = vst.msk [vmem:[#allocation3] sm:$0x1] %vm806, %v804
        %v808 = vrot.slane %v780, 3
        %809 = vrot.lane.b32.xlu0 %v808, 96
        %v810 = vpop.permute.xlu0 %809
        %vm812 = vcmask 1041152
        %813 = vst.msk [vmem:[#allocation3] sm:$0x1] %vm812, %v810
        %v814 = vrot.slane %v780, 4
        %816 = vst.msk [vmem:[#allocation3 + $0x8] sm:$0x1] %vm793, %v814
        %v818 = vrot.slane %v781, 2
        %819 = vrot.lane.b32.xlu0 %v818, 32
        %v820 = vpop.permute.xlu0 %819
        %822 = vst.msk [vmem:[#allocation3 + $0x8] sm:$0x1] %vm800, %v820
        %v823 = vrot.slane %v781, 3
        %824 = vrot.lane.b32.xlu0 %v823, 64
        %v825 = vpop.permute.xlu0 %824
        %827 = vst.msk [vmem:[#allocation3 + $0x8] sm:$0x1] %vm806, %v825
        %v828 = vrot.slane %v781, 4
        %829 = vrot.lane.b32.xlu0 %v828, 96
        %v830 = vpop.permute.xlu0 %829
        %832 = vst.msk [vmem:[#allocation3 + $0x8] sm:$0x1] %vm812, %v830
        %v833 = vrot.slane %v781, 5
        %835 = vst.msk [vmem:[#allocation3 + $0x10] sm:$0x1] %vm793, %v833
        %v836 = vrot.slane %v781, 6
        %837 = vrot.lane.b32.xlu0 %v836, 32
        %v838 = vpop.permute.xlu0 %837
        %840 = vst.msk [vmem:[#allocation3 + $0x10] sm:$0x1] %vm800, %v838
        %v842 = vrot.slane %v782, 4
        %843 = vrot.lane.b32.xlu0 %v842, 64
        %v844 = vpop.permute.xlu0 %843
        %846 = vst.msk [vmem:[#allocation3 + $0x10] sm:$0x1] %vm806, %v844
        %v847 = vrot.slane %v782, 5
        %848 = vrot.lane.b32.xlu0 %v847, 96
        %v849 = vpop.permute.xlu0 %848
        %851 = vst.msk [vmem:[#allocation3 + $0x10] sm:$0x1] %vm812, %v849
        %v852 = vrot.slane %v782, 6
        %854 = vst.msk [vmem:[#allocation3 + $0x18] sm:$0x1] %vm793, %v852
        %v855 = vrot.slane %v782, 7
        %856 = vrot.lane.b32.xlu0 %v855, 32
        %v857 = vpop.permute.xlu0 %856
        %859 = vst.msk [vmem:[#allocation3 + $0x18] sm:$0x1] %vm800, %v857
        %861 = vrot.lane.b32.xlu0 %v783, 64
        %v862 = vpop.permute.xlu0 %861
        %864 = vst.msk [vmem:[#allocation3 + $0x18] sm:$0x1] %vm806, %v862
        %v865 = vrot.slane %v783, 6
        %866 = vrot.lane.b32.xlu0 %v865, 96
        %v867 = vpop.permute.xlu0 %866
        %869 = vst.msk [vmem:[#allocation3 + $0x18] sm:$0x1] %vm812, %v867
        %v870 = vrot.slane %v783, 7
        %872 = vst.msk [vmem:[#allocation3 + $0x20] sm:$0x1] %vm793, %v870
        %874 = vrot.lane.b32.xlu0 %v784, 32
        %v875 = vpop.permute.xlu0 %874
        %877 = vst.msk [vmem:[#allocation3 + $0x20] sm:$0x1] %vm800, %v875
        %v878 = vrot.slane %v784, 1
        %879 = vrot.lane.b32.xlu0 %v878, 64
        %v880 = vpop.permute.xlu0 %879
        %882 = vst.msk [vmem:[#allocation3 + $0x20] sm:$0x1] %vm806, %v880
        %v883 = vrot.slane %v784, 2
        %884 = vrot.lane.b32.xlu0 %v883, 96
        %v885 = vpop.permute.xlu0 %884
        %887 = vst.msk [vmem:[#allocation3 + $0x20] sm:$0x1] %vm812, %v885
        %888 = vst.msk [vmem:[#allocation3 + $0x28] sm:$0x1] %vm793, %v785
        %v890 = vrot.slane %v785, 1
        %891 = vrot.lane.b32.xlu0 %v890, 32
        %v892 = vpop.permute.xlu0 %891
        %894 = vst.msk [vmem:[#allocation3 + $0x28] sm:$0x1] %vm800, %v892
        %v895 = vrot.slane %v785, 2
        %896 = vrot.lane.b32.xlu0 %v895, 64
        %v897 = vpop.permute.xlu0 %896
        %899 = vst.msk [vmem:[#allocation3 + $0x28] sm:$0x1] %vm806, %v897
        %v900 = vrot.slane %v785, 3
        %901 = vrot.lane.b32.xlu0 %v900, 96
        %v902 = vpop.permute.xlu0 %901
        %904 = vst.msk [vmem:[#allocation3 + $0x28] sm:$0x1] %vm812, %v902
        %v905 = vrot.slane %v785, 4
        %907 = vst.msk [vmem:[#allocation3 + $0x30] sm:$0x1] %vm793, %v905
        %v908 = vrot.slane %v780, 5
        %910 = vst.msk [vmem:[#allocation3 + $0x1] sm:$0x1] %vm793, %v908
        %v911 = vrot.slane %v780, 6
        %912 = vrot.lane.b32.xlu0 %v911, 32
        %v913 = vpop.permute.xlu0 %912
        %915 = vst.msk [vmem:[#allocation3 + $0x1] sm:$0x1] %vm800, %v913
        %v916 = vrot.slane %v780, 7
        %917 = vrot.lane.b32.xlu0 %v916, 64
        %v918 = vpop.permute.xlu0 %917
        %920 = vst.msk [vmem:[#allocation3 + $0x1] sm:$0x1] %vm806, %v918
        %921 = vrot.lane.b32.xlu0 %v781, 96
        %v922 = vpop.permute.xlu0 %921
        %924 = vst.msk [vmem:[#allocation3 + $0x1] sm:$0x1] %vm812, %v922
        %v925 = vrot.slane %v781, 1
        %927 = vst.msk [vmem:[#allocation3 + $0x9] sm:$0x1] %vm793, %v925
        %v928 = vrot.slane %v781, 7
        %929 = vrot.lane.b32.xlu0 %v928, 32
        %v930 = vpop.permute.xlu0 %929
        %932 = vst.msk [vmem:[#allocation3 + $0x9] sm:$0x1] %vm800, %v930
        %933 = vrot.lane.b32.xlu0 %v782, 64
        %v934 = vpop.permute.xlu0 %933
        %936 = vst.msk [vmem:[#allocation3 + $0x9] sm:$0x1] %vm806, %v934
        %v937 = vrot.slane %v782, 1
        %938 = vrot.lane.b32.xlu0 %v937, 96
        %v939 = vpop.permute.xlu0 %938
        %941 = vst.msk [vmem:[#allocation3 + $0x9] sm:$0x1] %vm812, %v939
        %v942 = vrot.slane %v782, 2
        %944 = vst.msk [vmem:[#allocation3 + $0x11] sm:$0x1] %vm793, %v942
        %v945 = vrot.slane %v782, 3
        %946 = vrot.lane.b32.xlu0 %v945, 32
        %v947 = vpop.permute.xlu0 %946
        %949 = vst.msk [vmem:[#allocation3 + $0x11] sm:$0x1] %vm800, %v947
        %v950 = vrot.slane %v783, 1
        %951 = vrot.lane.b32.xlu0 %v950, 64
        %v952 = vpop.permute.xlu0 %951
        %954 = vst.msk [vmem:[#allocation3 + $0x11] sm:$0x1] %vm806, %v952
        %v955 = vrot.slane %v783, 2
        %956 = vrot.lane.b32.xlu0 %v955, 96
        %v957 = vpop.permute.xlu0 %956
        %959 = vst.msk [vmem:[#allocation3 + $0x11] sm:$0x1] %vm812, %v957
        %v960 = vrot.slane %v783, 3
        %962 = vst.msk [vmem:[#allocation3 + $0x19] sm:$0x1] %vm793, %v960
        %v963 = vrot.slane %v783, 4
        %964 = vrot.lane.b32.xlu0 %v963, 32
        %v965 = vpop.permute.xlu0 %964
        %967 = vst.msk [vmem:[#allocation3 + $0x19] sm:$0x1] %vm800, %v965
        %v968 = vrot.slane %v783, 5
        %969 = vrot.lane.b32.xlu0 %v968, 64
        %v970 = vpop.permute.xlu0 %969
        %972 = vst.msk [vmem:[#allocation3 + $0x19] sm:$0x1] %vm806, %v970
        %v973 = vrot.slane %v784, 3
        %974 = vrot.lane.b32.xlu0 %v973, 96
        %v975 = vpop.permute.xlu0 %974
        %977 = vst.msk [vmem:[#allocation3 + $0x19] sm:$0x1] %vm812, %v975
        %v978 = vrot.slane %v784, 4
        %980 = vst.msk [vmem:[#allocation3 + $0x21] sm:$0x1] %vm793, %v978
        %v981 = vrot.slane %v784, 5
        %982 = vrot.lane.b32.xlu0 %v981, 32
        %v983 = vpop.permute.xlu0 %982
        %985 = vst.msk [vmem:[#allocation3 + $0x21] sm:$0x1] %vm800, %v983
        %v986 = vrot.slane %v784, 6
        %987 = vrot.lane.b32.xlu0 %v986, 64
        %v988 = vpop.permute.xlu0 %987
        %990 = vst.msk [vmem:[#allocation3 + $0x21] sm:$0x1] %vm806, %v988
        %v991 = vrot.slane %v784, 7
        %992 = vrot.lane.b32.xlu0 %v991, 96
        %v993 = vpop.permute.xlu0 %992
        %995 = vst.msk [vmem:[#allocation3 + $0x21] sm:$0x1] %vm812, %v993
        %v996 = vrot.slane %v785, 5
        %998 = vst.msk [vmem:[#allocation3 + $0x29] sm:$0x1] %vm793, %v996
        %v999 = vrot.slane %v785, 6
        %1000 = vrot.lane.b32.xlu0 %v999, 32
        %v1001 = vpop.permute.xlu0 %1000
        %1003 = vst.msk [vmem:[#allocation3 + $0x29] sm:$0x1] %vm800, %v1001
        %v1004 = vrot.slane %v785, 7
        %1005 = vrot.lane.b32.xlu0 %v1004, 64
        %v1006 = vpop.permute.xlu0 %1005
        %1008 = vst.msk [vmem:[#allocation3 + $0x29] sm:$0x1] %vm806, %v1006
        %1010 = vrot.lane.b32.xlu0 %v786, 96
        %v1011 = vpop.permute.xlu0 %1010
        %1013 = vst.msk [vmem:[#allocation3 + $0x29] sm:$0x1] %vm812, %v1011
        %v1014 = vrot.slane %v786, 1
        %1016 = vst.msk [vmem:[#allocation3 + $0x31] sm:$0x1] %vm793, %v1014
        %v1017 = vrot.slane %v786, 2
        %1019 = vst.msk [vmem:[#allocation3 + $0x2] sm:$0x1] %vm793, %v1017
        %v1020 = vrot.slane %v786, 3
        %1021 = vrot.lane.b32.xlu0 %v1020, 32
        %v1022 = vpop.permute.xlu0 %1021
        %1024 = vst.msk [vmem:[#allocation3 + $0x2] sm:$0x1] %vm800, %v1022
        %v1025 = vrot.slane %v786, 4
        %1026 = vrot.lane.b32.xlu0 %v1025, 64
        %v1027 = vpop.permute.xlu0 %1026
        %1029 = vst.msk [vmem:[#allocation3 + $0x2] sm:$0x1] %vm806, %v1027
        %v1030 = vrot.slane %v786, 5
        %1031 = vrot.lane.b32.xlu0 %v1030, 96
        %v1032 = vpop.permute.xlu0 %1031
        %1034 = vst.msk [vmem:[#allocation3 + $0x2] sm:$0x1] %vm812, %v1032
        %v1035 = vrot.slane %v786, 6
        %1037 = vst.msk [vmem:[#allocation3 + $0xa] sm:$0x1] %vm793, %v1035
        %v1039 = vrot.slane %v787, 4
        %1040 = vrot.lane.b32.xlu0 %v1039, 32
        %v1041 = vpop.permute.xlu0 %1040
        %1043 = vst.msk [vmem:[#allocation3 + $0xa] sm:$0x1] %vm800, %v1041
        %v1044 = vrot.slane %v787, 5
        %1045 = vrot.lane.b32.xlu0 %v1044, 64
        %v1046 = vpop.permute.xlu0 %1045
        %1048 = vst.msk [vmem:[#allocation3 + $0xa] sm:$0x1] %vm806, %v1046
        %v1049 = vrot.slane %v787, 6
        %1050 = vrot.lane.b32.xlu0 %v1049, 96
        %v1051 = vpop.permute.xlu0 %1050
        %1053 = vst.msk [vmem:[#allocation3 + $0xa] sm:$0x1] %vm812, %v1051
        %v1054 = vrot.slane %v787, 7
        %1056 = vst.msk [vmem:[#allocation3 + $0x12] sm:$0x1] %vm793, %v1054
        %1058 = vrot.lane.b32.xlu0 %v788, 32
        %v1059 = vpop.permute.xlu0 %1058
        %1061 = vst.msk [vmem:[#allocation3 + $0x12] sm:$0x1] %vm800, %v1059
        %v1062 = vrot.slane %v788, 6
        %1063 = vrot.lane.b32.xlu0 %v1062, 64
        %v1064 = vpop.permute.xlu0 %1063
        %1066 = vst.msk [vmem:[#allocation3 + $0x12] sm:$0x1] %vm806, %v1064
        %v1067 = vrot.slane %v788, 7
        %1068 = vrot.lane.b32.xlu0 %v1067, 96
        %v1069 = vpop.permute.xlu0 %1068
        %1071 = vst.msk [vmem:[#allocation3 + $0x12] sm:$0x1] %vm812, %v1069
        %1072 = vst.msk [vmem:[#allocation3 + $0x1a] sm:$0x1] %vm793, %v789
        %v1074 = vrot.slane %v789, 1
        %1075 = vrot.lane.b32.xlu0 %v1074, 32
        %v1076 = vpop.permute.xlu0 %1075
        %1078 = vst.msk [vmem:[#allocation3 + $0x1a] sm:$0x1] %vm800, %v1076
        %v1079 = vrot.slane %v789, 2
        %1080 = vrot.lane.b32.xlu0 %v1079, 64
        %v1081 = vpop.permute.xlu0 %1080
        %1083 = vst.msk [vmem:[#allocation3 + $0x1a] sm:$0x1] %vm806, %v1081
        %1085 = vrot.lane.b32.xlu0 %v790, 96
        %v1086 = vpop.permute.xlu0 %1085
        %1088 = vst.msk [vmem:[#allocation3 + $0x1a] sm:$0x1] %vm812, %v1086
        %v1089 = vrot.slane %v790, 1
        %1091 = vst.msk [vmem:[#allocation3 + $0x22] sm:$0x1] %vm793, %v1089
        %v1092 = vrot.slane %v790, 2
        %1093 = vrot.lane.b32.xlu0 %v1092, 32
        %v1094 = vpop.permute.xlu0 %1093
        %1096 = vst.msk [vmem:[#allocation3 + $0x22] sm:$0x1] %vm800, %v1094
        %v1097 = vrot.slane %v790, 3
        %1098 = vrot.lane.b32.xlu0 %v1097, 64
        %v1099 = vpop.permute.xlu0 %1098
        %1101 = vst.msk [vmem:[#allocation3 + $0x22] sm:$0x1] %vm806, %v1099
        %v1102 = vrot.slane %v790, 4
        %1103 = vrot.lane.b32.xlu0 %v1102, 96
        %v1104 = vpop.permute.xlu0 %1103
        %1106 = vst.msk [vmem:[#allocation3 + $0x22] sm:$0x1] %vm812, %v1104
        %v1108 = vrot.slane %v791, 2
        %1110 = vst.msk [vmem:[#allocation3 + $0x2a] sm:$0x1] %vm793, %v1108
        %v1111 = vrot.slane %v791, 3
        %1112 = vrot.lane.b32.xlu0 %v1111, 32
        %v1113 = vpop.permute.xlu0 %1112
        %1115 = vst.msk [vmem:[#allocation3 + $0x2a] sm:$0x1] %vm800, %v1113
        %v1116 = vrot.slane %v791, 4
        %1117 = vrot.lane.b32.xlu0 %v1116, 64
        %v1118 = vpop.permute.xlu0 %1117
        %1120 = vst.msk [vmem:[#allocation3 + $0x2a] sm:$0x1] %vm806, %v1118
        %v1121 = vrot.slane %v791, 5
        %1122 = vrot.lane.b32.xlu0 %v1121, 96
        %v1123 = vpop.permute.xlu0 %1122
        %1125 = vst.msk [vmem:[#allocation3 + $0x2a] sm:$0x1] %vm812, %v1123
        %v1126 = vrot.slane %v791, 6
        %1128 = vst.msk [vmem:[#allocation3 + $0x32] sm:$0x1] %vm793, %v1126
        %v1129 = vrot.slane %v786, 7
        %1131 = vst.msk [vmem:[#allocation3 + $0x3] sm:$0x1] %vm793, %v1129
        %1132 = vrot.lane.b32.xlu0 %v787, 32
        %v1133 = vpop.permute.xlu0 %1132
        %1135 = vst.msk [vmem:[#allocation3 + $0x3] sm:$0x1] %vm800, %v1133
        %v1136 = vrot.slane %v787, 1
        %1137 = vrot.lane.b32.xlu0 %v1136, 64
        %v1138 = vpop.permute.xlu0 %1137
        %1140 = vst.msk [vmem:[#allocation3 + $0x3] sm:$0x1] %vm806, %v1138
        %v1141 = vrot.slane %v787, 2
        %1142 = vrot.lane.b32.xlu0 %v1141, 96
        %v1143 = vpop.permute.xlu0 %1142
        %1145 = vst.msk [vmem:[#allocation3 + $0x3] sm:$0x1] %vm812, %v1143
        %v1146 = vrot.slane %v787, 3
        %1148 = vst.msk [vmem:[#allocation3 + $0xb] sm:$0x1] %vm793, %v1146
        %v1149 = vrot.slane %v788, 1
        %1150 = vrot.lane.b32.xlu0 %v1149, 32
        %v1151 = vpop.permute.xlu0 %1150
        %1153 = vst.msk [vmem:[#allocation3 + $0xb] sm:$0x1] %vm800, %v1151
        %v1154 = vrot.slane %v788, 2
        %1155 = vrot.lane.b32.xlu0 %v1154, 64
        %v1156 = vpop.permute.xlu0 %1155
        %1158 = vst.msk [vmem:[#allocation3 + $0xb] sm:$0x1] %vm806, %v1156
        %v1159 = vrot.slane %v788, 3
        %1160 = vrot.lane.b32.xlu0 %v1159, 96
        %v1161 = vpop.permute.xlu0 %1160
        %1163 = vst.msk [vmem:[#allocation3 + $0xb] sm:$0x1] %vm812, %v1161
        %v1164 = vrot.slane %v788, 4
        %1166 = vst.msk [vmem:[#allocation3 + $0x13] sm:$0x1] %vm793, %v1164
        %v1167 = vrot.slane %v788, 5
        %1168 = vrot.lane.b32.xlu0 %v1167, 32
        %v1169 = vpop.permute.xlu0 %1168
        %1171 = vst.msk [vmem:[#allocation3 + $0x13] sm:$0x1] %vm800, %v1169
        %v1172 = vrot.slane %v789, 3
        %1173 = vrot.lane.b32.xlu0 %v1172, 64
        %v1174 = vpop.permute.xlu0 %1173
        %1176 = vst.msk [vmem:[#allocation3 + $0x13] sm:$0x1] %vm806, %v1174
        %v1177 = vrot.slane %v789, 4
        %1178 = vrot.lane.b32.xlu0 %v1177, 96
        %v1179 = vpop.permute.xlu0 %1178
        %1181 = vst.msk [vmem:[#allocation3 + $0x13] sm:$0x1] %vm812, %v1179
        %v1182 = vrot.slane %v789, 5
        %1184 = vst.msk [vmem:[#allocation3 + $0x1b] sm:$0x1] %vm793, %v1182
        %v1185 = vrot.slane %v789, 6
        %1186 = vrot.lane.b32.xlu0 %v1185, 32
        %v1187 = vpop.permute.xlu0 %1186
        %1189 = vst.msk [vmem:[#allocation3 + $0x1b] sm:$0x1] %vm800, %v1187
        %v1190 = vrot.slane %v789, 7
        %1191 = vrot.lane.b32.xlu0 %v1190, 64
        %v1192 = vpop.permute.xlu0 %1191
        %1194 = vst.msk [vmem:[#allocation3 + $0x1b] sm:$0x1] %vm806, %v1192
        %v1195 = vrot.slane %v790, 5
        %1196 = vrot.lane.b32.xlu0 %v1195, 96
        %v1197 = vpop.permute.xlu0 %1196
        %1199 = vst.msk [vmem:[#allocation3 + $0x1b] sm:$0x1] %vm812, %v1197
        %v1200 = vrot.slane %v790, 6
        %1202 = vst.msk [vmem:[#allocation3 + $0x23] sm:$0x1] %vm793, %v1200
        %v1203 = vrot.slane %v790, 7
        %1204 = vrot.lane.b32.xlu0 %v1203, 32
        %v1205 = vpop.permute.xlu0 %1204
        %1207 = vst.msk [vmem:[#allocation3 + $0x23] sm:$0x1] %vm800, %v1205
        %1208 = vrot.lane.b32.xlu0 %v791, 64
        %v1209 = vpop.permute.xlu0 %1208
        %1211 = vst.msk [vmem:[#allocation3 + $0x23] sm:$0x1] %vm806, %v1209
        %v1212 = vrot.slane %v791, 1
        %1213 = vrot.lane.b32.xlu0 %v1212, 96
        %v1214 = vpop.permute.xlu0 %1213
        %1216 = vst.msk [vmem:[#allocation3 + $0x23] sm:$0x1] %vm812, %v1214
        %v1217 = vrot.slane %v791, 7
        %1219 = vst.msk [vmem:[#allocation3 + $0x2b] sm:$0x1] %vm793, %v1217
        %1221 = vrot.lane.b32.xlu0 %v792, 32
        %v1222 = vpop.permute.xlu0 %1221
        %1224 = vst.msk [vmem:[#allocation3 + $0x2b] sm:$0x1] %vm800, %v1222
        %v1225 = vrot.slane %v792, 1
        %1226 = vrot.lane.b32.xlu0 %v1225, 64
        %v1227 = vpop.permute.xlu0 %1226
        %1229 = vst.msk [vmem:[#allocation3 + $0x2b] sm:$0x1] %vm806, %v1227
        %v1230 = vrot.slane %v792, 2
        %1231 = vrot.lane.b32.xlu0 %v1230, 96
        %v1232 = vpop.permute.xlu0 %1231
        %1234 = vst.msk [vmem:[#allocation3 + $0x2b] sm:$0x1] %vm812, %v1232
        %v1235 = vrot.slane %v792, 3
        %1237 = vst.msk [vmem:[#allocation3 + $0x33] sm:$0x1] %vm793, %v1235
        %s1238 = scalar_lea.vmem [#allocation2], 104
        %v1239 = vld [vmem:[%s1238] sm:$0xff]
        %v1240 = vld [vmem:[%s1238 + $0x8] sm:$0xff]
        %v1241 = vld [vmem:[%s1238 + $0x10] sm:$0xff]
        %v1242 = vld [vmem:[%s1238 + $0x18] sm:$0xff]
        %v1243 = vld [vmem:[%s1238 + $0x20] sm:$0xff]
        %v1244 = vld [vmem:[%s1238 + $0x28] sm:$0xff]
        %v1245 = vld [vmem:[%s1238 + $0x30] sm:$0xff]
        %v1246 = vld [vmem:[%s1238 + $0x38] sm:$0xff]
        %v1247 = vld [vmem:[%s1238 + $0x40] sm:$0xff]
        %v1248 = vld [vmem:[%s1238 + $0x48] sm:$0xff]
        %v1249 = vld [vmem:[%s1238 + $0x50] sm:$0xff]
        %v1250 = vld [vmem:[%s1238 + $0x58] sm:$0xff]
        %v1251 = vld [vmem:[%s1238 + $0x60] sm:$0xf]
        %v1252 = vmul.f32 %v1239, %v720
        %v1253 = vmul.f32 %v1240, %v720
        %v1254 = vmul.f32 %v1241, %v720
        %v1255 = vmul.f32 %v1242, %v720
        %v1256 = vmul.f32 %v1243, %v720
        %v1257 = vmul.f32 %v1244, %v720
        %v1258 = vmul.f32 %v1245, %v720
        %v1259 = vmul.f32 %v1246, %v720
        %v1260 = vmul.f32 %v1247, %v720
        %v1261 = vmul.f32 %v1248, %v720
        %v1262 = vmul.f32 %v1249, %v720
        %v1263 = vmul.f32 %v1250, %v720
        %v1264 = vmul.f32 %v1251, %v720
        %v1265 = vadd.f32 %v1252, %v739
        %v1266 = vadd.f32 %v1253, %v739
        %v1267 = vadd.f32 %v1254, %v739
        %v1268 = vadd.f32 %v1255, %v739
        %v1269 = vadd.f32 %v1256, %v739
        %v1270 = vadd.f32 %v1257, %v739
        %v1271 = vadd.f32 %v1258, %v739
        %v1272 = vadd.f32 %v1259, %v739
        %v1273 = vadd.f32 %v1260, %v739
        %v1274 = vadd.f32 %v1261, %v739
        %v1275 = vadd.f32 %v1262, %v739
        %v1276 = vadd.f32 %v1263, %v739
        %v1277 = vadd.f32 %v1264, %v739
        %vm1278 = vcmp.gt.f32.partialorder %v1265, 0.0
        %vm1279 = vcmp.gt.f32.partialorder %v1266, 0.0
        %vm1280 = vcmp.gt.f32.partialorder %v1267, 0.0
        %vm1281 = vcmp.gt.f32.partialorder %v1268, 0.0
        %vm1282 = vcmp.gt.f32.partialorder %v1269, 0.0
        %vm1283 = vcmp.gt.f32.partialorder %v1270, 0.0
        %vm1284 = vcmp.gt.f32.partialorder %v1271, 0.0
        %vm1285 = vcmp.gt.f32.partialorder %v1272, 0.0
        %vm1286 = vcmp.gt.f32.partialorder %v1273, 0.0
        %vm1287 = vcmp.gt.f32.partialorder %v1274, 0.0
        %vm1288 = vcmp.gt.f32.partialorder %v1275, 0.0
        %vm1289 = vcmp.gt.f32.partialorder %v1276, 0.0
        %vm1290 = vcmp.gt.f32.partialorder %v1277, 0.0
        %v1291 = vmul.f32 %v1265, 0.01
        %v1292 = vmul.f32 %v1266, 0.01
        %v1293 = vmul.f32 %v1267, 0.01
        %v1294 = vmul.f32 %v1268, 0.01
        %v1295 = vmul.f32 %v1269, 0.01
        %v1296 = vmul.f32 %v1270, 0.01
        %v1297 = vmul.f32 %v1271, 0.01
        %v1298 = vmul.f32 %v1272, 0.01
        %v1299 = vmul.f32 %v1273, 0.01
        %v1300 = vmul.f32 %v1274, 0.01
        %v1301 = vmul.f32 %v1275, 0.01
        %v1302 = vmul.f32 %v1276, 0.01
        %v1303 = vmul.f32 %v1277, 0.01
        %v1304 = vsel %vm1278, %v1265, %v1291
        %v1305 = vsel %vm1279, %v1266, %v1292
        %v1306 = vsel %vm1280, %v1267, %v1293
        %v1307 = vsel %vm1281, %v1268, %v1294
        %v1308 = vsel %vm1282, %v1269, %v1295
        %v1309 = vsel %vm1283, %v1270, %v1296
        %v1310 = vsel %vm1284, %v1271, %v1297
        %v1311 = vsel %vm1285, %v1272, %v1298
        %v1312 = vsel %vm1286, %v1273, %v1299
        %v1313 = vsel %vm1287, %v1274, %v1300
        %v1314 = vsel %vm1288, %v1275, %v1301
        %v1315 = vsel %vm1289, %v1276, %v1302
        %v1316 = vsel %vm1290, %v1277, %v1303
        %1317 = vst.msk [vmem:[#allocation3 + $0x4] sm:$0x1] %vm793, %v1304
        %v1319 = vrot.slane %v1304, 1
        %1320 = vrot.lane.b32.xlu0 %v1319, 32
        %v1321 = vpop.permute.xlu0 %1320
        %1323 = vst.msk [vmem:[#allocation3 + $0x4] sm:$0x1] %vm800, %v1321
        %v1324 = vrot.slane %v1304, 2
        %1325 = vrot.lane.b32.xlu0 %v1324, 64
        %v1326 = vpop.permute.xlu0 %1325
        %1328 = vst.msk [vmem:[#allocation3 + $0x4] sm:$0x1] %vm806, %v1326
        %v1329 = vrot.slane %v1304, 3
        %1330 = vrot.lane.b32.xlu0 %v1329, 96
        %v1331 = vpop.permute.xlu0 %1330
        %1333 = vst.msk [vmem:[#allocation3 + $0x4] sm:$0x1] %vm812, %v1331
        %v1334 = vrot.slane %v1304, 4
        %1336 = vst.msk [vmem:[#allocation3 + $0xc] sm:$0x1] %vm793, %v1334
        %v1338 = vrot.slane %v1305, 2
        %1339 = vrot.lane.b32.xlu0 %v1338, 32
        %v1340 = vpop.permute.xlu0 %1339
        %1342 = vst.msk [vmem:[#allocation3 + $0xc] sm:$0x1] %vm800, %v1340
        %v1343 = vrot.slane %v1305, 3
        %1344 = vrot.lane.b32.xlu0 %v1343, 64
        %v1345 = vpop.permute.xlu0 %1344
        %1347 = vst.msk [vmem:[#allocation3 + $0xc] sm:$0x1] %vm806, %v1345
        %v1348 = vrot.slane %v1305, 4
        %1349 = vrot.lane.b32.xlu0 %v1348, 96
        %v1350 = vpop.permute.xlu0 %1349
        %1352 = vst.msk [vmem:[#allocation3 + $0xc] sm:$0x1] %vm812, %v1350
        %v1353 = vrot.slane %v1305, 5
        %1355 = vst.msk [vmem:[#allocation3 + $0x14] sm:$0x1] %vm793, %v1353
        %v1356 = vrot.slane %v1305, 6
        %1357 = vrot.lane.b32.xlu0 %v1356, 32
        %v1358 = vpop.permute.xlu0 %1357
        %1360 = vst.msk [vmem:[#allocation3 + $0x14] sm:$0x1] %vm800, %v1358
        %v1362 = vrot.slane %v1306, 4
        %1363 = vrot.lane.b32.xlu0 %v1362, 64
        %v1364 = vpop.permute.xlu0 %1363
        %1366 = vst.msk [vmem:[#allocation3 + $0x14] sm:$0x1] %vm806, %v1364
        %v1367 = vrot.slane %v1306, 5
        %1368 = vrot.lane.b32.xlu0 %v1367, 96
        %v1369 = vpop.permute.xlu0 %1368
        %1371 = vst.msk [vmem:[#allocation3 + $0x14] sm:$0x1] %vm812, %v1369
        %v1372 = vrot.slane %v1306, 6
        %1374 = vst.msk [vmem:[#allocation3 + $0x1c] sm:$0x1] %vm793, %v1372
        %v1375 = vrot.slane %v1306, 7
        %1376 = vrot.lane.b32.xlu0 %v1375, 32
        %v1377 = vpop.permute.xlu0 %1376
        %1379 = vst.msk [vmem:[#allocation3 + $0x1c] sm:$0x1] %vm800, %v1377
        %1381 = vrot.lane.b32.xlu0 %v1307, 64
        %v1382 = vpop.permute.xlu0 %1381
        %1384 = vst.msk [vmem:[#allocation3 + $0x1c] sm:$0x1] %vm806, %v1382
        %v1385 = vrot.slane %v1307, 6
        %1386 = vrot.lane.b32.xlu0 %v1385, 96
        %v1387 = vpop.permute.xlu0 %1386
        %1389 = vst.msk [vmem:[#allocation3 + $0x1c] sm:$0x1] %vm812, %v1387
        %v1390 = vrot.slane %v1307, 7
        %1392 = vst.msk [vmem:[#allocation3 + $0x24] sm:$0x1] %vm793, %v1390
        %1394 = vrot.lane.b32.xlu0 %v1308, 32
        %v1395 = vpop.permute.xlu0 %1394
        %1397 = vst.msk [vmem:[#allocation3 + $0x24] sm:$0x1] %vm800, %v1395
        %v1398 = vrot.slane %v1308, 1
        %1399 = vrot.lane.b32.xlu0 %v1398, 64
        %v1400 = vpop.permute.xlu0 %1399
        %1402 = vst.msk [vmem:[#allocation3 + $0x24] sm:$0x1] %vm806, %v1400
        %v1403 = vrot.slane %v1308, 2
        %1404 = vrot.lane.b32.xlu0 %v1403, 96
        %v1405 = vpop.permute.xlu0 %1404
        %1407 = vst.msk [vmem:[#allocation3 + $0x24] sm:$0x1] %vm812, %v1405
        %1408 = vst.msk [vmem:[#allocation3 + $0x2c] sm:$0x1] %vm793, %v1309
        %v1410 = vrot.slane %v1309, 1
        %1411 = vrot.lane.b32.xlu0 %v1410, 32
        %v1412 = vpop.permute.xlu0 %1411
        %1414 = vst.msk [vmem:[#allocation3 + $0x2c] sm:$0x1] %vm800, %v1412
        %v1415 = vrot.slane %v1309, 2
        %1416 = vrot.lane.b32.xlu0 %v1415, 64
        %v1417 = vpop.permute.xlu0 %1416
        %1419 = vst.msk [vmem:[#allocation3 + $0x2c] sm:$0x1] %vm806, %v1417
        %v1420 = vrot.slane %v1309, 3
        %1421 = vrot.lane.b32.xlu0 %v1420, 96
        %v1422 = vpop.permute.xlu0 %1421
        %1424 = vst.msk [vmem:[#allocation3 + $0x2c] sm:$0x1] %vm812, %v1422
        %v1425 = vrot.slane %v1309, 4
        %1427 = vst.msk [vmem:[#allocation3 + $0x34] sm:$0x1] %vm793, %v1425
        %v1428 = vrot.slane %v1304, 5
        %1430 = vst.msk [vmem:[#allocation3 + $0x5] sm:$0x1] %vm793, %v1428
        %v1431 = vrot.slane %v1304, 6
        %1432 = vrot.lane.b32.xlu0 %v1431, 32
        %v1433 = vpop.permute.xlu0 %1432
        %1435 = vst.msk [vmem:[#allocation3 + $0x5] sm:$0x1] %vm800, %v1433
        %v1436 = vrot.slane %v1304, 7
        %1437 = vrot.lane.b32.xlu0 %v1436, 64
        %v1438 = vpop.permute.xlu0 %1437
        %1440 = vst.msk [vmem:[#allocation3 + $0x5] sm:$0x1] %vm806, %v1438
        %1441 = vrot.lane.b32.xlu0 %v1305, 96
        %v1442 = vpop.permute.xlu0 %1441
        %1444 = vst.msk [vmem:[#allocation3 + $0x5] sm:$0x1] %vm812, %v1442
        %v1445 = vrot.slane %v1305, 1
        %1447 = vst.msk [vmem:[#allocation3 + $0xd] sm:$0x1] %vm793, %v1445
        %v1448 = vrot.slane %v1305, 7
        %1449 = vrot.lane.b32.xlu0 %v1448, 32
        %v1450 = vpop.permute.xlu0 %1449
        %1452 = vst.msk [vmem:[#allocation3 + $0xd] sm:$0x1] %vm800, %v1450
        %1453 = vrot.lane.b32.xlu0 %v1306, 64
        %v1454 = vpop.permute.xlu0 %1453
        %1456 = vst.msk [vmem:[#allocation3 + $0xd] sm:$0x1] %vm806, %v1454
        %v1457 = vrot.slane %v1306, 1
        %1458 = vrot.lane.b32.xlu0 %v1457, 96
        %v1459 = vpop.permute.xlu0 %1458
        %1461 = vst.msk [vmem:[#allocation3 + $0xd] sm:$0x1] %vm812, %v1459
        %v1462 = vrot.slane %v1306, 2
        %1464 = vst.msk [vmem:[#allocation3 + $0x15] sm:$0x1] %vm793, %v1462
        %v1465 = vrot.slane %v1306, 3
        %1466 = vrot.lane.b32.xlu0 %v1465, 32
        %v1467 = vpop.permute.xlu0 %1466
        %1469 = vst.msk [vmem:[#allocation3 + $0x15] sm:$0x1] %vm800, %v1467
        %v1470 = vrot.slane %v1307, 1
        %1471 = vrot.lane.b32.xlu0 %v1470, 64
        %v1472 = vpop.permute.xlu0 %1471
        %1474 = vst.msk [vmem:[#allocation3 + $0x15] sm:$0x1] %vm806, %v1472
        %v1475 = vrot.slane %v1307, 2
        %1476 = vrot.lane.b32.xlu0 %v1475, 96
        %v1477 = vpop.permute.xlu0 %1476
        %1479 = vst.msk [vmem:[#allocation3 + $0x15] sm:$0x1] %vm812, %v1477
        %v1480 = vrot.slane %v1307, 3
        %1482 = vst.msk [vmem:[#allocation3 + $0x1d] sm:$0x1] %vm793, %v1480
        %v1483 = vrot.slane %v1307, 4
        %1484 = vrot.lane.b32.xlu0 %v1483, 32
        %v1485 = vpop.permute.xlu0 %1484
        %1487 = vst.msk [vmem:[#allocation3 + $0x1d] sm:$0x1] %vm800, %v1485
        %v1488 = vrot.slane %v1307, 5
        %1489 = vrot.lane.b32.xlu0 %v1488, 64
        %v1490 = vpop.permute.xlu0 %1489
        %1492 = vst.msk [vmem:[#allocation3 + $0x1d] sm:$0x1] %vm806, %v1490
        %v1493 = vrot.slane %v1308, 3
        %1494 = vrot.lane.b32.xlu0 %v1493, 96
        %v1495 = vpop.permute.xlu0 %1494
        %1497 = vst.msk [vmem:[#allocation3 + $0x1d] sm:$0x1] %vm812, %v1495
        %v1498 = vrot.slane %v1308, 4
        %1500 = vst.msk [vmem:[#allocation3 + $0x25] sm:$0x1] %vm793, %v1498
        %v1501 = vrot.slane %v1308, 5
        %1502 = vrot.lane.b32.xlu0 %v1501, 32
        %v1503 = vpop.permute.xlu0 %1502
        %1505 = vst.msk [vmem:[#allocation3 + $0x25] sm:$0x1] %vm800, %v1503
        %v1506 = vrot.slane %v1308, 6
        %1507 = vrot.lane.b32.xlu0 %v1506, 64
        %v1508 = vpop.permute.xlu0 %1507
        %1510 = vst.msk [vmem:[#allocation3 + $0x25] sm:$0x1] %vm806, %v1508
        %v1511 = vrot.slane %v1308, 7
        %1512 = vrot.lane.b32.xlu0 %v1511, 96
        %v1513 = vpop.permute.xlu0 %1512
        %1515 = vst.msk [vmem:[#allocation3 + $0x25] sm:$0x1] %vm812, %v1513
        %v1516 = vrot.slane %v1309, 5
        %1518 = vst.msk [vmem:[#allocation3 + $0x2d] sm:$0x1] %vm793, %v1516
        %v1519 = vrot.slane %v1309, 6
        %1520 = vrot.lane.b32.xlu0 %v1519, 32
        %v1521 = vpop.permute.xlu0 %1520
        %1523 = vst.msk [vmem:[#allocation3 + $0x2d] sm:$0x1] %vm800, %v1521
        %v1524 = vrot.slane %v1309, 7
        %1525 = vrot.lane.b32.xlu0 %v1524, 64
        %v1526 = vpop.permute.xlu0 %1525
        %1528 = vst.msk [vmem:[#allocation3 + $0x2d] sm:$0x1] %vm806, %v1526
        %1530 = vrot.lane.b32.xlu0 %v1310, 96
        %v1531 = vpop.permute.xlu0 %1530
        %1533 = vst.msk [vmem:[#allocation3 + $0x2d] sm:$0x1] %vm812, %v1531
        %v1534 = vrot.slane %v1310, 1
        %1536 = vst.msk [vmem:[#allocation3 + $0x35] sm:$0x1] %vm793, %v1534
        %v1537 = vrot.slane %v1310, 2
        %1539 = vst.msk [vmem:[#allocation3 + $0x6] sm:$0x1] %vm793, %v1537
        %v1540 = vrot.slane %v1310, 3
        %1541 = vrot.lane.b32.xlu0 %v1540, 32
        %v1542 = vpop.permute.xlu0 %1541
        %1544 = vst.msk [vmem:[#allocation3 + $0x6] sm:$0x1] %vm800, %v1542
        %v1545 = vrot.slane %v1310, 4
        %1546 = vrot.lane.b32.xlu0 %v1545, 64
        %v1547 = vpop.permute.xlu0 %1546
        %1549 = vst.msk [vmem:[#allocation3 + $0x6] sm:$0x1] %vm806, %v1547
        %v1550 = vrot.slane %v1310, 5
        %1551 = vrot.lane.b32.xlu0 %v1550, 96
        %v1552 = vpop.permute.xlu0 %1551
        %1554 = vst.msk [vmem:[#allocation3 + $0x6] sm:$0x1] %vm812, %v1552
        %v1555 = vrot.slane %v1310, 6
        %1557 = vst.msk [vmem:[#allocation3 + $0xe] sm:$0x1] %vm793, %v1555
        %v1559 = vrot.slane %v1311, 4
        %1560 = vrot.lane.b32.xlu0 %v1559, 32
        %v1561 = vpop.permute.xlu0 %1560
        %1563 = vst.msk [vmem:[#allocation3 + $0xe] sm:$0x1] %vm800, %v1561
        %v1564 = vrot.slane %v1311, 5
        %1565 = vrot.lane.b32.xlu0 %v1564, 64
        %v1566 = vpop.permute.xlu0 %1565
        %1568 = vst.msk [vmem:[#allocation3 + $0xe] sm:$0x1] %vm806, %v1566
        %v1569 = vrot.slane %v1311, 6
        %1570 = vrot.lane.b32.xlu0 %v1569, 96
        %v1571 = vpop.permute.xlu0 %1570
        %1573 = vst.msk [vmem:[#allocation3 + $0xe] sm:$0x1] %vm812, %v1571
        %v1574 = vrot.slane %v1311, 7
        %1576 = vst.msk [vmem:[#allocation3 + $0x16] sm:$0x1] %vm793, %v1574
        %1578 = vrot.lane.b32.xlu0 %v1312, 32
        %v1579 = vpop.permute.xlu0 %1578
        %1581 = vst.msk [vmem:[#allocation3 + $0x16] sm:$0x1] %vm800, %v1579
        %v1582 = vrot.slane %v1312, 6
        %1583 = vrot.lane.b32.xlu0 %v1582, 64
        %v1584 = vpop.permute.xlu0 %1583
        %1586 = vst.msk [vmem:[#allocation3 + $0x16] sm:$0x1] %vm806, %v1584
        %v1587 = vrot.slane %v1312, 7
        %1588 = vrot.lane.b32.xlu0 %v1587, 96
        %v1589 = vpop.permute.xlu0 %1588
        %1591 = vst.msk [vmem:[#allocation3 + $0x16] sm:$0x1] %vm812, %v1589
        %1592 = vst.msk [vmem:[#allocation3 + $0x1e] sm:$0x1] %vm793, %v1313
        %v1594 = vrot.slane %v1313, 1
        %1595 = vrot.lane.b32.xlu0 %v1594, 32
        %v1596 = vpop.permute.xlu0 %1595
        %1598 = vst.msk [vmem:[#allocation3 + $0x1e] sm:$0x1] %vm800, %v1596
        %v1599 = vrot.slane %v1313, 2
        %1600 = vrot.lane.b32.xlu0 %v1599, 64
        %v1601 = vpop.permute.xlu0 %1600
        %1603 = vst.msk [vmem:[#allocation3 + $0x1e] sm:$0x1] %vm806, %v1601
        %1605 = vrot.lane.b32.xlu0 %v1314, 96
        %v1606 = vpop.permute.xlu0 %1605
        %1608 = vst.msk [vmem:[#allocation3 + $0x1e] sm:$0x1] %vm812, %v1606
        %v1609 = vrot.slane %v1314, 1
        %1611 = vst.msk [vmem:[#allocation3 + $0x26] sm:$0x1] %vm793, %v1609
        %v1612 = vrot.slane %v1314, 2
        %1613 = vrot.lane.b32.xlu0 %v1612, 32
        %v1614 = vpop.permute.xlu0 %1613
        %1616 = vst.msk [vmem:[#allocation3 + $0x26] sm:$0x1] %vm800, %v1614
        %v1617 = vrot.slane %v1314, 3
        %1618 = vrot.lane.b32.xlu0 %v1617, 64
        %v1619 = vpop.permute.xlu0 %1618
        %1621 = vst.msk [vmem:[#allocation3 + $0x26] sm:$0x1] %vm806, %v1619
        %v1622 = vrot.slane %v1314, 4
        %1623 = vrot.lane.b32.xlu0 %v1622, 96
        %v1624 = vpop.permute.xlu0 %1623
        %1626 = vst.msk [vmem:[#allocation3 + $0x26] sm:$0x1] %vm812, %v1624
        %v1628 = vrot.slane %v1315, 2
        %1630 = vst.msk [vmem:[#allocation3 + $0x2e] sm:$0x1] %vm793, %v1628
        %v1631 = vrot.slane %v1315, 3
        %1632 = vrot.lane.b32.xlu0 %v1631, 32
        %v1633 = vpop.permute.xlu0 %1632
        %1635 = vst.msk [vmem:[#allocation3 + $0x2e] sm:$0x1] %vm800, %v1633
        %v1636 = vrot.slane %v1315, 4
        %1637 = vrot.lane.b32.xlu0 %v1636, 64
        %v1638 = vpop.permute.xlu0 %1637
        %1640 = vst.msk [vmem:[#allocation3 + $0x2e] sm:$0x1] %vm806, %v1638
        %v1641 = vrot.slane %v1315, 5
        %1642 = vrot.lane.b32.xlu0 %v1641, 96
        %v1643 = vpop.permute.xlu0 %1642
        %1645 = vst.msk [vmem:[#allocation3 + $0x2e] sm:$0x1] %vm812, %v1643
        %v1646 = vrot.slane %v1315, 6
        %1648 = vst.msk [vmem:[#allocation3 + $0x36] sm:$0x1] %vm793, %v1646
        %v1649 = vrot.slane %v1310, 7
        %1651 = vst.msk [vmem:[#allocation3 + $0x7] sm:$0x1] %vm793, %v1649
        %1652 = vrot.lane.b32.xlu0 %v1311, 32
        %v1653 = vpop.permute.xlu0 %1652
        %1655 = vst.msk [vmem:[#allocation3 + $0x7] sm:$0x1] %vm800, %v1653
        %v1656 = vrot.slane %v1311, 1
        %1657 = vrot.lane.b32.xlu0 %v1656, 64
        %v1658 = vpop.permute.xlu0 %1657
        %1660 = vst.msk [vmem:[#allocation3 + $0x7] sm:$0x1] %vm806, %v1658
        %v1661 = vrot.slane %v1311, 2
        %1662 = vrot.lane.b32.xlu0 %v1661, 96
        %v1663 = vpop.permute.xlu0 %1662
        %1665 = vst.msk [vmem:[#allocation3 + $0x7] sm:$0x1] %vm812, %v1663
        %v1666 = vrot.slane %v1311, 3
        %1668 = vst.msk [vmem:[#allocation3 + $0xf] sm:$0x1] %vm793, %v1666
        %v1669 = vrot.slane %v1312, 1
        %1670 = vrot.lane.b32.xlu0 %v1669, 32
        %v1671 = vpop.permute.xlu0 %1670
        %1673 = vst.msk [vmem:[#allocation3 + $0xf] sm:$0x1] %vm800, %v1671
        %v1674 = vrot.slane %v1312, 2
        %1675 = vrot.lane.b32.xlu0 %v1674, 64
        %v1676 = vpop.permute.xlu0 %1675
        %1678 = vst.msk [vmem:[#allocation3 + $0xf] sm:$0x1] %vm806, %v1676
        %v1679 = vrot.slane %v1312, 3
        %1680 = vrot.lane.b32.xlu0 %v1679, 96
        %v1681 = vpop.permute.xlu0 %1680
        %1683 = vst.msk [vmem:[#allocation3 + $0xf] sm:$0x1] %vm812, %v1681
        %v1684 = vrot.slane %v1312, 4
        %1686 = vst.msk [vmem:[#allocation3 + $0x17] sm:$0x1] %vm793, %v1684
        %v1687 = vrot.slane %v1312, 5
        %1688 = vrot.lane.b32.xlu0 %v1687, 32
        %v1689 = vpop.permute.xlu0 %1688
        %1691 = vst.msk [vmem:[#allocation3 + $0x17] sm:$0x1] %vm800, %v1689
        %v1692 = vrot.slane %v1313, 3
        %1693 = vrot.lane.b32.xlu0 %v1692, 64
        %v1694 = vpop.permute.xlu0 %1693
        %1696 = vst.msk [vmem:[#allocation3 + $0x17] sm:$0x1] %vm806, %v1694
        %v1697 = vrot.slane %v1313, 4
        %1698 = vrot.lane.b32.xlu0 %v1697, 96
        %v1699 = vpop.permute.xlu0 %1698
        %1701 = vst.msk [vmem:[#allocation3 + $0x17] sm:$0x1] %vm812, %v1699
        %v1702 = vrot.slane %v1313, 5
        %1704 = vst.msk [vmem:[#allocation3 + $0x1f] sm:$0x1] %vm793, %v1702
        %v1705 = vrot.slane %v1313, 6
        %1706 = vrot.lane.b32.xlu0 %v1705, 32
        %v1707 = vpop.permute.xlu0 %1706
        %1709 = vst.msk [vmem:[#allocation3 + $0x1f] sm:$0x1] %vm800, %v1707
        %v1710 = vrot.slane %v1313, 7
        %1711 = vrot.lane.b32.xlu0 %v1710, 64
        %v1712 = vpop.permute.xlu0 %1711
        %1714 = vst.msk [vmem:[#allocation3 + $0x1f] sm:$0x1] %vm806, %v1712
        %v1715 = vrot.slane %v1314, 5
        %1716 = vrot.lane.b32.xlu0 %v1715, 96
        %v1717 = vpop.permute.xlu0 %1716
        %1719 = vst.msk [vmem:[#allocation3 + $0x1f] sm:$0x1] %vm812, %v1717
        %v1720 = vrot.slane %v1314, 6
        %1722 = vst.msk [vmem:[#allocation3 + $0x27] sm:$0x1] %vm793, %v1720
        %v1723 = vrot.slane %v1314, 7
        %1724 = vrot.lane.b32.xlu0 %v1723, 32
        %v1725 = vpop.permute.xlu0 %1724
        %1727 = vst.msk [vmem:[#allocation3 + $0x27] sm:$0x1] %vm800, %v1725
        %1728 = vrot.lane.b32.xlu0 %v1315, 64
        %v1729 = vpop.permute.xlu0 %1728
        %1731 = vst.msk [vmem:[#allocation3 + $0x27] sm:$0x1] %vm806, %v1729
        %v1732 = vrot.slane %v1315, 1
        %1733 = vrot.lane.b32.xlu0 %v1732, 96
        %v1734 = vpop.permute.xlu0 %1733
        %1736 = vst.msk [vmem:[#allocation3 + $0x27] sm:$0x1] %vm812, %v1734
        %v1737 = vrot.slane %v1315, 7
        %1739 = vst.msk [vmem:[#allocation3 + $0x2f] sm:$0x1] %vm793, %v1737
        %1741 = vrot.lane.b32.xlu0 %v1316, 32
        %v1742 = vpop.permute.xlu0 %1741
        %1744 = vst.msk [vmem:[#allocation3 + $0x2f] sm:$0x1] %vm800, %v1742
        %v1745 = vrot.slane %v1316, 1
        %1746 = vrot.lane.b32.xlu0 %v1745, 64
        %v1747 = vpop.permute.xlu0 %1746
        %1749 = vst.msk [vmem:[#allocation3 + $0x2f] sm:$0x1] %vm806, %v1747
        %v1750 = vrot.slane %v1316, 2
        %1751 = vrot.lane.b32.xlu0 %v1750, 96
        %v1752 = vpop.permute.xlu0 %1751
        %1754 = vst.msk [vmem:[#allocation3 + $0x2f] sm:$0x1] %vm812, %v1752
        %v1755 = vrot.slane %v1316, 3
        %1757 = vst.msk [vmem:[#allocation3 + $0x37] sm:$0x1] %vm793, %v1755
        %v1758 = vld [vmem:[#allocation3] sm:$0xff]
        %v1759 = vld [vmem:[#allocation3 + $0x8] sm:$0xff]
        %v1760 = vld [vmem:[#allocation3 + $0x10] sm:$0xff]
        %v1761 = vld [vmem:[#allocation3 + $0x18] sm:$0xff]
        %v1762 = vld [vmem:[#allocation3 + $0x20] sm:$0xff]
        %v1763 = vld [vmem:[#allocation3 + $0x28] sm:$0xff]
        %v1764 = vld [vmem:[#allocation3 + $0x30] sm:$0xff]
        %v1765 = vpack.c.bf16 %v1758, %v1758
        %v1766 = vpack.c.bf16 %v1759, %v1759
        %v1767 = vpack.c.bf16 %v1760, %v1760
        %v1768 = vpack.c.bf16 %v1761, %v1761
        %v1769 = vpack.c.bf16 %v1762, %v1762
        %v1770 = vpack.c.bf16 %v1763, %v1763
        %v1771 = vpack.c.bf16 %v1764, %v1764
        %v1772 = vld [vmem:[%s5] sm:$0xf]
        %v1773 = vld [vmem:[%s5 + $0x4] sm:$0xf]
        %v1774 = vld [vmem:[%s5 + $0x8] sm:$0xf]
        %v1775 = vld [vmem:[%s5 + $0xc] sm:$0xf]
        %v1776 = vld [vmem:[%s5 + $0x10] sm:$0xf]
        %v1777 = vld [vmem:[%s5 + $0x14] sm:$0xf]
        %v1778 = vld [vmem:[%s5 + $0x18] sm:$0xf]
        %v1779 = vld [vmem:[%s5 + $0x1c] sm:$0xf]
        %v1780 = vld [vmem:[%s5 + $0x20] sm:$0xf]
        %v1781 = vld [vmem:[%s5 + $0x24] sm:$0xf]
        %v1782 = vld [vmem:[%s5 + $0x28] sm:$0xf]
        %v1783 = vld [vmem:[%s5 + $0x2c] sm:$0xf]
        %v1784 = vld [vmem:[%s5 + $0x30] sm:$0xf]
        %v1785 = vld [vmem:[%s5 + $0x34] sm:$0xf]
        %v1786 = vld [vmem:[%s5 + $0x38] sm:$0xf]
        %v1787 = vld [vmem:[%s5 + $0x3c] sm:$0xf]
        %v1788 = vld [vmem:[%s5 + $0x40] sm:$0xf]
        %v1789 = vld [vmem:[%s5 + $0x44] sm:$0xf]
        %v1790 = vld [vmem:[%s5 + $0x48] sm:$0xf]
        %v1791 = vld [vmem:[%s5 + $0x4c] sm:$0xf]
        %v1792 = vld [vmem:[%s5 + $0x50] sm:$0xf]
        %v1793 = vld [vmem:[%s5 + $0x54] sm:$0xf]
        %v1794 = vld [vmem:[%s5 + $0x58] sm:$0xf]
        %v1795 = vld [vmem:[%s5 + $0x5c] sm:$0xf]
        %v1796 = vld [vmem:[%s5 + $0x60] sm:$0xf]
        %v1797 = vld [vmem:[%s5 + $0x64] sm:$0xf]
        %v1798 = vld [vmem:[%s5 + $0x68] sm:$0xf]
        %v1799 = vld [vmem:[%s5 + $0x6c] sm:$0xf]
        %v1800 = vld [vmem:[%s5 + $0x70] sm:$0xf]
        %v1801 = vld [vmem:[%s5 + $0x74] sm:$0xf]
        %v1802 = vld [vmem:[%s5 + $0x78] sm:$0xf]
        %v1803 = vld [vmem:[%s5 + $0x7c] sm:$0xf]
        %v1804 = vld [vmem:[%s5 + $0x80] sm:$0xf]
        %v1805 = vld [vmem:[%s5 + $0x84] sm:$0xf]
        %v1806 = vld [vmem:[%s5 + $0x88] sm:$0xf]
        %v1807 = vld [vmem:[%s5 + $0x8c] sm:$0xf]
        %v1808 = vld [vmem:[%s5 + $0x90] sm:$0xf]
        %v1809 = vld [vmem:[%s5 + $0x94] sm:$0xf]
        %v1810 = vld [vmem:[%s5 + $0x98] sm:$0xf]
        %v1811 = vld [vmem:[%s5 + $0x9c] sm:$0xf]
        %v1812 = vld [vmem:[%s5 + $0xa0] sm:$0xf]
        %v1813 = vld [vmem:[%s5 + $0xa4] sm:$0xf]
        %v1814 = vld [vmem:[%s5 + $0xa8] sm:$0xf]
        %v1815 = vld [vmem:[%s5 + $0xac] sm:$0xf]
        %v1816 = vld [vmem:[%s5 + $0xb0] sm:$0xf]
        %v1817 = vld [vmem:[%s5 + $0xb4] sm:$0xf]
        %v1818 = vld [vmem:[%s5 + $0xb8] sm:$0xf]
        %v1819 = vld [vmem:[%s5 + $0xbc] sm:$0xf]
        %v1820 = vld [vmem:[%s5 + $0xc0] sm:$0xf]
        %v1821 = vld [vmem:[%s5 + $0xc4] sm:$0xf]
        %v1822 = vld [vmem:[%s5 + $0xc8] sm:$0xf]
        %v1823 = vld [vmem:[%s5 + $0xcc] sm:$0xf]
        %v1824 = vld [vmem:[%s5 + $0xd0] sm:$0xf]
        %v1825 = vld [vmem:[%s5 + $0xd4] sm:$0xf]
        %v1826 = vld [vmem:[%s5 + $0xd8] sm:$0xf]
        %v1827 = vld [vmem:[%s5 + $0xdc] sm:$0xf]
        %v1828 = vld [vmem:[%s5 + $0xe0] sm:$0xf]
        %v1829 = vld [vmem:[%s5 + $0xe4] sm:$0xf]
        %v1830 = vld [vmem:[%s5 + $0xe8] sm:$0xf]
        %v1831 = vld [vmem:[%s5 + $0xec] sm:$0xf]
        %v1832 = vld [vmem:[%s5 + $0xf0] sm:$0xf]
        %v1833 = vld [vmem:[%s5 + $0xf4] sm:$0xf]
        %v1834 = vld [vmem:[%s5 + $0xf8] sm:$0xf]
        %v1835 = vld [vmem:[%s5 + $0xfc] sm:$0xf]
        %v1836 = vld [vmem:[%s5 + $0x100] sm:$0xf]
        %v1837 = vld [vmem:[%s5 + $0x104] sm:$0xf]
        %v1838 = vld [vmem:[%s5 + $0x108] sm:$0xf]
        %v1839 = vld [vmem:[%s5 + $0x10c] sm:$0xf]
        %v1840 = vld [vmem:[%s5 + $0x110] sm:$0xf]
        %v1841 = vld [vmem:[%s5 + $0x114] sm:$0xf]
        %v1842 = vld [vmem:[%s5 + $0x118] sm:$0xf]
        %v1843 = vld [vmem:[%s5 + $0x11c] sm:$0xf]
        %v1844 = vld [vmem:[%s5 + $0x120] sm:$0xf]
        %v1845 = vld [vmem:[%s5 + $0x124] sm:$0xf]
        %v1846 = vld [vmem:[%s5 + $0x128] sm:$0xf]
        %v1847 = vld [vmem:[%s5 + $0x12c] sm:$0xf]
        %v1848 = vld [vmem:[%s5 + $0x130] sm:$0xf]
        %v1849 = vld [vmem:[%s5 + $0x134] sm:$0xf]
        %v1850 = vld [vmem:[%s5 + $0x138] sm:$0xf]
        %v1851 = vld [vmem:[%s5 + $0x13c] sm:$0xf]
        %v1852 = vld [vmem:[%s5 + $0x140] sm:$0xf]
        %v1853 = vld [vmem:[%s5 + $0x144] sm:$0xf]
        %v1854 = vld [vmem:[%s5 + $0x148] sm:$0xf]
        %v1855 = vld [vmem:[%s5 + $0x14c] sm:$0xf]
        %v1856 = vld [vmem:[%s5 + $0x150] sm:$0xf]
        %v1857 = vld [vmem:[%s5 + $0x154] sm:$0xf]
        %v1858 = vld [vmem:[%s5 + $0x158] sm:$0xf]
        %v1859 = vld [vmem:[%s5 + $0x15c] sm:$0xf]
        %v1860 = vld [vmem:[%s5 + $0x160] sm:$0xf]
        %v1861 = vld [vmem:[%s5 + $0x164] sm:$0xf]
        %v1862 = vld [vmem:[%s5 + $0x168] sm:$0xf]
        %v1863 = vld [vmem:[%s5 + $0x16c] sm:$0xf]
        %v1864 = vld [vmem:[%s5 + $0x170] sm:$0xf]
        %v1865 = vld [vmem:[%s5 + $0x174] sm:$0xf]
        %v1866 = vld [vmem:[%s5 + $0x178] sm:$0xf]
        %v1867 = vld [vmem:[%s5 + $0x17c] sm:$0xf]
        %v1868 = vld [vmem:[%s5 + $0x180] sm:$0xf]
        %v1869 = vld [vmem:[%s5 + $0x184] sm:$0xf]
        %v1870 = vld [vmem:[%s5 + $0x188] sm:$0xf]
        %v1871 = vld [vmem:[%s5 + $0x18c] sm:$0xf]
        %v1872 = vld [vmem:[%s5 + $0x190] sm:$0xf]
        %v1873 = vld [vmem:[%s5 + $0x194] sm:$0xf]
        %v1874 = vld [vmem:[%s5 + $0x198] sm:$0xf]
        %v1875 = vld [vmem:[%s5 + $0x19c] sm:$0xf]
        %v1876 = vld [vmem:[%s5 + $0x1a0] sm:$0xf]
        %v1877 = vld [vmem:[%s5 + $0x1a4] sm:$0xf]
        %v1878 = vld [vmem:[%s5 + $0x1a8] sm:$0xf]
        %v1879 = vld [vmem:[%s5 + $0x1ac] sm:$0xf]
        %v1880 = vld [vmem:[%s5 + $0x1b0] sm:$0xf]
        %v1881 = vld [vmem:[%s5 + $0x1b4] sm:$0xf]
        %v1882 = vld [vmem:[%s5 + $0x1b8] sm:$0xf]
        %v1883 = vld [vmem:[%s5 + $0x1bc] sm:$0xf]
        %v1884 = vld [vmem:[%s6] sm:$0x1]
        %v1886 = vlaneseq
        %v1887 = vshrl.u32 %v1886, 7
        %v1888 = vsub.s32 0, %v1887
        %v1889 = vrot.slane %v1884, %v1888
        %v2003 = vunpack.c.l.b16 %v1772
        %v2004 = vunpack.c.l.b16 %v1773
        %v2005 = vunpack.c.l.b16 %v1774
        %v2006 = vunpack.c.l.b16 %v1775
        %v2007 = vunpack.c.l.b16 %v1776
        %v2008 = vunpack.c.l.b16 %v1777
        %v2009 = vunpack.c.l.b16 %v1778
        %v2010 = vunpack.c.l.b16 %v1779
        %v2011 = vunpack.c.l.b16 %v1780
        %v2012 = vunpack.c.l.b16 %v1781
        %v2013 = vunpack.c.l.b16 %v1782
        %v2014 = vunpack.c.l.b16 %v1783
        %v2015 = vunpack.c.l.b16 %v1784
        %v2016 = vunpack.c.l.b16 %v1785
        %v2017 = vunpack.c.l.b16 %v1786
        %v2018 = vunpack.c.l.b16 %v1787
        %v2019 = vunpack.c.l.b16 %v1788
        %v2020 = vunpack.c.l.b16 %v1789
        %v2021 = vunpack.c.l.b16 %v1790
        %v2022 = vunpack.c.l.b16 %v1791
        %v2023 = vunpack.c.l.b16 %v1792
        %v2024 = vunpack.c.l.b16 %v1793
        %v2025 = vunpack.c.l.b16 %v1794
        %v2026 = vunpack.c.l.b16 %v1795
        %v2027 = vunpack.c.l.b16 %v1796
        %v2028 = vunpack.c.l.b16 %v1797
        %v2029 = vunpack.c.l.b16 %v1798
        %v2030 = vunpack.c.l.b16 %v1799
        %v2031 = vunpack.c.l.b16 %v1800
        %v2032 = vunpack.c.l.b16 %v1801
        %v2033 = vunpack.c.l.b16 %v1802
        %v2034 = vunpack.c.l.b16 %v1803
        %v2035 = vunpack.c.l.b16 %v1804
        %v2036 = vunpack.c.l.b16 %v1805
        %v2037 = vunpack.c.l.b16 %v1806
        %v2038 = vunpack.c.l.b16 %v1807
        %v2039 = vunpack.c.l.b16 %v1808
        %v2040 = vunpack.c.l.b16 %v1809
        %v2041 = vunpack.c.l.b16 %v1810
        %v2042 = vunpack.c.l.b16 %v1811
        %v2043 = vunpack.c.l.b16 %v1812
        %v2044 = vunpack.c.l.b16 %v1813
        %v2045 = vunpack.c.l.b16 %v1814
        %v2046 = vunpack.c.l.b16 %v1815
        %v2047 = vunpack.c.l.b16 %v1816
        %v2048 = vunpack.c.l.b16 %v1817
        %v2049 = vunpack.c.l.b16 %v1818
        %v2050 = vunpack.c.l.b16 %v1819
        %v2051 = vunpack.c.l.b16 %v1820
        %v2052 = vunpack.c.l.b16 %v1821
        %v2053 = vunpack.c.l.b16 %v1822
        %v2054 = vunpack.c.l.b16 %v1823
        %v2055 = vunpack.c.l.b16 %v1824
        %v2056 = vunpack.c.l.b16 %v1825
        %v2057 = vunpack.c.l.b16 %v1826
        %v2058 = vunpack.c.l.b16 %v1827
        %v2059 = vunpack.c.l.b16 %v1828
        %v2060 = vunpack.c.l.b16 %v1829
        %v2061 = vunpack.c.l.b16 %v1830
        %v2062 = vunpack.c.l.b16 %v1831
        %v2063 = vunpack.c.l.b16 %v1832
        %v2064 = vunpack.c.l.b16 %v1833
        %v2065 = vunpack.c.l.b16 %v1834
        %v2066 = vunpack.c.l.b16 %v1835
        %v2067 = vunpack.c.l.b16 %v1836
        %v2068 = vunpack.c.l.b16 %v1837
        %v2069 = vunpack.c.l.b16 %v1838
        %v2070 = vunpack.c.l.b16 %v1839
        %v2071 = vunpack.c.l.b16 %v1840
        %v2072 = vunpack.c.l.b16 %v1841
        %v2073 = vunpack.c.l.b16 %v1842
        %v2074 = vunpack.c.l.b16 %v1843
        %v2075 = vunpack.c.l.b16 %v1844
        %v2076 = vunpack.c.l.b16 %v1845
        %v2077 = vunpack.c.l.b16 %v1846
        %v2078 = vunpack.c.l.b16 %v1847
        %v2079 = vunpack.c.l.b16 %v1848
        %v2080 = vunpack.c.l.b16 %v1849
        %v2081 = vunpack.c.l.b16 %v1850
        %v2082 = vunpack.c.l.b16 %v1851
        %v2083 = vunpack.c.l.b16 %v1852
        %v2084 = vunpack.c.l.b16 %v1853
        %v2085 = vunpack.c.l.b16 %v1854
        %v2086 = vunpack.c.l.b16 %v1855
        %v2087 = vunpack.c.l.b16 %v1856
        %v2088 = vunpack.c.l.b16 %v1857
        %v2089 = vunpack.c.l.b16 %v1858
        %v2090 = vunpack.c.l.b16 %v1859
        %v2091 = vunpack.c.l.b16 %v1860
        %v2092 = vunpack.c.l.b16 %v1861
        %v2093 = vunpack.c.l.b16 %v1862
        %v2094 = vunpack.c.l.b16 %v1863
        %v2095 = vunpack.c.l.b16 %v1864
        %v2096 = vunpack.c.l.b16 %v1865
        %v2097 = vunpack.c.l.b16 %v1866
        %v2098 = vunpack.c.l.b16 %v1867
        %v2099 = vunpack.c.l.b16 %v1868
        %v2100 = vunpack.c.l.b16 %v1869
        %v2101 = vunpack.c.l.b16 %v1870
        %v2102 = vunpack.c.l.b16 %v1871
        %v2103 = vunpack.c.l.b16 %v1872
        %v2104 = vunpack.c.l.b16 %v1873
        %v2105 = vunpack.c.l.b16 %v1874
        %v2106 = vunpack.c.l.b16 %v1875
        %v2107 = vunpack.c.l.b16 %v1876
        %v2108 = vunpack.c.l.b16 %v1877
        %v2109 = vunpack.c.l.b16 %v1878
        %v2110 = vunpack.c.l.b16 %v1879
        %v2111 = vunpack.c.l.b16 %v1880
        %v2112 = vunpack.c.l.b16 %v1881
        %v2113 = vunpack.c.l.b16 %v1882
        %v2114 = vunpack.c.l.b16 %v1883
        %v2115 = vpack.c.b16 %v2004, %v2003
        %v2116 = vpack.c.b16 %v2006, %v2005
        %v2117 = vpack.c.b16 %v2008, %v2007
        %v2118 = vpack.c.b16 %v2010, %v2009
        %v2119 = vpack.c.b16 %v2012, %v2011
        %v2120 = vpack.c.b16 %v2014, %v2013
        %v2121 = vpack.c.b16 %v2016, %v2015
        %v2122 = vpack.c.b16 %v2018, %v2017
        %v2123 = vpack.c.b16 %v2020, %v2019
        %v2124 = vpack.c.b16 %v2022, %v2021
        %v2125 = vpack.c.b16 %v2024, %v2023
        %v2126 = vpack.c.b16 %v2026, %v2025
        %v2127 = vpack.c.b16 %v2028, %v2027
        %v2128 = vpack.c.b16 %v2030, %v2029
        %v2129 = vpack.c.b16 %v2032, %v2031
        %v2130 = vpack.c.b16 %v2034, %v2033
        %v2131 = vpack.c.b16 %v2036, %v2035
        %v2132 = vpack.c.b16 %v2038, %v2037
        %v2133 = vpack.c.b16 %v2040, %v2039
        %v2134 = vpack.c.b16 %v2042, %v2041
        %v2135 = vpack.c.b16 %v2044, %v2043
        %v2136 = vpack.c.b16 %v2046, %v2045
        %v2137 = vpack.c.b16 %v2048, %v2047
        %v2138 = vpack.c.b16 %v2050, %v2049
        %v2139 = vpack.c.b16 %v2052, %v2051
        %v2140 = vpack.c.b16 %v2054, %v2053
        %v2141 = vpack.c.b16 %v2056, %v2055
        %v2142 = vpack.c.b16 %v2058, %v2057
        %v2143 = vpack.c.b16 %v2060, %v2059
        %v2144 = vpack.c.b16 %v2062, %v2061
        %v2145 = vpack.c.b16 %v2064, %v2063
        %v2146 = vpack.c.b16 %v2066, %v2065
        %v2147 = vpack.c.b16 %v2068, %v2067
        %v2148 = vpack.c.b16 %v2070, %v2069
        %v2149 = vpack.c.b16 %v2072, %v2071
        %v2150 = vpack.c.b16 %v2074, %v2073
        %v2151 = vpack.c.b16 %v2076, %v2075
        %v2152 = vpack.c.b16 %v2078, %v2077
        %v2153 = vpack.c.b16 %v2080, %v2079
        %v2154 = vpack.c.b16 %v2082, %v2081
        %v2155 = vpack.c.b16 %v2084, %v2083
        %v2156 = vpack.c.b16 %v2086, %v2085
        %v2157 = vpack.c.b16 %v2088, %v2087
        %v2158 = vpack.c.b16 %v2090, %v2089
        %v2159 = vpack.c.b16 %v2092, %v2091
        %v2160 = vpack.c.b16 %v2094, %v2093
        %v2161 = vpack.c.b16 %v2096, %v2095
        %v2162 = vpack.c.b16 %v2098, %v2097
        %v2163 = vpack.c.b16 %v2100, %v2099
        %v2164 = vpack.c.b16 %v2102, %v2101
        %v2165 = vpack.c.b16 %v2104, %v2103
        %v2166 = vpack.c.b16 %v2106, %v2105
        %v2167 = vpack.c.b16 %v2108, %v2107
        %v2168 = vpack.c.b16 %v2110, %v2109
        %v2169 = vpack.c.b16 %v2112, %v2111
        %v2170 = vpack.c.b16 %v2114, %v2113
        %2227 = vmatprep.subr.bf16.mxu0 0
        %2228 = vmatpush1.bf16.msra.mxu0 %v2115
        %2229 = vmatprep.subr.bf16.mxu0 0
        %2230 = vmatpush1.bf16.msra.mxu0 %v2116
        %2231 = vmatprep.subr.bf16.mxu0 0
        %2232 = vmatpush1.bf16.msra.mxu0 %v2117
        %2233 = vmatprep.subr.bf16.mxu0 0
        %2234 = vmatpush1.bf16.msra.mxu0 %v2118
        %2235 = vmatprep.subr.bf16.mxu0 0
        %2236 = vmatpush1.bf16.msra.mxu0 %v2119
        %2237 = vmatprep.subr.bf16.mxu0 0
        %2238 = vmatpush1.bf16.msra.mxu0 %v2120
        %2239 = vmatprep.subr.bf16.mxu0 0
        %2240 = vmatpush1.bf16.msra.mxu0 %v2121
        %2241 = vmatprep.subr.bf16.mxu0 0
        %2242 = vmatpush1.bf16.msra.mxu0 %v2122
        %2243 = vmatprep.subr.bf16.mxu0 0
        %2244 = vmatpush1.bf16.msra.mxu0 %v2123
        %2245 = vmatprep.subr.bf16.mxu0 0
        %2246 = vmatpush1.bf16.msra.mxu0 %v2124
        %2247 = vmatprep.subr.bf16.mxu0 0
        %2248 = vmatpush1.bf16.msra.mxu0 %v2125
        %2249 = vmatprep.subr.bf16.mxu0 0
        %2250 = vmatpush1.bf16.msra.mxu0 %v2126
        %2251 = vmatprep.subr.bf16.mxu0 0
        %2252 = vmatpush1.bf16.msra.mxu0 %v2127
        %2253 = vmatprep.subr.bf16.mxu0 0
        %2254 = vmatpush1.bf16.msra.mxu0 %v2128
        %2255 = vmatprep.subr.bf16.mxu0 0
        %2256 = vmatpush1.bf16.msra.mxu0 %v2129
        %2257 = vmatprep.subr.bf16.mxu0 0
        %2258 = vmatpush1.bf16.msra.mxu0 %v2130
        %2259 = vmatprep.mubr.bf16.mxu0 %v1766
        %2260 = vmatmul.mubr.bf16.gmra.mrb[0].mxu0 %v1765
        %v2261 = vpop.f32.mrb[0].mxu0
        %v2262 = vadd.f32 %v1889, %v2261
        %v2263 = vpop.f32.mrb[0].mxu0
        %v2264 = vpop.f32.mrb[0].mxu0
        %v2265 = vpop.f32.mrb[0].mxu0
        %2266 = vdwg.mxu0
        %2267 = vmatprep.subr.bf16.mxu0 0
        %2268 = vmatpush1.bf16.msra.mxu0 %v2131
        %2269 = vmatprep.subr.bf16.mxu0 0
        %2270 = vmatpush1.bf16.msra.mxu0 %v2132
        %2271 = vmatprep.subr.bf16.mxu0 0
        %2272 = vmatpush1.bf16.msra.mxu0 %v2133
        %2273 = vmatprep.subr.bf16.mxu0 0
        %2274 = vmatpush1.bf16.msra.mxu0 %v2134
        %2275 = vmatprep.subr.bf16.mxu0 0
        %2276 = vmatpush1.bf16.msra.mxu0 %v2135
        %2277 = vmatprep.subr.bf16.mxu0 0
        %2278 = vmatpush1.bf16.msra.mxu0 %v2136
        %2279 = vmatprep.subr.bf16.mxu0 0
        %2280 = vmatpush1.bf16.msra.mxu0 %v2137
        %2281 = vmatprep.subr.bf16.mxu0 0
        %2282 = vmatpush1.bf16.msra.mxu0 %v2138
        %2283 = vmatprep.subr.bf16.mxu0 0
        %2284 = vmatpush1.bf16.msra.mxu0 %v2139
        %2285 = vmatprep.subr.bf16.mxu0 0
        %2286 = vmatpush1.bf16.msra.mxu0 %v2140
        %2287 = vmatprep.subr.bf16.mxu0 0
        %2288 = vmatpush1.bf16.msra.mxu0 %v2141
        %2289 = vmatprep.subr.bf16.mxu0 0
        %2290 = vmatpush1.bf16.msra.mxu0 %v2142
        %2291 = vmatprep.subr.bf16.mxu0 0
        %2292 = vmatpush1.bf16.msra.mxu0 %v2143
        %2293 = vmatprep.subr.bf16.mxu0 0
        %2294 = vmatpush1.bf16.msra.mxu0 %v2144
        %2295 = vmatprep.subr.bf16.mxu0 0
        %2296 = vmatpush1.bf16.msra.mxu0 %v2145
        %2297 = vmatprep.subr.bf16.mxu0 0
        %2298 = vmatpush1.bf16.msra.mxu0 %v2146
        %2299 = vmatprep.mubr.bf16.mxu0 %v1768
        %2300 = vmatmul.mubr.bf16.gmra.mrb[0].mxu0 %v1767
        %v2301 = vpop.f32.mrb[0].mxu0
        %v2302 = vadd.f32 %v2262, %v2301
        %v2303 = vpop.f32.mrb[0].mxu0
        %v2304 = vpop.f32.mrb[0].mxu0
        %v2305 = vpop.f32.mrb[0].mxu0
        %2306 = vdwg.mxu0
        %2307 = vmatprep.subr.bf16.mxu0 0
        %2308 = vmatpush1.bf16.msra.mxu0 %v2147
        %2309 = vmatprep.subr.bf16.mxu0 0
        %2310 = vmatpush1.bf16.msra.mxu0 %v2148
        %2311 = vmatprep.subr.bf16.mxu0 0
        %2312 = vmatpush1.bf16.msra.mxu0 %v2149
        %2313 = vmatprep.subr.bf16.mxu0 0
        %2314 = vmatpush1.bf16.msra.mxu0 %v2150
        %2315 = vmatprep.subr.bf16.mxu0 0
        %2316 = vmatpush1.bf16.msra.mxu0 %v2151
        %2317 = vmatprep.subr.bf16.mxu0 0
        %2318 = vmatpush1.bf16.msra.mxu0 %v2152
        %2319 = vmatprep.subr.bf16.mxu0 0
        %2320 = vmatpush1.bf16.msra.mxu0 %v2153
        %2321 = vmatprep.subr.bf16.mxu0 0
        %2322 = vmatpush1.bf16.msra.mxu0 %v2154
        %2323 = vmatprep.subr.bf16.mxu0 0
        %2324 = vmatpush1.bf16.msra.mxu0 %v2155
        %2325 = vmatprep.subr.bf16.mxu0 0
        %2326 = vmatpush1.bf16.msra.mxu0 %v2156
        %2327 = vmatprep.subr.bf16.mxu0 0
        %2328 = vmatpush1.bf16.msra.mxu0 %v2157
        %2329 = vmatprep.subr.bf16.mxu0 0
        %2330 = vmatpush1.bf16.msra.mxu0 %v2158
        %2331 = vmatprep.subr.bf16.mxu0 0
        %2332 = vmatpush1.bf16.msra.mxu0 %v2159
        %2333 = vmatprep.subr.bf16.mxu0 0
        %2334 = vmatpush1.bf16.msra.mxu0 %v2160
        %2335 = vmatprep.subr.bf16.mxu0 0
        %2336 = vmatpush1.bf16.msra.mxu0 %v2161
        %2337 = vmatprep.subr.bf16.mxu0 0
        %2338 = vmatpush1.bf16.msra.mxu0 %v2162
        %2339 = vmatprep.mubr.bf16.mxu0 %v1770
        %2340 = vmatmul.mubr.bf16.gmra.mrb[0].mxu0 %v1769
        %v2341 = vpop.f32.mrb[0].mxu0
        %v2342 = vadd.f32 %v2302, %v2341
        %v2343 = vpop.f32.mrb[0].mxu0
        %v2344 = vpop.f32.mrb[0].mxu0
        %v2345 = vpop.f32.mrb[0].mxu0
        %2346 = vdwg.mxu0
        %2347 = vmatprep.subr.bf16.mxu0 0
        %2348 = vmatpush1.bf16.msra.mxu0 %v2163
        %2349 = vmatprep.subr.bf16.mxu0 0
        %2350 = vmatpush1.bf16.msra.mxu0 %v2164
        %2351 = vmatprep.subr.bf16.mxu0 0
        %2352 = vmatpush1.bf16.msra.mxu0 %v2165
        %2353 = vmatprep.subr.bf16.mxu0 0
        %2354 = vmatpush1.bf16.msra.mxu0 %v2166
        %2355 = vmatprep.subr.bf16.mxu0 0
        %2356 = vmatpush1.bf16.msra.mxu0 %v2167
        %2357 = vmatprep.subr.bf16.mxu0 0
        %2358 = vmatpush1.bf16.msra.mxu0 %v2168
        %2359 = vmatprep.subr.bf16.mxu0 0
        %2360 = vmatpush1.bf16.msra.mxu0 %v2169
        %2361 = vmatprep.subr.bf16.mxu0 0
        %2362 = vmatpush1.bf16.msra.mxu0 %v2170
        %2363 = vmatprep.subr.bf16.mxu0 0
        %2364 = vmatpush1.bf16.msra.mxu0 0
        %2365 = vmatprep.subr.bf16.mxu0 0
        %2366 = vmatpush1.bf16.msra.mxu0 0
        %2367 = vmatprep.subr.bf16.mxu0 0
        %2368 = vmatpush1.bf16.msra.mxu0 0
        %2369 = vmatprep.subr.bf16.mxu0 0
        %2370 = vmatpush1.bf16.msra.mxu0 0
        %2371 = vmatprep.subr.bf16.mxu0 0
        %2372 = vmatpush1.bf16.msra.mxu0 0
        %2373 = vmatprep.subr.bf16.mxu0 0
        %2374 = vmatpush1.bf16.msra.mxu0 0
        %2375 = vmatprep.subr.bf16.mxu0 0
        %2376 = vmatpush1.bf16.msra.mxu0 0
        %2377 = vmatprep.subr.bf16.mxu0 0
        %2378 = vmatpush1.bf16.msra.mxu0 0
        %2379 = vmatprep.mubr.bf16.mxu0 0
        %2380 = vmatmul.mubr.bf16.gmra.mrb[0].mxu0 %v1771
        %v2381 = vpop.f32.mrb[0].mxu0
        %v2382 = vadd.f32 %v2342, %v2381
        %v2383 = vpop.f32.mrb[0].mxu0
        %v2384 = vpop.f32.mrb[0].mxu0
        %v2385 = vpop.f32.mrb[0].mxu0
        %2386 = vdwg.mxu0
        %v2387 = vmul.f32 %v2382, 0.5
        %v2388 = vtanh.pop %v2387
        %v2389 = vadd.f32 %v2388, 1.0
        %v2390 = vmul.f32 %v2389, 0.5
        %2391 = vst [vmem:[%s7] sm:$0xff] %v2390
      $region60: #{encoder_cnn_medium.1} parent=47 // pred_fallthru
        _
      // Predicated region
      $region61: #{encoder_cnn_medium.1} parent=47 // pred_check
        %p2392 = pneg %p183
      $region62: #{encoder_cnn_medium.1} parent=47 // pred_check_branch
        %2394 = sbr.rel (%p2392) target = $region64
      $region63: #{encoder_cnn_medium.1} parent=47 // pred_region
        _
      $region64: #{encoder_cnn_medium.1} parent=47 // pred_fallthru
        _
      // Predicated region
      $region65: #{encoder_cnn_medium.1} parent=47 // pred_check
        %p2395 = pneg %p183
      $region66: #{encoder_cnn_medium.1} parent=47 // pred_check_branch
        %2397 = sbr.rel (%p2395) target = $region68
      $region67: #{encoder_cnn_medium.1} parent=47 // pred_region
        _
      $region68: #{encoder_cnn_medium.1} parent=47 // pred_fallthru
        _
    $region48: #{encoder_cnn_medium.1} parent=5 // pred_fallthru
      _
    %p2398 = scmp.le.s32.totalorder 2, %s13
    // Predicated region
    $region69: #{encoder_cnn_medium.1} parent=5 // pred_check
      %p2399 = pneg %p2398
    $region70: #{encoder_cnn_medium.1} parent=5 // pred_check_branch
      %2401 = sbr.rel (%p2399) target = $region72
    $region71: #{encoder_cnn_medium.1} parent=5 // pred_region
      %s2402 = ssub.s32 %s13, 2
    $region72: #{encoder_cnn_medium.1} parent=5 // pred_fallthru
      _
  $region6: #{encoder_cnn_medium.1} parent=0 // loop_footer
    %s17 = sadd.s32 1, %s13
  $region7: #{encoder_cnn_medium.1} parent=0 // loop_footer_branch
    %12 = sbr.rel target = $region3
  $region8: #{encoder_cnn_medium.1} parent=0 // loop_exit
    _

</llo_original>
